<compile_context>
chip_gen: v7x
topology: tpu7x:2x2x1
jax: 0.10.0
libtpu: 0.0.40
codegen_flags: <defaults>
</compile_context>

<pallas_src>
import functools

import jax
import jax.numpy as jnp
from jax import lax
from jax.experimental import pallas as pl
from jax.experimental.pallas import tpu as pltpu


def _conv3xc_kernel(xb_ref, xh_ref, w1_ref, b1_ref, w2_ref, b2_ref,
                    w3_ref, b3_ref, wsk_ref, bsk_ref, o_ref,
                    *, T, W, Cin, Cm, Cm2, Cout, mxu_dtype):
    """One (batch, row-tile) per grid step.  Blocks are NHWC with batch=1."""
    Wp = W + 2

    # (T+2, Wp, Cin) padded-input tile = T body rows + 2 halo rows.
    xt = jnp.concatenate([xb_ref[0], xh_ref[0]], axis=0)
    xt_m = xt.astype(mxu_dtype)

    # conv[0]: 1x1 conv == channel matmul over all (T+2)*Wp pixels.
    # (Applying it to the zero-pad ring yields b1 there, matching F.pad-then-conv.)
    t1 = jnp.dot(xt_m.reshape((T + 2) * Wp, Cin), w1_ref[...],
                 preferred_element_type=jnp.float32) + b1_ref[...]
    t1 = t1.reshape(T + 2, Wp, Cm)

    # conv[1]: 3x3 valid conv, stride 1, as one im2col matmul (K = 9*Cm).
    patches = jnp.concatenate(
        [t1[kh:kh + T, kw:kw + W, :] for kh in range(3) for kw in range(3)],
        axis=-1).reshape(T * W, 9 * Cm)
    acc = jnp.dot(patches.astype(mxu_dtype), w2_ref[...],
                  preferred_element_type=jnp.float32) + b2_ref[...]

    # conv[2]: 1x1 conv.
    t3 = jnp.dot(acc.astype(mxu_dtype), w3_ref[...],
                 preferred_element_type=jnp.float32) + b3_ref[...]

    # skip path: 1x1 conv on the unpadded interior of the same tile
    # (avoids DMA'ing the activation a second time from HBM).
    xs = xt_m[1:T + 1, 1:W + 1, :].reshape(T * W, Cin)
    sk = jnp.dot(xs, wsk_ref[...],
                 preferred_element_type=jnp.float32) + bsk_ref[...]

    o_ref[0] = (t3 + sk).reshape(T, W, Cout).astype(o_ref.dtype)


def _pick_tile_rows(H, W, Cin, Cm, Cm2, Cout,
                    budget_bytes=16 * 1024 * 1024):
    """Largest even row-tile whose f32 intermediates + I/O blocks fit a
    conservative VMEM budget (safe on v7x's 64 MiB as well as v5e/v6e)."""
    Wp = W + 2
    best = 2
    for T in range(2, max(2, min(H, 512)) + 1, 2):
        interm = 4 * ((T + 2) * Wp * (Cin + Cm)          # input tile + t1
                      + T * W * (9 * Cm + Cm2 + 2 * Cout))  # im2col, acc, out
        io_blk = 2 * 4 * ((T + 2) * Wp * Cin + T * W * Cout)  # dbl-buffered I/O
        if interm + io_blk <= budget_bytes:
            best = T
        else:
            break
    return best


def conv3xc_forward(x_nchw, params, *, gain, tile_rows=None,
                    mxu_dtype=jnp.float32):
    """Training-mode Conv3XC forward.  x_nchw: (N, Cin, H, W) float32."""
    # TODO(synk): only stride s=1 (the module default) is implemented.
    (w_sk, b_sk, w0, b0, w_mid, b_mid, w_last, b_last) = params
    N, Cin, H, W = x_nchw.shape
    Cout = w_sk.shape[0]
    Cm = Cin * gain
    Cm2 = Cout * gain
    Wp = W + 2

    if tile_rows is None:
        tile_rows = _pick_tile_rows(H, W, Cin, Cm, Cm2, Cout)
    T = max(2, tile_rows + (tile_rows % 2))          # even row-tile
    nT = -(-H // T)
    H_pad = nT * T
    half = T // 2

    # NCHW -> NHWC (channels on lanes) + zero pad (1px halo; bottom fill so the
    # row tiling divides evenly).  XLA fuses transpose+pad into a single pass.
    # TODO(synk): accepting NHWC natively would remove these wrapper passes.
    x = jnp.transpose(x_nchw, (0, 2, 3, 1))
    xp = jnp.pad(x, ((0, 0), (1, 1 + (H_pad - H)), (1, 1), (0, 0)))

    # Torch OIHW weights -> matmul-friendly layouts (1x1 convs -> plain GEMMs,
    # the 3x3 conv -> one (9*Cm, Cm2) im2col weight).
    w1 = jnp.transpose(w0[:, :, 0, 0]).astype(mxu_dtype)                 # (Cin, Cm)
    w2 = jnp.transpose(w_mid, (2, 3, 1, 0)).reshape(9 * Cm, Cm2).astype(mxu_dtype)
    w3 = jnp.transpose(w_last[:, :, 0, 0]).astype(mxu_dtype)             # (Cm2, Cout)
    wsk = jnp.transpose(w_sk[:, :, 0, 0]).astype(mxu_dtype)              # (Cin, Cout)
    b1 = b0.reshape(1, Cm).astype(jnp.float32)
    b2 = b_mid.reshape(1, Cm2).astype(jnp.float32)
    b3 = b_last.reshape(1, Cout).astype(jnp.float32)
    bsk = b_sk.reshape(1, Cout).astype(jnp.float32)

    def full_spec(arr):
        nd = arr.ndim
        return pl.BlockSpec(arr.shape, lambda n, t, _nd=nd: (0,) * _nd)

    kernel = functools.partial(_conv3xc_kernel, T=T, W=W, Cin=Cin,
                               Cm=Cm, Cm2=Cm2, Cout=Cout, mxu_dtype=mxu_dtype)

    flops = 2 * N * H_pad * W * (Cin * Cm + 9 * Cm * Cm2 + Cm2 * Cout + Cin * Cout)
    bytes_accessed = 4 * (xp.size + N * H_pad * W * Cout
                          + w1.size + w2.size + w3.size + wsk.size)

    out_nhwc = pl.pallas_call(
        kernel,
        out_shape=jax.ShapeDtypeStruct((N, H_pad, W, Cout), x.dtype),
        grid=(N, nT),
        in_specs=[
            # body: padded-input rows [t*T, t*T + T)
            pl.BlockSpec((1, T, Wp, Cin), lambda n, t: (n, t, 0, 0)),
            # 2-row halo: padded-input rows [t*T + T, t*T + T + 2) (same array)
            pl.BlockSpec((1, 2, Wp, Cin), lambda n, t: (n, (t + 1) * half, 0, 0)),
            full_spec(w1), full_spec(b1),
            full_spec(w2), full_spec(b2),
            full_spec(w3), full_spec(b3),
            full_spec(wsk), full_spec(bsk),
        ],
        out_specs=pl.BlockSpec((1, T, W, Cout), lambda n, t: (n, t, 0, 0)),
        compiler_params=pltpu.CompilerParams(
            dimension_semantics=("parallel", "parallel"),
            vmem_limit_bytes=48 * 1024 * 1024),
        cost_estimate=pl.CostEstimate(flops=flops, transcendentals=0,
                                      bytes_accessed=bytes_accessed),
    )(xp, xp, w1, b1, w2, b2, w3, b3, wsk, bsk)

    out_nhwc = out_nhwc[:, :H]                       # drop row-tiling fill
    return jnp.transpose(out_nhwc, (0, 3, 1, 2))     # NHWC -> NCHW


def _reference_forward(x_nchw, params, *, gain):
    """Pure-JAX reference using lax.conv_general_dilated (for verification)."""
    (w_sk, b_sk, w0, b0, w_mid, b_mid, w_last, b_last) = params
    x = jnp.transpose(x_nchw, (0, 2, 3, 1))  # NHWC

    def conv(inp, w_oihw, b, padding, stride=1):
        w_hwio = jnp.transpose(w_oihw, (2, 3, 1, 0))
        y = lax.conv_general_dilated(
            inp, w_hwio, (stride, stride), padding,
            dimension_numbers=('NHWC', 'HWIO', 'NHWC'))
        return y + b.reshape(1, 1, 1, -1)

    xp = jnp.pad(x, ((0, 0), (1, 1), (1, 1), (0, 0)))
    t = conv(xp, w0, b0, 'VALID')
    t = conv(t, w_mid, b_mid, 'VALID')
    t = conv(t, w_last, b_last, 'VALID')
    sk = conv(x, w_sk, b_sk, 'VALID')
    return jnp.transpose(t + sk, (0, 3, 1, 2))


def _init_params(key, c_in, c_out, gain):
    """Deterministic synthetic init (same shapes as the PyTorch module)."""
    ks = jax.random.split(key, 8)
    cm, cm2 = c_in * gain, c_out * gain
    w_sk = 0.02 * jax.random.normal(ks[0], (c_out, c_in, 1, 1), jnp.float32)
    b_sk = 0.01 * jax.random.normal(ks[1], (c_out,), jnp.float32)
    w0 = 0.1 * jax.random.normal(ks[2], (cm, c_in, 1, 1), jnp.float32)
    b0 = 0.01 * jax.random.normal(ks[3], (cm,), jnp.float32)
    w_mid = 0.1 * jax.random.normal(ks[4], (cm2, cm, 3, 3), jnp.float32)
    b_mid = 0.01 * jax.random.normal(ks[5], (cm2,), jnp.float32)
    w_last = 0.1 * jax.random.normal(ks[6], (c_out, cm2, 1, 1), jnp.float32)
    b_last = 0.01 * jax.random.normal(ks[7], (c_out,), jnp.float32)
    return (w_sk, b_sk, w0, b0, w_mid, b_mid, w_last, b_last)


if __name__ == "__main__":
    N, c_in, c_out, gain, H, W = 2, 4, 4, 2, 16, 16

    key = jax.random.PRNGKey(0)
    kx, kp = jax.random.split(key)
    x = jax.random.normal(kx, (N, c_in, H, W), jnp.float32)
    params = _init_params(kp, c_in, c_out, gain)

    ref = jax.block_until_ready(_reference_forward(x, params, gain=gain))

    # Multi-tile path (2 row-tiles of 8 rows each -> exercises the halo logic).
    out_tiled = jax.block_until_ready(
        conv3xc_forward(x, params, gain=gain, tile_rows=8))
    assert out_tiled.shape == (N, c_out, H, W), out_tiled.shape
    if not jnp.allclose(out_tiled, ref, atol=2e-4, rtol=2e-4):
        raise AssertionError("Pallas Conv3XC (tiled) output mismatch vs reference")

    # Auto tile-size path (single tile at this small H).
    out_auto = jax.block_until_ready(conv3xc_forward(x, params, gain=gain))
    if not jnp.allclose(out_auto, ref, atol=2e-4, rtol=2e-4):
        raise AssertionError("Pallas Conv3XC (auto-tile) output mismatch vs reference")

    print("KERNEL_OK")
</pallas_src>

<mosaic_0001>
module attributes {stable_mosaic.version = 11 : i64} {
  func.func @_conv3xc_kernel(%arg0: i32, %arg1: i32, %arg2: memref<1x8x18x4xf32, #tpu.memory_space<vmem>>, %arg3: memref<1x2x18x4xf32, #tpu.memory_space<vmem>>, %arg4: memref<4x8xf32, #tpu.memory_space<vmem>>, %arg5: memref<1x8xf32, #tpu.memory_space<vmem>>, %arg6: memref<72x8xf32, #tpu.memory_space<vmem>>, %arg7: memref<1x8xf32, #tpu.memory_space<vmem>>, %arg8: memref<8x4xf32, #tpu.memory_space<vmem>>, %arg9: memref<1x4xf32, #tpu.memory_space<vmem>>, %arg10: memref<4x4xf32, #tpu.memory_space<vmem>>, %arg11: memref<1x4xf32, #tpu.memory_space<vmem>>, %arg12: memref<1x8x16x4xf32, #tpu.memory_space<vmem>>) attributes {dimension_semantics = [#tpu.dimension_semantics<parallel>, #tpu.dimension_semantics<parallel>], iteration_bounds = array<i64: 2, 2>, scalar_prefetch = 0 : i64, scratch_operands = 0 : i64, tpu.core_type = #tpu.core_type<tc>, window_params = [{transform_indices = @transform_0, window_bounds = array<i64: 1, 8, 18, 4>}, {transform_indices = @transform_1, window_bounds = array<i64: 1, 2, 18, 4>}, {pipeline_mode = #tpu.pipeline_mode<synchronous>, transform_indices = @transform_2, window_bounds = array<i64: 4, 8>}, {pipeline_mode = #tpu.pipeline_mode<synchronous>, transform_indices = @transform_3, window_bounds = array<i64: 1, 8>}, {pipeline_mode = #tpu.pipeline_mode<synchronous>, transform_indices = @transform_4, window_bounds = array<i64: 72, 8>}, {pipeline_mode = #tpu.pipeline_mode<synchronous>, transform_indices = @transform_5, window_bounds = array<i64: 1, 8>}, {pipeline_mode = #tpu.pipeline_mode<synchronous>, transform_indices = @transform_6, window_bounds = array<i64: 8, 4>}, {pipeline_mode = #tpu.pipeline_mode<synchronous>, transform_indices = @transform_7, window_bounds = array<i64: 1, 4>}, {pipeline_mode = #tpu.pipeline_mode<synchronous>, transform_indices = @transform_8, window_bounds = array<i64: 4, 4>}, {pipeline_mode = #tpu.pipeline_mode<synchronous>, transform_indices = @transform_9, window_bounds = array<i64: 1, 4>}, {transform_indices = @transform_10, window_bounds = array<i64: 1, 8, 16, 4>}]} {
    %c0 = arith.constant 0 : index
    %c0_0 = arith.constant 0 : index
    %c0_1 = arith.constant 0 : index
    %c0_2 = arith.constant 0 : index
    %0 = vector.load %arg2[%c0, %c0_0, %c0_1, %c0_2] : memref<1x8x18x4xf32, #tpu.memory_space<vmem>>, vector<1x8x18x4xf32>
    %1 = vector.shape_cast %0 : vector<1x8x18x4xf32> to vector<8x18x4xf32>
    %c0_3 = arith.constant 0 : index
    %c0_4 = arith.constant 0 : index
    %c0_5 = arith.constant 0 : index
    %c0_6 = arith.constant 0 : index
    %2 = vector.load %arg3[%c0_3, %c0_4, %c0_5, %c0_6] : memref<1x2x18x4xf32, #tpu.memory_space<vmem>>, vector<1x2x18x4xf32>
    %3 = vector.shape_cast %2 : vector<1x2x18x4xf32> to vector<2x18x4xf32>
    %4 = tpu.concatenate %1, %3 in 0 : vector<8x18x4xf32>, vector<2x18x4xf32> -> vector<10x18x4xf32>
    %5 = vector.shape_cast %4 : vector<10x18x4xf32> to vector<180x4xf32>
    %c0_7 = arith.constant 0 : index
    %c0_8 = arith.constant 0 : index
    %6 = vector.load %arg4[%c0_7, %c0_8] : memref<4x8xf32, #tpu.memory_space<vmem>>, vector<4x8xf32>
    %cst = arith.constant dense<0.000000e+00> : vector<180x8xf32>
    %7 = tpu.matmul %5, %6, %cst {dimension_numbers = #tpu.dot_dimension_numbers<[1], [0], [0], [1], [0, 0, 1, 1], [], []>} : vector<180x4xf32>, vector<4x8xf32>, vector<180x8xf32> -> vector<180x8xf32>
    %c0_9 = arith.constant 0 : index
    %c0_10 = arith.constant 0 : index
    %8 = vector.load %arg5[%c0_9, %c0_10] : memref<1x8xf32, #tpu.memory_space<vmem>>, vector<1x8xf32>
    %9 = vector.broadcast %8 : vector<1x8xf32> to vector<180x8xf32>
    %10 = arith.addf %7, %9 : vector<180x8xf32>
    %11 = vector.shape_cast %10 : vector<180x8xf32> to vector<10x18x8xf32>
    %12 = vector.extract_strided_slice %11 {offsets = [0, 0, 0], sizes = [8, 16, 8], strides = [1, 1, 1]} : vector<10x18x8xf32> to vector<8x16x8xf32>
    %13 = vector.extract_strided_slice %11 {offsets = [0, 1, 0], sizes = [8, 16, 8], strides = [1, 1, 1]} : vector<10x18x8xf32> to vector<8x16x8xf32>
    %14 = vector.extract_strided_slice %11 {offsets = [0, 2, 0], sizes = [8, 16, 8], strides = [1, 1, 1]} : vector<10x18x8xf32> to vector<8x16x8xf32>
    %15 = vector.extract_strided_slice %11 {offsets = [1, 0, 0], sizes = [8, 16, 8], strides = [1, 1, 1]} : vector<10x18x8xf32> to vector<8x16x8xf32>
    %16 = vector.extract_strided_slice %11 {offsets = [1, 1, 0], sizes = [8, 16, 8], strides = [1, 1, 1]} : vector<10x18x8xf32> to vector<8x16x8xf32>
    %17 = vector.extract_strided_slice %11 {offsets = [1, 2, 0], sizes = [8, 16, 8], strides = [1, 1, 1]} : vector<10x18x8xf32> to vector<8x16x8xf32>
    %18 = vector.extract_strided_slice %11 {offsets = [2, 0, 0], sizes = [8, 16, 8], strides = [1, 1, 1]} : vector<10x18x8xf32> to vector<8x16x8xf32>
    %19 = vector.extract_strided_slice %11 {offsets = [2, 1, 0], sizes = [8, 16, 8], strides = [1, 1, 1]} : vector<10x18x8xf32> to vector<8x16x8xf32>
    %20 = vector.extract_strided_slice %11 {offsets = [2, 2, 0], sizes = [8, 16, 8], strides = [1, 1, 1]} : vector<10x18x8xf32> to vector<8x16x8xf32>
    %21 = tpu.concatenate %12, %13, %14, %15, %16, %17, %18, %19, %20 in 2 : vector<8x16x8xf32>, vector<8x16x8xf32>, vector<8x16x8xf32>, vector<8x16x8xf32>, vector<8x16x8xf32>, vector<8x16x8xf32>, vector<8x16x8xf32>, vector<8x16x8xf32>, vector<8x16x8xf32> -> vector<8x16x72xf32>
    %22 = vector.shape_cast %21 : vector<8x16x72xf32> to vector<128x72xf32>
    %c0_11 = arith.constant 0 : index
    %c0_12 = arith.constant 0 : index
    %23 = vector.load %arg6[%c0_11, %c0_12] : memref<72x8xf32, #tpu.memory_space<vmem>>, vector<72x8xf32>
    %cst_13 = arith.constant dense<0.000000e+00> : vector<128x8xf32>
    %24 = tpu.matmul %22, %23, %cst_13 {dimension_numbers = #tpu.dot_dimension_numbers<[1], [0], [0], [1], [0, 0, 1, 1], [], []>} : vector<128x72xf32>, vector<72x8xf32>, vector<128x8xf32> -> vector<128x8xf32>
    %c0_14 = arith.constant 0 : index
    %c0_15 = arith.constant 0 : index
    %25 = vector.load %arg7[%c0_14, %c0_15] : memref<1x8xf32, #tpu.memory_space<vmem>>, vector<1x8xf32>
    %26 = vector.broadcast %25 : vector<1x8xf32> to vector<128x8xf32>
    %27 = arith.addf %24, %26 : vector<128x8xf32>
    %c0_16 = arith.constant 0 : index
    %c0_17 = arith.constant 0 : index
    %28 = vector.load %arg8[%c0_16, %c0_17] : memref<8x4xf32, #tpu.memory_space<vmem>>, vector<8x4xf32>
    %cst_18 = arith.constant dense<0.000000e+00> : vector<128x4xf32>
    %29 = tpu.matmul %27, %28, %cst_18 {dimension_numbers = #tpu.dot_dimension_numbers<[1], [0], [0], [1], [0, 0, 1, 1], [], []>} : vector<128x8xf32>, vector<8x4xf32>, vector<128x4xf32> -> vector<128x4xf32>
    %c0_19 = arith.constant 0 : index
    %c0_20 = arith.constant 0 : index
    %30 = vector.load %arg9[%c0_19, %c0_20] : memref<1x4xf32, #tpu.memory_space<vmem>>, vector<1x4xf32>
    %31 = vector.broadcast %30 : vector<1x4xf32> to vector<128x4xf32>
    %32 = arith.addf %29, %31 : vector<128x4xf32>
    %33 = vector.extract_strided_slice %4 {offsets = [1, 1, 0], sizes = [8, 16, 4], strides = [1, 1, 1]} : vector<10x18x4xf32> to vector<8x16x4xf32>
    %34 = vector.shape_cast %33 : vector<8x16x4xf32> to vector<128x4xf32>
    %c0_21 = arith.constant 0 : index
    %c0_22 = arith.constant 0 : index
    %35 = vector.load %arg10[%c0_21, %c0_22] : memref<4x4xf32, #tpu.memory_space<vmem>>, vector<4x4xf32>
    %cst_23 = arith.constant dense<0.000000e+00> : vector<128x4xf32>
    %36 = tpu.matmul %34, %35, %cst_23 {dimension_numbers = #tpu.dot_dimension_numbers<[1], [0], [0], [1], [0, 0, 1, 1], [], []>} : vector<128x4xf32>, vector<4x4xf32>, vector<128x4xf32> -> vector<128x4xf32>
    %c0_24 = arith.constant 0 : index
    %c0_25 = arith.constant 0 : index
    %37 = vector.load %arg11[%c0_24, %c0_25] : memref<1x4xf32, #tpu.memory_space<vmem>>, vector<1x4xf32>
    %38 = vector.broadcast %37 : vector<1x4xf32> to vector<128x4xf32>
    %39 = arith.addf %36, %38 : vector<128x4xf32>
    %40 = arith.addf %32, %39 : vector<128x4xf32>
    %41 = vector.shape_cast %40 : vector<128x4xf32> to vector<8x16x4xf32>
    %c0_26 = arith.constant 0 : index
    %c0_27 = arith.constant 0 : index
    %c0_28 = arith.constant 0 : index
    %c0_29 = arith.constant 0 : index
    %42 = vector.load %arg12[%c0_26, %c0_27, %c0_28, %c0_29] : memref<1x8x16x4xf32, #tpu.memory_space<vmem>>, vector<1x8x16x4xf32>
    %43 = vector.shape_cast %42 : vector<1x8x16x4xf32> to vector<8x16x4xf32>
    %44 = vector.shape_cast %41 : vector<8x16x4xf32> to vector<1x8x16x4xf32>
    tpu.vector_store %arg12[%c0_26, %c0_27, %c0_28, %c0_29], %44 {strides = array<i32>} : memref<1x8x16x4xf32, #tpu.memory_space<vmem>>, vector<1x8x16x4xf32>,
    return
  }
  func.func @transform_0(%arg0: i32, %arg1: i32) -> (i32, i32, i32, i32) {
    %c0_i32 = arith.constant 0 : i32
    %c0_i32_0 = arith.constant 0 : i32
    %c0_i32_1 = arith.constant 0 : i32
    return %arg0, %arg1, %c0_i32, %c0_i32_0 : i32, i32, i32, i32
  }
  func.func @transform_1(%arg0: i32, %arg1: i32) -> (i32, i32, i32, i32) {
    %c1_i32 = arith.constant 1 : i32
    %0 = arith.addi %arg1, %c1_i32 : i32
    %c4_i32 = arith.constant 4 : i32
    %1 = arith.muli %0, %c4_i32 : i32
    %c0_i32 = arith.constant 0 : i32
    %c0_i32_0 = arith.constant 0 : i32
    %c0_i32_1 = arith.constant 0 : i32
    return %arg0, %1, %c0_i32, %c0_i32_0 : i32, i32, i32, i32
  }
  func.func @transform_2(%arg0: i32, %arg1: i32) -> (i32, i32) {
    %c0_i32 = arith.constant 0 : i32
    %c0_i32_0 = arith.constant 0 : i32
    %c0_i32_1 = arith.constant 0 : i32
    return %c0_i32, %c0_i32_0 : i32, i32
  }
  func.func @transform_3(%arg0: i32, %arg1: i32) -> (i32, i32) {
    %c0_i32 = arith.constant 0 : i32
    %c0_i32_0 = arith.constant 0 : i32
    %c0_i32_1 = arith.constant 0 : i32
    return %c0_i32, %c0_i32_0 : i32, i32
  }
  func.func @transform_4(%arg0: i32, %arg1: i32) -> (i32, i32) {
    %c0_i32 = arith.constant 0 : i32
    %c0_i32_0 = arith.constant 0 : i32
    %c0_i32_1 = arith.constant 0 : i32
    return %c0_i32, %c0_i32_0 : i32, i32
  }
  func.func @transform_5(%arg0: i32, %arg1: i32) -> (i32, i32) {
    %c0_i32 = arith.constant 0 : i32
    %c0_i32_0 = arith.constant 0 : i32
    %c0_i32_1 = arith.constant 0 : i32
    return %c0_i32, %c0_i32_0 : i32, i32
  }
  func.func @transform_6(%arg0: i32, %arg1: i32) -> (i32, i32) {
    %c0_i32 = arith.constant 0 : i32
    %c0_i32_0 = arith.constant 0 : i32
    %c0_i32_1 = arith.constant 0 : i32
    return %c0_i32, %c0_i32_0 : i32, i32
  }
  func.func @transform_7(%arg0: i32, %arg1: i32) -> (i32, i32) {
    %c0_i32 = arith.constant 0 : i32
    %c0_i32_0 = arith.constant 0 : i32
    %c0_i32_1 = arith.constant 0 : i32
    return %c0_i32, %c0_i32_0 : i32, i32
  }
  func.func @transform_8(%arg0: i32, %arg1: i32) -> (i32, i32) {
    %c0_i32 = arith.constant 0 : i32
    %c0_i32_0 = arith.constant 0 : i32
    %c0_i32_1 = arith.constant 0 : i32
    return %c0_i32, %c0_i32_0 : i32, i32
  }
  func.func @transform_9(%arg0: i32, %arg1: i32) -> (i32, i32) {
    %c0_i32 = arith.constant 0 : i32
    %c0_i32_0 = arith.constant 0 : i32
    %c0_i32_1 = arith.constant 0 : i32
    return %c0_i32, %c0_i32_0 : i32, i32
  }
  func.func @transform_10(%arg0: i32, %arg1: i32) -> (i32, i32, i32, i32) {
    %c0_i32 = arith.constant 0 : i32
    %c0_i32_0 = arith.constant 0 : i32
    %c0_i32_1 = arith.constant 0 : i32
    return %arg0, %arg1, %c0_i32, %c0_i32_0 : i32, i32, i32, i32
  }
}

</mosaic_0001>

<llo_original>
// kernel: tpu_custom_call.1
$region0: #{tpu_custom_call.1}
  #allocation0 [shape = 'u32[]', space=smem, size = 0x4, offset = 0x4, fixed_abs, tag = 'smem constant byte address 0x4 - core index']
  #allocation1 [shape = 'u32[144,128]{1,0:T(1,128)}', space=vmem, size = 0x12000, scoped, tag = 'internal scratch']
  %s0 = inlined_call_operand.vmem [shape: f32[2,18,18,4], index: 0, kind: input, shape index: {}]
  %s1 = inlined_call_operand.vmem [shape: f32[2,18,18,4], index: 1, kind: input, shape index: {}]
  %s2 = inlined_call_operand.vmem [shape: f32[4,8], index: 2, kind: input, shape index: {}]
  %s3 = inlined_call_operand.vmem [shape: f32[1,8], index: 3, kind: input, shape index: {}]
  %s4 = inlined_call_operand.vmem [shape: f32[72,8], index: 4, kind: input, shape index: {}]
  %s5 = inlined_call_operand.vmem [shape: f32[1,8], index: 5, kind: input, shape index: {}]
  %s6 = inlined_call_operand.vmem [shape: f32[8,4], index: 6, kind: input, shape index: {}]
  %s7 = inlined_call_operand.vmem [shape: f32[1,4], index: 7, kind: input, shape index: {}]
  %s8 = inlined_call_operand.vmem [shape: f32[4,4], index: 8, kind: input, shape index: {}]
  %s9 = inlined_call_operand.vmem [shape: f32[1,4], index: 9, kind: input, shape index: {}]
  %s10 = inlined_call_operand.vmem [shape: f32[2,16,16,4], index: 10, kind: output, shape index: {}]
  %s11 = sld [smem:[#allocation0]]
  $region73: #{tpu_custom_call.1} parent=0
    _
  %s13 = ssub.s32 1, %s11
  %s14 = scalar_select 0, %s13, %s11
  loop: start=0, step=1, limit=6
  $region2: #{tpu_custom_call.1} parent=0 // loop_pre_header
    _
  $region3: #{tpu_custom_call.1} parent=0 // loop_header
    %s16 = sphi 0, %s20
    %p17 = scmp.ge.s32.totalorder %s16, 6
    %s23 = sphi 0, %s35
    %s24 = sphi 0, %s31
    %s25 = sphi 0, %s23
    %s26 = sphi 0, %s24
    %s27 = sphi 0, %s25
    %s28 = sphi 0, %s26
    %s40 = sphi 0, %s42
    %s43 = sphi 0, %s40
    %s44 = sphi 0, %s43
    %s60 = sphi 0, %s44
    %s72 = sphi 0, %s74
    %s75 = sphi 0, %s72
    %s76 = sphi 0, %s75
    %s92 = sphi 0, %s76
    %s96 = sphi 0, %s96
    %s98 = sphi 0, %s96
    %s99 = sphi 0, %s98
    %s113 = sphi 0, %s99
    %s117 = sphi 0, %s117
    %s119 = sphi 0, %s117
    %s120 = sphi 0, %s119
    %s134 = sphi 0, %s120
    %s138 = sphi 0, %s138
    %s140 = sphi 0, %s138
    %s141 = sphi 0, %s140
    %s155 = sphi 0, %s141
    %s159 = sphi 0, %s159
    %s161 = sphi 0, %s159
    %s162 = sphi 0, %s161
    %s176 = sphi 0, %s162
    %s180 = sphi 0, %s180
    %s182 = sphi 0, %s180
    %s183 = sphi 0, %s182
    %s197 = sphi 0, %s183
    %s201 = sphi 0, %s201
    %s203 = sphi 0, %s201
    %s204 = sphi 0, %s203
    %s218 = sphi 0, %s204
    %s222 = sphi 0, %s222
    %s224 = sphi 0, %s222
    %s225 = sphi 0, %s224
    %s239 = sphi 0, %s225
    %s243 = sphi 0, %s243
    %s245 = sphi 0, %s243
    %s246 = sphi 0, %s245
    %s260 = sphi 0, %s246
    %s268 = sphi 0, %s270
    %s271 = sphi 0, %s268
    %s272 = sphi 0, %s271
    %s288 = sphi 0, %s272
  $region4: #{tpu_custom_call.1} parent=0 // loop_header_branch
    %19 = sbr.rel (%p17) target = $region8
  $region5: #{tpu_custom_call.1} parent=0 // loop_body
    %s21 = ssub.s32 %s16, 1
    %s22 = ssub.s32 %s16, 2
    %s29 = sadd.s32 1, %s24
    %p30 = scmp.ge.s32.totalorder %s29, 2
    %s31 = scalar_select %p30, 0, %s29
    %s32 = sadd.s32 1, %s23
    %s33 = scalar_select %p30, %s32, %s23
    %p34 = scmp.ge.s32.totalorder %s33, 2
    %s35 = scalar_select %p34, 0, %s33
    %s36 = ssub.s32 %s23, %s35
    %s37 = ssub.s32 %s24, %s31
    %s38 = sor.u32 %s36, %s37
    %p39 = scmp.eq.s32.totalorder %s38, 0
    %s41 = sadd.s32 %s40, 1
    %s42 = scalar_select %p39, %s40, %s41
    %p45 = pneg %p39
    %p46 = scmp.eq.s32.totalorder %s16, 3
    %p47 = por %p45, %p46
    %p48 = scmp.ne.s32.totalorder %s40, %s43
    %p49 = scmp.eq.s32.totalorder %s16, 0
    %p50 = por %p48, %p49
    %p51 = scmp.ne.s32.totalorder %s40, %s43
    %p52 = scmp.eq.s32.totalorder %s21, 3
    %p53 = por %p51, %p52
    %p54 = scmp.ne.s32.totalorder %s43, %s44
    %p55 = scmp.eq.s32.totalorder %s21, 0
    %p56 = por %p54, %p55
    %p57 = scmp.ne.s32.totalorder %s43, %s44
    %p58 = scmp.eq.s32.totalorder %s22, 3
    %p59 = por %p57, %p58
    %p61 = scmp.ne.s32.totalorder %s44, %s60
    %p62 = scmp.eq.s32.totalorder %s22, 0
    %p63 = por %p61, %p62
    %s64 = sadd.s32 %s24, 1
    %s65 = smul.u32 %s64, 4
    %s66 = sadd.s32 %s31, 1
    %s67 = smul.u32 %s66, 4
    %s68 = ssub.s32 %s23, %s35
    %s69 = ssub.s32 %s65, %s67
    %s70 = sor.u32 %s68, %s69
    %p71 = scmp.eq.s32.totalorder %s70, 0
    %s73 = sadd.s32 %s72, 1
    %s74 = scalar_select %p71, %s72, %s73
    %p77 = pneg %p71
    %p78 = scmp.eq.s32.totalorder %s16, 3
    %p79 = por %p77, %p78
    %p80 = scmp.ne.s32.totalorder %s72, %s75
    %p81 = scmp.eq.s32.totalorder %s16, 0
    %p82 = por %p80, %p81
    %p83 = scmp.ne.s32.totalorder %s72, %s75
    %p84 = scmp.eq.s32.totalorder %s21, 3
    %p85 = por %p83, %p84
    %p86 = scmp.ne.s32.totalorder %s75, %s76
    %p87 = scmp.eq.s32.totalorder %s21, 0
    %p88 = por %p86, %p87
    %p89 = scmp.ne.s32.totalorder %s75, %s76
    %p90 = scmp.eq.s32.totalorder %s22, 3
    %p91 = por %p89, %p90
    %p93 = scmp.ne.s32.totalorder %s76, %s92
    %p94 = scmp.eq.s32.totalorder %s22, 0
    %p95 = por %p93, %p94
    %s97 = sadd.s32 %s96, 1
    %p100 = scmp.eq.s32.totalorder %s16, 3
    %p101 = scmp.ne.s32.totalorder %s96, %s98
    %p102 = scmp.eq.s32.totalorder %s16, 0
    %p103 = por %p101, %p102
    %p104 = scmp.ne.s32.totalorder %s96, %s98
    %p105 = scmp.eq.s32.totalorder %s21, 3
    %p106 = por %p104, %p105
    %p107 = scmp.ne.s32.totalorder %s98, %s99
    %p108 = scmp.eq.s32.totalorder %s21, 0
    %p109 = por %p107, %p108
    %p110 = scmp.ne.s32.totalorder %s98, %s99
    %p111 = scmp.eq.s32.totalorder %s22, 3
    %p112 = por %p110, %p111
    %p114 = scmp.ne.s32.totalorder %s99, %s113
    %p115 = scmp.eq.s32.totalorder %s22, 0
    %p116 = por %p114, %p115
    %s118 = sadd.s32 %s117, 1
    %p121 = scmp.eq.s32.totalorder %s16, 3
    %p122 = scmp.ne.s32.totalorder %s117, %s119
    %p123 = scmp.eq.s32.totalorder %s16, 0
    %p124 = por %p122, %p123
    %p125 = scmp.ne.s32.totalorder %s117, %s119
    %p126 = scmp.eq.s32.totalorder %s21, 3
    %p127 = por %p125, %p126
    %p128 = scmp.ne.s32.totalorder %s119, %s120
    %p129 = scmp.eq.s32.totalorder %s21, 0
    %p130 = por %p128, %p129
    %p131 = scmp.ne.s32.totalorder %s119, %s120
    %p132 = scmp.eq.s32.totalorder %s22, 3
    %p133 = por %p131, %p132
    %p135 = scmp.ne.s32.totalorder %s120, %s134
    %p136 = scmp.eq.s32.totalorder %s22, 0
    %p137 = por %p135, %p136
    %s139 = sadd.s32 %s138, 1
    %p142 = scmp.eq.s32.totalorder %s16, 3
    %p143 = scmp.ne.s32.totalorder %s138, %s140
    %p144 = scmp.eq.s32.totalorder %s16, 0
    %p145 = por %p143, %p144
    %p146 = scmp.ne.s32.totalorder %s138, %s140
    %p147 = scmp.eq.s32.totalorder %s21, 3
    %p148 = por %p146, %p147
    %p149 = scmp.ne.s32.totalorder %s140, %s141
    %p150 = scmp.eq.s32.totalorder %s21, 0
    %p151 = por %p149, %p150
    %p152 = scmp.ne.s32.totalorder %s140, %s141
    %p153 = scmp.eq.s32.totalorder %s22, 3
    %p154 = por %p152, %p153
    %p156 = scmp.ne.s32.totalorder %s141, %s155
    %p157 = scmp.eq.s32.totalorder %s22, 0
    %p158 = por %p156, %p157
    %s160 = sadd.s32 %s159, 1
    %p163 = scmp.eq.s32.totalorder %s16, 3
    %p164 = scmp.ne.s32.totalorder %s159, %s161
    %p165 = scmp.eq.s32.totalorder %s16, 0
    %p166 = por %p164, %p165
    %p167 = scmp.ne.s32.totalorder %s159, %s161
    %p168 = scmp.eq.s32.totalorder %s21, 3
    %p169 = por %p167, %p168
    %p170 = scmp.ne.s32.totalorder %s161, %s162
    %p171 = scmp.eq.s32.totalorder %s21, 0
    %p172 = por %p170, %p171
    %p173 = scmp.ne.s32.totalorder %s161, %s162
    %p174 = scmp.eq.s32.totalorder %s22, 3
    %p175 = por %p173, %p174
    %p177 = scmp.ne.s32.totalorder %s162, %s176
    %p178 = scmp.eq.s32.totalorder %s22, 0
    %p179 = por %p177, %p178
    %s181 = sadd.s32 %s180, 1
    %p184 = scmp.eq.s32.totalorder %s16, 3
    %p185 = scmp.ne.s32.totalorder %s180, %s182
    %p186 = scmp.eq.s32.totalorder %s16, 0
    %p187 = por %p185, %p186
    %p188 = scmp.ne.s32.totalorder %s180, %s182
    %p189 = scmp.eq.s32.totalorder %s21, 3
    %p190 = por %p188, %p189
    %p191 = scmp.ne.s32.totalorder %s182, %s183
    %p192 = scmp.eq.s32.totalorder %s21, 0
    %p193 = por %p191, %p192
    %p194 = scmp.ne.s32.totalorder %s182, %s183
    %p195 = scmp.eq.s32.totalorder %s22, 3
    %p196 = por %p194, %p195
    %p198 = scmp.ne.s32.totalorder %s183, %s197
    %p199 = scmp.eq.s32.totalorder %s22, 0
    %p200 = por %p198, %p199
    %s202 = sadd.s32 %s201, 1
    %p205 = scmp.eq.s32.totalorder %s16, 3
    %p206 = scmp.ne.s32.totalorder %s201, %s203
    %p207 = scmp.eq.s32.totalorder %s16, 0
    %p208 = por %p206, %p207
    %p209 = scmp.ne.s32.totalorder %s201, %s203
    %p210 = scmp.eq.s32.totalorder %s21, 3
    %p211 = por %p209, %p210
    %p212 = scmp.ne.s32.totalorder %s203, %s204
    %p213 = scmp.eq.s32.totalorder %s21, 0
    %p214 = por %p212, %p213
    %p215 = scmp.ne.s32.totalorder %s203, %s204
    %p216 = scmp.eq.s32.totalorder %s22, 3
    %p217 = por %p215, %p216
    %p219 = scmp.ne.s32.totalorder %s204, %s218
    %p220 = scmp.eq.s32.totalorder %s22, 0
    %p221 = por %p219, %p220
    %s223 = sadd.s32 %s222, 1
    %p226 = scmp.eq.s32.totalorder %s16, 3
    %p227 = scmp.ne.s32.totalorder %s222, %s224
    %p228 = scmp.eq.s32.totalorder %s16, 0
    %p229 = por %p227, %p228
    %p230 = scmp.ne.s32.totalorder %s222, %s224
    %p231 = scmp.eq.s32.totalorder %s21, 3
    %p232 = por %p230, %p231
    %p233 = scmp.ne.s32.totalorder %s224, %s225
    %p234 = scmp.eq.s32.totalorder %s21, 0
    %p235 = por %p233, %p234
    %p236 = scmp.ne.s32.totalorder %s224, %s225
    %p237 = scmp.eq.s32.totalorder %s22, 3
    %p238 = por %p236, %p237
    %p240 = scmp.ne.s32.totalorder %s225, %s239
    %p241 = scmp.eq.s32.totalorder %s22, 0
    %p242 = por %p240, %p241
    %s244 = sadd.s32 %s243, 1
    %p247 = scmp.eq.s32.totalorder %s16, 3
    %p248 = scmp.ne.s32.totalorder %s243, %s245
    %p249 = scmp.eq.s32.totalorder %s16, 0
    %p250 = por %p248, %p249
    %p251 = scmp.ne.s32.totalorder %s243, %s245
    %p252 = scmp.eq.s32.totalorder %s21, 3
    %p253 = por %p251, %p252
    %p254 = scmp.ne.s32.totalorder %s245, %s246
    %p255 = scmp.eq.s32.totalorder %s21, 0
    %p256 = por %p254, %p255
    %p257 = scmp.ne.s32.totalorder %s245, %s246
    %p258 = scmp.eq.s32.totalorder %s22, 3
    %p259 = por %p257, %p258
    %p261 = scmp.ne.s32.totalorder %s246, %s260
    %p262 = scmp.eq.s32.totalorder %s22, 0
    %p263 = por %p261, %p262
    %s264 = ssub.s32 %s23, %s35
    %s265 = ssub.s32 %s24, %s31
    %s266 = sor.u32 %s264, %s265
    %p267 = scmp.eq.s32.totalorder %s266, 0
    %s269 = sadd.s32 %s268, 1
    %s270 = scalar_select %p267, %s268, %s269
    %p273 = pneg %p267
    %p274 = scmp.eq.s32.totalorder %s16, 3
    %p275 = por %p273, %p274
    %p276 = scmp.ne.s32.totalorder %s268, %s271
    %p277 = scmp.eq.s32.totalorder %s16, 0
    %p278 = por %p276, %p277
    %p279 = scmp.ne.s32.totalorder %s268, %s271
    %p280 = scmp.eq.s32.totalorder %s21, 3
    %p281 = por %p279, %p280
    %p282 = scmp.ne.s32.totalorder %s271, %s272
    %p283 = scmp.eq.s32.totalorder %s21, 0
    %p284 = por %p282, %p283
    %p285 = scmp.ne.s32.totalorder %s271, %s272
    %p286 = scmp.eq.s32.totalorder %s22, 3
    %p287 = por %p285, %p286
    %p289 = scmp.ne.s32.totalorder %s272, %s288
    %p290 = scmp.eq.s32.totalorder %s22, 0
    %p291 = por %p289, %p290
    %p292 = scmp.le.s32.totalorder 1, %s16
    %p293 = scmp.lt.s32.totalorder %s16, 5
    %p294 = pnand %p292, %p293
    %p295 = pneg %p294
    // Predicated region
    $region9: #{tpu_custom_call.1} parent=5 // pred_check
      _
    $region10: #{tpu_custom_call.1} parent=5 // pred_check_branch
      %297 = sbr.rel (%p294) target = $region12
    $region11: #{tpu_custom_call.1} parent=5 // pred_region
      %s298 = ssub.s32 %s16, 1
      // Predicated region
      $region13: #{tpu_custom_call.1} parent=11 // pred_check
        %p299 = pneg %p109
      $region14: #{tpu_custom_call.1} parent=11 // pred_check_branch
        %301 = sbr.rel (%p299) target = $region16
      $region15: #{tpu_custom_call.1} parent=11 // pred_region
        _
      $region16: #{tpu_custom_call.1} parent=11 // pred_fallthru
        _
      // Predicated region
      $region17: #{tpu_custom_call.1} parent=11 // pred_check
        %p302 = pneg %p130
      $region18: #{tpu_custom_call.1} parent=11 // pred_check_branch
        %304 = sbr.rel (%p302) target = $region20
      $region19: #{tpu_custom_call.1} parent=11 // pred_region
        _
      $region20: #{tpu_custom_call.1} parent=11 // pred_fallthru
        _
      // Predicated region
      $region21: #{tpu_custom_call.1} parent=11 // pred_check
        %p305 = pneg %p151
      $region22: #{tpu_custom_call.1} parent=11 // pred_check_branch
        %307 = sbr.rel (%p305) target = $region24
      $region23: #{tpu_custom_call.1} parent=11 // pred_region
        _
      $region24: #{tpu_custom_call.1} parent=11 // pred_fallthru
        _
      // Predicated region
      $region25: #{tpu_custom_call.1} parent=11 // pred_check
        %p308 = pneg %p172
      $region26: #{tpu_custom_call.1} parent=11 // pred_check_branch
        %310 = sbr.rel (%p308) target = $region28
      $region27: #{tpu_custom_call.1} parent=11 // pred_region
        _
      $region28: #{tpu_custom_call.1} parent=11 // pred_fallthru
        _
      // Predicated region
      $region29: #{tpu_custom_call.1} parent=11 // pred_check
        %p311 = pneg %p193
      $region30: #{tpu_custom_call.1} parent=11 // pred_check_branch
        %313 = sbr.rel (%p311) target = $region32
      $region31: #{tpu_custom_call.1} parent=11 // pred_region
        _
      $region32: #{tpu_custom_call.1} parent=11 // pred_fallthru
        _
      // Predicated region
      $region33: #{tpu_custom_call.1} parent=11 // pred_check
        %p314 = pneg %p214
      $region34: #{tpu_custom_call.1} parent=11 // pred_check_branch
        %316 = sbr.rel (%p314) target = $region36
      $region35: #{tpu_custom_call.1} parent=11 // pred_region
        _
      $region36: #{tpu_custom_call.1} parent=11 // pred_fallthru
        _
      // Predicated region
      $region37: #{tpu_custom_call.1} parent=11 // pred_check
        %p317 = pneg %p235
      $region38: #{tpu_custom_call.1} parent=11 // pred_check_branch
        %319 = sbr.rel (%p317) target = $region40
      $region39: #{tpu_custom_call.1} parent=11 // pred_region
        _
      $region40: #{tpu_custom_call.1} parent=11 // pred_fallthru
        _
      // Predicated region
      $region41: #{tpu_custom_call.1} parent=11 // pred_check
        %p320 = pneg %p256
      $region42: #{tpu_custom_call.1} parent=11 // pred_check_branch
        %322 = sbr.rel (%p320) target = $region44
      $region43: #{tpu_custom_call.1} parent=11 // pred_region
        _
      $region44: #{tpu_custom_call.1} parent=11 // pred_fallthru
        _
    $region12: #{tpu_custom_call.1} parent=5 // pred_fallthru
      _
    %p323 = scmp.lt.s32.totalorder %s16, 4
    // Predicated region
    $region45: #{tpu_custom_call.1} parent=5 // pred_check
      %p324 = pneg %p323
    $region46: #{tpu_custom_call.1} parent=5 // pred_check_branch
      %326 = sbr.rel (%p324) target = $region48
    $region47: #{tpu_custom_call.1} parent=5 // pred_region
      // Predicated region
      $region49: #{tpu_custom_call.1} parent=47 // pred_check
        %p327 = pneg %p50
      $region50: #{tpu_custom_call.1} parent=47 // pred_check_branch
        %329 = sbr.rel (%p327) target = $region52
      $region51: #{tpu_custom_call.1} parent=47 // pred_region
        %s330 = smul.u32 8, %s24
        %s331 = ssub.s32 18, %s330
        %p332 = scmp.lt.s32.totalorder %s331, 8
        %s333 = scalar_select %p332, %s331, 8
        %s334 = smul.u32 128, %s333
        %s335 = smul.u32 %s334, 3
        %p336 = scmp.lt.s32.totalorder %s23, 1
        %s337 = scalar_select %p336, %s23, 1
        %p338 = scmp.lt.s32.totalorder %s330, 17
        %s339 = scalar_select %p338, %s330, 17
        %s340 = smul.addr %s339, 3
        %s341 = smul.addr %s337, 54
        %s342 = sadd.s32 %s340, %s341
        %s343 = smul.addr %s342, 8
        %s344 = scalar_lea.vmem %s0, %s343
        %s345 = smul.u32 8, %s24
        %s346 = ssub.s32 18, %s345
        %p347 = scmp.lt.s32.totalorder %s346, 8
        %s348 = scalar_select %p347, %s346, 8
        %s349 = smul.u32 128, %s348
        %s350 = smul.u32 %s349, 3
      $region52: #{tpu_custom_call.1} parent=47 // pred_fallthru
        _
      // Predicated region
      $region53: #{tpu_custom_call.1} parent=47 // pred_check
        %p351 = pneg %p82
      $region54: #{tpu_custom_call.1} parent=47 // pred_check_branch
        %353 = sbr.rel (%p351) target = $region56
      $region55: #{tpu_custom_call.1} parent=47 // pred_region
        %s354 = sadd.s32 %s24, 1
        %s355 = smul.u32 %s354, 4
        %s356 = smul.u32 2, %s355
        %p357 = scmp.lt.s32.totalorder %s23, 1
        %s358 = scalar_select %p357, %s23, 1
        %p359 = scmp.lt.s32.totalorder %s356, 17
        %s360 = scalar_select %p359, %s356, 17
        %s361 = smul.addr %s360, 3
        %s362 = smul.addr %s358, 54
        %s363 = sadd.s32 %s361, %s362
        %s364 = smul.addr %s363, 8
        %s365 = scalar_lea.vmem %s1, %s364
        %s366 = sadd.s32 %s24, 1
        %s367 = smul.u32 %s366, 4
        %s368 = smul.u32 2, %s367
      $region56: #{tpu_custom_call.1} parent=47 // pred_fallthru
        _
    $region48: #{tpu_custom_call.1} parent=5 // pred_fallthru
      _
    %p369 = scmp.le.s32.totalorder 1, %s16
    %p370 = scmp.lt.s32.totalorder %s16, 5
    %p371 = pnand %p369, %p370
    %p372 = pneg %p371
    // Predicated region
    $region57: #{tpu_custom_call.1} parent=5 // pred_check
      _
    $region58: #{tpu_custom_call.1} parent=5 // pred_check_branch
      %374 = sbr.rel (%p371) target = $region60
    $region59: #{tpu_custom_call.1} parent=5 // pred_region
      %s375 = ssub.s32 %s16, 1
      %s376 = smul.u32 8, %s26
      %s377 = ssub.s32 18, %s376
      %p378 = scmp.lt.s32.totalorder %s377, 8
      %s379 = scalar_select %p378, %s377, 8
      %s380 = smul.u32 128, %s379
      %s381 = smul.u32 %s380, 3
      %p382 = scmp.lt.s32.totalorder %s25, 1
      %s383 = scalar_select %p382, %s25, 1
      %p384 = scmp.lt.s32.totalorder %s376, 17
      %s385 = scalar_select %p384, %s376, 17
      %s386 = smul.addr %s385, 3
      %s387 = smul.addr %s383, 54
      %s388 = sadd.s32 %s386, %s387
      %s389 = smul.addr %s388, 8
      %s390 = scalar_lea.vmem %s0, %s389
      %p391 = pneg %p56
      %p392 = pneg %p53
      %s393 = sadd.s32 %s26, 1
      %s394 = smul.u32 %s393, 4
      %s395 = smul.u32 2, %s394
      %p396 = scmp.lt.s32.totalorder %s25, 1
      %s397 = scalar_select %p396, %s25, 1
      %p398 = scmp.lt.s32.totalorder %s395, 17
      %s399 = scalar_select %p398, %s395, 17
      %s400 = smul.addr %s399, 3
      %s401 = smul.addr %s397, 54
      %s402 = sadd.s32 %s400, %s401
      %s403 = smul.addr %s402, 8
      %s404 = scalar_lea.vmem %s1, %s403
      %p405 = pneg %p88
      %p406 = pneg %p85
      %p407 = pneg %p109
      %p408 = pneg %p106
      %p409 = pneg %p130
      %p410 = pneg %p127
      %p411 = pneg %p151
      %p412 = pneg %p148
      %p413 = pneg %p172
      %p414 = pneg %p169
      %p415 = pneg %p193
      %p416 = pneg %p190
      %p417 = pneg %p214
      %p418 = pneg %p211
      %p419 = pneg %p235
      %p420 = pneg %p232
      %p421 = pneg %p256
      %p422 = pneg %p253
      %p423 = pneg %p284
      %p424 = pneg %p281
      %s425 = smul.u32 8, %s26
      %p426 = scmp.lt.s32.totalorder %s25, 1
      %s427 = scalar_select %p426, %s25, 1
      %p428 = scmp.lt.s32.totalorder %s425, 15
      %s429 = scalar_select %p428, %s425, 15
      %s430 = smul.addr %s429, 2
      %s431 = smul.addr %s427, 32
      %s432 = sadd.s32 %s430, %s431
      %s433 = smul.addr %s432, 8
      %s434 = scalar_lea.vmem %s10, %s433
      %s435 = smul.u32 8, %s26
      %s436 = ssub.s32 18, %s435
      %p437 = scmp.lt.s32.totalorder %s436, 8
      %s438 = scalar_select %p437, %s436, 8
      %s439 = smul.u32 128, %s438
      %s440 = smul.u32 %s439, 3
      %p441 = scmp.lt.s32.totalorder %s25, 1
      %s442 = scalar_select %p441, %s25, 1
      %p443 = scmp.lt.s32.totalorder %s435, 17
      %s444 = scalar_select %p443, %s435, 17
      %s445 = smul.addr %s444, 3
      %s446 = smul.addr %s442, 54
      %s447 = sadd.s32 %s445, %s446
      %s448 = smul.addr %s447, 8
      %s449 = scalar_lea.vmem %s0, %s448
      %s450 = smul.u32 8, %s26
      %s451 = ssub.s32 18, %s450
      %p452 = scmp.lt.s32.totalorder %s451, 8
      %s453 = scalar_select %p452, %s451, 8
      %s454 = smul.u32 128, %s453
      %s455 = smul.u32 %s454, 3
      %s456 = sadd.s32 %s26, 1
      %s457 = smul.u32 %s456, 4
      %s458 = smul.u32 2, %s457
      %p459 = scmp.lt.s32.totalorder %s25, 1
      %s460 = scalar_select %p459, %s25, 1
      %p461 = scmp.lt.s32.totalorder %s458, 17
      %s462 = scalar_select %p461, %s458, 17
      %s463 = smul.addr %s462, 3
      %s464 = smul.addr %s460, 54
      %s465 = sadd.s32 %s463, %s464
      %s466 = smul.addr %s465, 8
      %s467 = scalar_lea.vmem %s1, %s466
      %s468 = sadd.s32 %s26, 1
      %s469 = smul.u32 %s468, 4
      %s470 = smul.u32 2, %s469
      %s471 = smul.u32 8, %s26
      %p472 = scmp.lt.s32.totalorder %s25, 1
      %s473 = scalar_select %p472, %s25, 1
      %p474 = scmp.lt.s32.totalorder %s471, 15
      %s475 = scalar_select %p474, %s471, 15
      %s476 = smul.addr %s475, 2
      %s477 = smul.addr %s473, 32
      %s478 = sadd.s32 %s476, %s477
      %s479 = smul.addr %s478, 8
      %s480 = scalar_lea.vmem %s10, %s479
      %s481 = smul.u32 8, %s26
      %v482 = vld [vmem:[%s449] sm:$0xff]
      %v483 = vld [vmem:[%s449 + $0x8] sm:$0xff]
      %v484 = vld [vmem:[%s449 + $0x10] sm:$0x3]
      %v485 = vld [vmem:[%s449 + $0x18] sm:$0xff]
      %v486 = vld [vmem:[%s449 + $0x20] sm:$0xff]
      %v487 = vld [vmem:[%s449 + $0x28] sm:$0x3]
      %v488 = vld [vmem:[%s449 + $0x30] sm:$0xff]
      %v489 = vld [vmem:[%s449 + $0x38] sm:$0xff]
      %v490 = vld [vmem:[%s449 + $0x40] sm:$0x3]
      %v491 = vld [vmem:[%s449 + $0x48] sm:$0xff]
      %v492 = vld [vmem:[%s449 + $0x50] sm:$0xff]
      %v493 = vld [vmem:[%s449 + $0x58] sm:$0x3]
      %v494 = vld [vmem:[%s449 + $0x60] sm:$0xff]
      %v495 = vld [vmem:[%s449 + $0x68] sm:$0xff]
      %v496 = vld [vmem:[%s449 + $0x70] sm:$0x3]
      %v497 = vld [vmem:[%s449 + $0x78] sm:$0xff]
      %v498 = vld [vmem:[%s449 + $0x80] sm:$0xff]
      %v499 = vld [vmem:[%s449 + $0x88] sm:$0x3]
      %v500 = vld [vmem:[%s449 + $0x90] sm:$0xff]
      %v501 = vld [vmem:[%s449 + $0x98] sm:$0xff]
      %v502 = vld [vmem:[%s449 + $0xa0] sm:$0x3]
      %v503 = vld [vmem:[%s449 + $0xa8] sm:$0xff]
      %v504 = vld [vmem:[%s449 + $0xb0] sm:$0xff]
      %v505 = vld [vmem:[%s449 + $0xb8] sm:$0x3]
      %v506 = vld [vmem:[%s467] sm:$0xff]
      %v507 = vld [vmem:[%s467 + $0x8] sm:$0xff]
      %v508 = vld [vmem:[%s467 + $0x10] sm:$0x3]
      %v509 = vld [vmem:[%s467 + $0x18] sm:$0xff]
      %v510 = vld [vmem:[%s467 + $0x20] sm:$0xff]
      %v511 = vld [vmem:[%s467 + $0x28] sm:$0x3]
      %v542 = vcombine.high %v482, %v482
      %v544 = vunpack.c.l.s4 1983009808
      %v545 = vunpack.c.0.s8 %v544
      %v546 = vlaneseq
      %v547 = vshrl.u32 %v546, 7
      %v548 = vsub.s32 %v545, %v547
      %v549 = vrot.slane %v482, %v548
      %v551 = vunpack.c.l.s4 1983009808
      %v552 = vunpack.c.0.s8 %v551
      %v553 = vlaneseq
      %v554 = vshrl.u32 %v553, 7
      %v555 = vsub.s32 %v552, %v554
      %v556 = vrot.slane %v542, %v555
      %v557 = vcombine.high %v549, %v549
      %v558 = vcombine.high %v556, %v556
      %v559 = vcombine.high %v483, %v483
      %v561 = vunpack.c.l.s4 1983009808
      %v562 = vunpack.c.0.s8 %v561
      %v563 = vlaneseq
      %v564 = vshrl.u32 %v563, 7
      %v565 = vsub.s32 %v562, %v564
      %v566 = vrot.slane %v483, %v565
      %v568 = vunpack.c.l.s4 1983009808
      %v569 = vunpack.c.0.s8 %v568
      %v570 = vlaneseq
      %v571 = vshrl.u32 %v570, 7
      %v572 = vsub.s32 %v569, %v571
      %v573 = vrot.slane %v559, %v572
      %v574 = vcombine.high %v566, %v566
      %v575 = vcombine.high %v573, %v573
      %v577 = vunpack.c.l.s4 1983009808
      %v578 = vunpack.c.0.s8 %v577
      %v579 = vlaneseq
      %v580 = vshrl.u32 %v579, 7
      %v581 = vsub.s32 %v578, %v580
      %v582 = vrot.slane %v484, %v581
      %v583 = vcombine.high %v485, %v485
      %v585 = vunpack.c.l.s4 1983009808
      %v586 = vunpack.c.0.s8 %v585
      %v587 = vlaneseq
      %v588 = vshrl.u32 %v587, 7
      %v589 = vsub.s32 %v586, %v588
      %v590 = vrot.slane %v485, %v589
      %v592 = vunpack.c.l.s4 1983009808
      %v593 = vunpack.c.0.s8 %v592
      %v594 = vlaneseq
      %v595 = vshrl.u32 %v594, 7
      %v596 = vsub.s32 %v593, %v595
      %v597 = vrot.slane %v583, %v596
      %v598 = vcombine.high %v590, %v590
      %v599 = vcombine.high %v597, %v597
      %v600 = vcombine.high %v486, %v486
      %v602 = vunpack.c.l.s4 1983009808
      %v603 = vunpack.c.0.s8 %v602
      %v604 = vlaneseq
      %v605 = vshrl.u32 %v604, 7
      %v606 = vsub.s32 %v603, %v605
      %v607 = vrot.slane %v486, %v606
      %v609 = vunpack.c.l.s4 1983009808
      %v610 = vunpack.c.0.s8 %v609
      %v611 = vlaneseq
      %v612 = vshrl.u32 %v611, 7
      %v613 = vsub.s32 %v610, %v612
      %v614 = vrot.slane %v600, %v613
      %v615 = vcombine.high %v607, %v607
      %v616 = vcombine.high %v614, %v614
      %v618 = vunpack.c.l.s4 1983009808
      %v619 = vunpack.c.0.s8 %v618
      %v620 = vlaneseq
      %v621 = vshrl.u32 %v620, 7
      %v622 = vsub.s32 %v619, %v621
      %v623 = vrot.slane %v487, %v622
      %v624 = vcombine.high %v488, %v488
      %v626 = vunpack.c.l.s4 1983009808
      %v627 = vunpack.c.0.s8 %v626
      %v628 = vlaneseq
      %v629 = vshrl.u32 %v628, 7
      %v630 = vsub.s32 %v627, %v629
      %v631 = vrot.slane %v488, %v630
      %v633 = vunpack.c.l.s4 1983009808
      %v634 = vunpack.c.0.s8 %v633
      %v635 = vlaneseq
      %v636 = vshrl.u32 %v635, 7
      %v637 = vsub.s32 %v634, %v636
      %v638 = vrot.slane %v624, %v637
      %v639 = vcombine.high %v631, %v631
      %v640 = vcombine.high %v638, %v638
      %v641 = vcombine.high %v489, %v489
      %v643 = vunpack.c.l.s4 1983009808
      %v644 = vunpack.c.0.s8 %v643
      %v645 = vlaneseq
      %v646 = vshrl.u32 %v645, 7
      %v647 = vsub.s32 %v644, %v646
      %v648 = vrot.slane %v489, %v647
      %v650 = vunpack.c.l.s4 1983009808
      %v651 = vunpack.c.0.s8 %v650
      %v652 = vlaneseq
      %v653 = vshrl.u32 %v652, 7
      %v654 = vsub.s32 %v651, %v653
      %v655 = vrot.slane %v641, %v654
      %v656 = vcombine.high %v648, %v648
      %v657 = vcombine.high %v655, %v655
      %v659 = vunpack.c.l.s4 1983009808
      %v660 = vunpack.c.0.s8 %v659
      %v661 = vlaneseq
      %v662 = vshrl.u32 %v661, 7
      %v663 = vsub.s32 %v660, %v662
      %v664 = vrot.slane %v490, %v663
      %v665 = vcombine.high %v491, %v491
      %v667 = vunpack.c.l.s4 1983009808
      %v668 = vunpack.c.0.s8 %v667
      %v669 = vlaneseq
      %v670 = vshrl.u32 %v669, 7
      %v671 = vsub.s32 %v668, %v670
      %v672 = vrot.slane %v491, %v671
      %v674 = vunpack.c.l.s4 1983009808
      %v675 = vunpack.c.0.s8 %v674
      %v676 = vlaneseq
      %v677 = vshrl.u32 %v676, 7
      %v678 = vsub.s32 %v675, %v677
      %v679 = vrot.slane %v665, %v678
      %v680 = vcombine.high %v672, %v672
      %v681 = vcombine.high %v679, %v679
      %v682 = vcombine.high %v492, %v492
      %v684 = vunpack.c.l.s4 1983009808
      %v685 = vunpack.c.0.s8 %v684
      %v686 = vlaneseq
      %v687 = vshrl.u32 %v686, 7
      %v688 = vsub.s32 %v685, %v687
      %v689 = vrot.slane %v492, %v688
      %v691 = vunpack.c.l.s4 1983009808
      %v692 = vunpack.c.0.s8 %v691
      %v693 = vlaneseq
      %v694 = vshrl.u32 %v693, 7
      %v695 = vsub.s32 %v692, %v694
      %v696 = vrot.slane %v682, %v695
      %v697 = vcombine.high %v689, %v689
      %v698 = vcombine.high %v696, %v696
      %v700 = vunpack.c.l.s4 1983009808
      %v701 = vunpack.c.0.s8 %v700
      %v702 = vlaneseq
      %v703 = vshrl.u32 %v702, 7
      %v704 = vsub.s32 %v701, %v703
      %v705 = vrot.slane %v493, %v704
      %v706 = vcombine.high %v494, %v494
      %v708 = vunpack.c.l.s4 1983009808
      %v709 = vunpack.c.0.s8 %v708
      %v710 = vlaneseq
      %v711 = vshrl.u32 %v710, 7
      %v712 = vsub.s32 %v709, %v711
      %v713 = vrot.slane %v494, %v712
      %v715 = vunpack.c.l.s4 1983009808
      %v716 = vunpack.c.0.s8 %v715
      %v717 = vlaneseq
      %v718 = vshrl.u32 %v717, 7
      %v719 = vsub.s32 %v716, %v718
      %v720 = vrot.slane %v706, %v719
      %v721 = vcombine.high %v713, %v713
      %v722 = vcombine.high %v720, %v720
      %v723 = vcombine.high %v495, %v495
      %v725 = vunpack.c.l.s4 1983009808
      %v726 = vunpack.c.0.s8 %v725
      %v727 = vlaneseq
      %v728 = vshrl.u32 %v727, 7
      %v729 = vsub.s32 %v726, %v728
      %v730 = vrot.slane %v495, %v729
      %v732 = vunpack.c.l.s4 1983009808
      %v733 = vunpack.c.0.s8 %v732
      %v734 = vlaneseq
      %v735 = vshrl.u32 %v734, 7
      %v736 = vsub.s32 %v733, %v735
      %v737 = vrot.slane %v723, %v736
      %v738 = vcombine.high %v730, %v730
      %v739 = vcombine.high %v737, %v737
      %v741 = vunpack.c.l.s4 1983009808
      %v742 = vunpack.c.0.s8 %v741
      %v743 = vlaneseq
      %v744 = vshrl.u32 %v743, 7
      %v745 = vsub.s32 %v742, %v744
      %v746 = vrot.slane %v496, %v745
      %v747 = vcombine.high %v497, %v497
      %v749 = vunpack.c.l.s4 1983009808
      %v750 = vunpack.c.0.s8 %v749
      %v751 = vlaneseq
      %v752 = vshrl.u32 %v751, 7
      %v753 = vsub.s32 %v750, %v752
      %v754 = vrot.slane %v497, %v753
      %v756 = vunpack.c.l.s4 1983009808
      %v757 = vunpack.c.0.s8 %v756
      %v758 = vlaneseq
      %v759 = vshrl.u32 %v758, 7
      %v760 = vsub.s32 %v757, %v759
      %v761 = vrot.slane %v747, %v760
      %v762 = vcombine.high %v754, %v754
      %v763 = vcombine.high %v761, %v761
      %v764 = vcombine.high %v498, %v498
      %v766 = vunpack.c.l.s4 1983009808
      %v767 = vunpack.c.0.s8 %v766
      %v768 = vlaneseq
      %v769 = vshrl.u32 %v768, 7
      %v770 = vsub.s32 %v767, %v769
      %v771 = vrot.slane %v498, %v770
      %v773 = vunpack.c.l.s4 1983009808
      %v774 = vunpack.c.0.s8 %v773
      %v775 = vlaneseq
      %v776 = vshrl.u32 %v775, 7
      %v777 = vsub.s32 %v774, %v776
      %v778 = vrot.slane %v764, %v777
      %v779 = vcombine.high %v771, %v771
      %v780 = vcombine.high %v778, %v778
      %v782 = vunpack.c.l.s4 1983009808
      %v783 = vunpack.c.0.s8 %v782
      %v784 = vlaneseq
      %v785 = vshrl.u32 %v784, 7
      %v786 = vsub.s32 %v783, %v785
      %v787 = vrot.slane %v499, %v786
      %v788 = vcombine.high %v500, %v500
      %v790 = vunpack.c.l.s4 1983009808
      %v791 = vunpack.c.0.s8 %v790
      %v792 = vlaneseq
      %v793 = vshrl.u32 %v792, 7
      %v794 = vsub.s32 %v791, %v793
      %v795 = vrot.slane %v500, %v794
      %v797 = vunpack.c.l.s4 1983009808
      %v798 = vunpack.c.0.s8 %v797
      %v799 = vlaneseq
      %v800 = vshrl.u32 %v799, 7
      %v801 = vsub.s32 %v798, %v800
      %v802 = vrot.slane %v788, %v801
      %v803 = vcombine.high %v795, %v795
      %v804 = vcombine.high %v802, %v802
      %v805 = vcombine.high %v501, %v501
      %v807 = vunpack.c.l.s4 1983009808
      %v808 = vunpack.c.0.s8 %v807
      %v809 = vlaneseq
      %v810 = vshrl.u32 %v809, 7
      %v811 = vsub.s32 %v808, %v810
      %v812 = vrot.slane %v501, %v811
      %v814 = vunpack.c.l.s4 1983009808
      %v815 = vunpack.c.0.s8 %v814
      %v816 = vlaneseq
      %v817 = vshrl.u32 %v816, 7
      %v818 = vsub.s32 %v815, %v817
      %v819 = vrot.slane %v805, %v818
      %v820 = vcombine.high %v812, %v812
      %v821 = vcombine.high %v819, %v819
      %v823 = vunpack.c.l.s4 1983009808
      %v824 = vunpack.c.0.s8 %v823
      %v825 = vlaneseq
      %v826 = vshrl.u32 %v825, 7
      %v827 = vsub.s32 %v824, %v826
      %v828 = vrot.slane %v502, %v827
      %v829 = vcombine.high %v503, %v503
      %v831 = vunpack.c.l.s4 1983009808
      %v832 = vunpack.c.0.s8 %v831
      %v833 = vlaneseq
      %v834 = vshrl.u32 %v833, 7
      %v835 = vsub.s32 %v832, %v834
      %v836 = vrot.slane %v503, %v835
      %v838 = vunpack.c.l.s4 1983009808
      %v839 = vunpack.c.0.s8 %v838
      %v840 = vlaneseq
      %v841 = vshrl.u32 %v840, 7
      %v842 = vsub.s32 %v839, %v841
      %v843 = vrot.slane %v829, %v842
      %v844 = vcombine.high %v836, %v836
      %v845 = vcombine.high %v843, %v843
      %v846 = vcombine.high %v504, %v504
      %v848 = vunpack.c.l.s4 1983009808
      %v849 = vunpack.c.0.s8 %v848
      %v850 = vlaneseq
      %v851 = vshrl.u32 %v850, 7
      %v852 = vsub.s32 %v849, %v851
      %v853 = vrot.slane %v504, %v852
      %v855 = vunpack.c.l.s4 1983009808
      %v856 = vunpack.c.0.s8 %v855
      %v857 = vlaneseq
      %v858 = vshrl.u32 %v857, 7
      %v859 = vsub.s32 %v856, %v858
      %v860 = vrot.slane %v846, %v859
      %v861 = vcombine.high %v853, %v853
      %v862 = vcombine.high %v860, %v860
      %v864 = vunpack.c.l.s4 1983009808
      %v865 = vunpack.c.0.s8 %v864
      %v866 = vlaneseq
      %v867 = vshrl.u32 %v866, 7
      %v868 = vsub.s32 %v865, %v867
      %v869 = vrot.slane %v505, %v868
      %v870 = vcombine.high %v506, %v506
      %v872 = vunpack.c.l.s4 1983009808
      %v873 = vunpack.c.0.s8 %v872
      %v874 = vlaneseq
      %v875 = vshrl.u32 %v874, 7
      %v876 = vsub.s32 %v873, %v875
      %v877 = vrot.slane %v506, %v876
      %v879 = vunpack.c.l.s4 1983009808
      %v880 = vunpack.c.0.s8 %v879
      %v881 = vlaneseq
      %v882 = vshrl.u32 %v881, 7
      %v883 = vsub.s32 %v880, %v882
      %v884 = vrot.slane %v870, %v883
      %v885 = vcombine.high %v877, %v877
      %v886 = vcombine.high %v884, %v884
      %v887 = vcombine.high %v507, %v507
      %v889 = vunpack.c.l.s4 1983009808
      %v890 = vunpack.c.0.s8 %v889
      %v891 = vlaneseq
      %v892 = vshrl.u32 %v891, 7
      %v893 = vsub.s32 %v890, %v892
      %v894 = vrot.slane %v507, %v893
      %v896 = vunpack.c.l.s4 1983009808
      %v897 = vunpack.c.0.s8 %v896
      %v898 = vlaneseq
      %v899 = vshrl.u32 %v898, 7
      %v900 = vsub.s32 %v897, %v899
      %v901 = vrot.slane %v887, %v900
      %v902 = vcombine.high %v894, %v894
      %v903 = vcombine.high %v901, %v901
      %v905 = vunpack.c.l.s4 1983009808
      %v906 = vunpack.c.0.s8 %v905
      %v907 = vlaneseq
      %v908 = vshrl.u32 %v907, 7
      %v909 = vsub.s32 %v906, %v908
      %v910 = vrot.slane %v508, %v909
      %v911 = vcombine.high %v509, %v509
      %v913 = vunpack.c.l.s4 1983009808
      %v914 = vunpack.c.0.s8 %v913
      %v915 = vlaneseq
      %v916 = vshrl.u32 %v915, 7
      %v917 = vsub.s32 %v914, %v916
      %v918 = vrot.slane %v509, %v917
      %v920 = vunpack.c.l.s4 1983009808
      %v921 = vunpack.c.0.s8 %v920
      %v922 = vlaneseq
      %v923 = vshrl.u32 %v922, 7
      %v924 = vsub.s32 %v921, %v923
      %v925 = vrot.slane %v911, %v924
      %v926 = vcombine.high %v918, %v918
      %v927 = vcombine.high %v925, %v925
      %v928 = vcombine.high %v510, %v510
      %v930 = vunpack.c.l.s4 1983009808
      %v931 = vunpack.c.0.s8 %v930
      %v932 = vlaneseq
      %v933 = vshrl.u32 %v932, 7
      %v934 = vsub.s32 %v931, %v933
      %v935 = vrot.slane %v510, %v934
      %v937 = vunpack.c.l.s4 1983009808
      %v938 = vunpack.c.0.s8 %v937
      %v939 = vlaneseq
      %v940 = vshrl.u32 %v939, 7
      %v941 = vsub.s32 %v938, %v940
      %v942 = vrot.slane %v928, %v941
      %v943 = vcombine.high %v935, %v935
      %v944 = vcombine.high %v942, %v942
      %v946 = vunpack.c.l.s4 1983009808
      %v947 = vunpack.c.0.s8 %v946
      %v948 = vlaneseq
      %v949 = vshrl.u32 %v948, 7
      %v950 = vsub.s32 %v947, %v949
      %v951 = vrot.slane %v511, %v950
      %v952 = vld [vmem:[%s2] sm:$0xf]
      %v953 = vld [vmem:[%s3] sm:$0x1]
      %v955 = vlaneseq
      %v956 = vshrl.u32 %v955, 7
      %v957 = vsub.s32 0, %v956
      %v958 = vrot.slane %v953, %v957
      %v960 = vcombine.low %v549, %v557
      %v961 = vcombine.low %v556, %v558
      %v963 = vunpack.c.l.s4 1983009808
      %v964 = vunpack.c.0.s8 %v963
      %v965 = vlaneseq
      %v966 = vshrl.u32 %v965, 7
      %v967 = vsub.s32 %v964, %v966
      %v968 = vrot.slane %v960, %v967
      %v970 = vunpack.c.l.s4 1983009808
      %v971 = vunpack.c.0.s8 %v970
      %v972 = vlaneseq
      %v973 = vshrl.u32 %v972, 7
      %v974 = vsub.s32 %v971, %v973
      %v975 = vrot.slane %v961, %v974
      %v976 = vcombine.low %v968, %v975
      %v977 = vcombine.low %v566, %v574
      %v978 = vcombine.low %v573, %v575
      %v980 = vunpack.c.l.s4 1983009808
      %v981 = vunpack.c.0.s8 %v980
      %v982 = vlaneseq
      %v983 = vshrl.u32 %v982, 7
      %v984 = vsub.s32 %v981, %v983
      %v985 = vrot.slane %v977, %v984
      %v987 = vunpack.c.l.s4 1983009808
      %v988 = vunpack.c.0.s8 %v987
      %v989 = vlaneseq
      %v990 = vshrl.u32 %v989, 7
      %v991 = vsub.s32 %v988, %v990
      %v992 = vrot.slane %v978, %v991
      %v993 = vcombine.low %v985, %v992
      %v994 = vcombine.low %v582, %v590
      %v995 = vcombine.low %v598, %v597
      %v997 = vunpack.c.l.s4 1983009808
      %v998 = vunpack.c.0.s8 %v997
      %v999 = vlaneseq
      %v1000 = vshrl.u32 %v999, 7
      %v1001 = vsub.s32 %v998, %v1000
      %v1002 = vrot.slane %v994, %v1001
      %v1004 = vunpack.c.l.s4 1983009808
      %v1005 = vunpack.c.0.s8 %v1004
      %v1006 = vlaneseq
      %v1007 = vshrl.u32 %v1006, 7
      %v1008 = vsub.s32 %v1005, %v1007
      %v1009 = vrot.slane %v995, %v1008
      %v1010 = vcombine.low %v1002, %v1009
      %v1011 = vcombine.low %v599, %v607
      %v1012 = vcombine.low %v615, %v614
      %v1014 = vunpack.c.l.s4 1983009808
      %v1015 = vunpack.c.0.s8 %v1014
      %v1016 = vlaneseq
      %v1017 = vshrl.u32 %v1016, 7
      %v1018 = vsub.s32 %v1015, %v1017
      %v1019 = vrot.slane %v1011, %v1018
      %v1021 = vunpack.c.l.s4 1983009808
      %v1022 = vunpack.c.0.s8 %v1021
      %v1023 = vlaneseq
      %v1024 = vshrl.u32 %v1023, 7
      %v1025 = vsub.s32 %v1022, %v1024
      %v1026 = vrot.slane %v1012, %v1025
      %v1027 = vcombine.low %v1019, %v1026
      %v1028 = vcombine.low %v616, %v623
      %v1029 = vcombine.low %v631, %v639
      %v1031 = vunpack.c.l.s4 1983009808
      %v1032 = vunpack.c.0.s8 %v1031
      %v1033 = vlaneseq
      %v1034 = vshrl.u32 %v1033, 7
      %v1035 = vsub.s32 %v1032, %v1034
      %v1036 = vrot.slane %v1028, %v1035
      %v1038 = vunpack.c.l.s4 1983009808
      %v1039 = vunpack.c.0.s8 %v1038
      %v1040 = vlaneseq
      %v1041 = vshrl.u32 %v1040, 7
      %v1042 = vsub.s32 %v1039, %v1041
      %v1043 = vrot.slane %v1029, %v1042
      %v1044 = vcombine.low %v1036, %v1043
      %v1045 = vcombine.low %v638, %v640
      %v1046 = vcombine.low %v648, %v656
      %v1048 = vunpack.c.l.s4 1983009808
      %v1049 = vunpack.c.0.s8 %v1048
      %v1050 = vlaneseq
      %v1051 = vshrl.u32 %v1050, 7
      %v1052 = vsub.s32 %v1049, %v1051
      %v1053 = vrot.slane %v1045, %v1052
      %v1055 = vunpack.c.l.s4 1983009808
      %v1056 = vunpack.c.0.s8 %v1055
      %v1057 = vlaneseq
      %v1058 = vshrl.u32 %v1057, 7
      %v1059 = vsub.s32 %v1056, %v1058
      %v1060 = vrot.slane %v1046, %v1059
      %v1061 = vcombine.low %v1053, %v1060
      %v1062 = vcombine.low %v655, %v657
      %v1063 = vcombine.low %v664, %v672
      %v1065 = vunpack.c.l.s4 1983009808
      %v1066 = vunpack.c.0.s8 %v1065
      %v1067 = vlaneseq
      %v1068 = vshrl.u32 %v1067, 7
      %v1069 = vsub.s32 %v1066, %v1068
      %v1070 = vrot.slane %v1062, %v1069
      %v1072 = vunpack.c.l.s4 1983009808
      %v1073 = vunpack.c.0.s8 %v1072
      %v1074 = vlaneseq
      %v1075 = vshrl.u32 %v1074, 7
      %v1076 = vsub.s32 %v1073, %v1075
      %v1077 = vrot.slane %v1063, %v1076
      %v1078 = vcombine.low %v1070, %v1077
      %v1079 = vcombine.low %v680, %v679
      %v1080 = vcombine.low %v681, %v689
      %v1082 = vunpack.c.l.s4 1983009808
      %v1083 = vunpack.c.0.s8 %v1082
      %v1084 = vlaneseq
      %v1085 = vshrl.u32 %v1084, 7
      %v1086 = vsub.s32 %v1083, %v1085
      %v1087 = vrot.slane %v1079, %v1086
      %v1089 = vunpack.c.l.s4 1983009808
      %v1090 = vunpack.c.0.s8 %v1089
      %v1091 = vlaneseq
      %v1092 = vshrl.u32 %v1091, 7
      %v1093 = vsub.s32 %v1090, %v1092
      %v1094 = vrot.slane %v1080, %v1093
      %v1095 = vcombine.low %v1087, %v1094
      %v1096 = vcombine.low %v697, %v696
      %v1097 = vcombine.low %v698, %v705
      %v1099 = vunpack.c.l.s4 1983009808
      %v1100 = vunpack.c.0.s8 %v1099
      %v1101 = vlaneseq
      %v1102 = vshrl.u32 %v1101, 7
      %v1103 = vsub.s32 %v1100, %v1102
      %v1104 = vrot.slane %v1096, %v1103
      %v1106 = vunpack.c.l.s4 1983009808
      %v1107 = vunpack.c.0.s8 %v1106
      %v1108 = vlaneseq
      %v1109 = vshrl.u32 %v1108, 7
      %v1110 = vsub.s32 %v1107, %v1109
      %v1111 = vrot.slane %v1097, %v1110
      %v1112 = vcombine.low %v1104, %v1111
      %v1113 = vcombine.low %v713, %v721
      %v1114 = vcombine.low %v720, %v722
      %v1116 = vunpack.c.l.s4 1983009808
      %v1117 = vunpack.c.0.s8 %v1116
      %v1118 = vlaneseq
      %v1119 = vshrl.u32 %v1118, 7
      %v1120 = vsub.s32 %v1117, %v1119
      %v1121 = vrot.slane %v1113, %v1120
      %v1123 = vunpack.c.l.s4 1983009808
      %v1124 = vunpack.c.0.s8 %v1123
      %v1125 = vlaneseq
      %v1126 = vshrl.u32 %v1125, 7
      %v1127 = vsub.s32 %v1124, %v1126
      %v1128 = vrot.slane %v1114, %v1127
      %v1129 = vcombine.low %v1121, %v1128
      %v1130 = vcombine.low %v730, %v738
      %v1131 = vcombine.low %v737, %v739
      %v1133 = vunpack.c.l.s4 1983009808
      %v1134 = vunpack.c.0.s8 %v1133
      %v1135 = vlaneseq
      %v1136 = vshrl.u32 %v1135, 7
      %v1137 = vsub.s32 %v1134, %v1136
      %v1138 = vrot.slane %v1130, %v1137
      %v1140 = vunpack.c.l.s4 1983009808
      %v1141 = vunpack.c.0.s8 %v1140
      %v1142 = vlaneseq
      %v1143 = vshrl.u32 %v1142, 7
      %v1144 = vsub.s32 %v1141, %v1143
      %v1145 = vrot.slane %v1131, %v1144
      %v1146 = vcombine.low %v1138, %v1145
      %v1147 = vcombine.low %v746, %v754
      %v1148 = vcombine.low %v762, %v761
      %v1150 = vunpack.c.l.s4 1983009808
      %v1151 = vunpack.c.0.s8 %v1150
      %v1152 = vlaneseq
      %v1153 = vshrl.u32 %v1152, 7
      %v1154 = vsub.s32 %v1151, %v1153
      %v1155 = vrot.slane %v1147, %v1154
      %v1157 = vunpack.c.l.s4 1983009808
      %v1158 = vunpack.c.0.s8 %v1157
      %v1159 = vlaneseq
      %v1160 = vshrl.u32 %v1159, 7
      %v1161 = vsub.s32 %v1158, %v1160
      %v1162 = vrot.slane %v1148, %v1161
      %v1163 = vcombine.low %v1155, %v1162
      %v1164 = vcombine.low %v763, %v771
      %v1165 = vcombine.low %v779, %v778
      %v1167 = vunpack.c.l.s4 1983009808
      %v1168 = vunpack.c.0.s8 %v1167
      %v1169 = vlaneseq
      %v1170 = vshrl.u32 %v1169, 7
      %v1171 = vsub.s32 %v1168, %v1170
      %v1172 = vrot.slane %v1164, %v1171
      %v1174 = vunpack.c.l.s4 1983009808
      %v1175 = vunpack.c.0.s8 %v1174
      %v1176 = vlaneseq
      %v1177 = vshrl.u32 %v1176, 7
      %v1178 = vsub.s32 %v1175, %v1177
      %v1179 = vrot.slane %v1165, %v1178
      %v1180 = vcombine.low %v1172, %v1179
      %v1181 = vcombine.low %v780, %v787
      %v1182 = vcombine.low %v795, %v803
      %v1184 = vunpack.c.l.s4 1983009808
      %v1185 = vunpack.c.0.s8 %v1184
      %v1186 = vlaneseq
      %v1187 = vshrl.u32 %v1186, 7
      %v1188 = vsub.s32 %v1185, %v1187
      %v1189 = vrot.slane %v1181, %v1188
      %v1191 = vunpack.c.l.s4 1983009808
      %v1192 = vunpack.c.0.s8 %v1191
      %v1193 = vlaneseq
      %v1194 = vshrl.u32 %v1193, 7
      %v1195 = vsub.s32 %v1192, %v1194
      %v1196 = vrot.slane %v1182, %v1195
      %v1197 = vcombine.low %v1189, %v1196
      %v1198 = vcombine.low %v802, %v804
      %v1199 = vcombine.low %v812, %v820
      %v1201 = vunpack.c.l.s4 1983009808
      %v1202 = vunpack.c.0.s8 %v1201
      %v1203 = vlaneseq
      %v1204 = vshrl.u32 %v1203, 7
      %v1205 = vsub.s32 %v1202, %v1204
      %v1206 = vrot.slane %v1198, %v1205
      %v1208 = vunpack.c.l.s4 1983009808
      %v1209 = vunpack.c.0.s8 %v1208
      %v1210 = vlaneseq
      %v1211 = vshrl.u32 %v1210, 7
      %v1212 = vsub.s32 %v1209, %v1211
      %v1213 = vrot.slane %v1199, %v1212
      %v1214 = vcombine.low %v1206, %v1213
      %v1215 = vcombine.low %v819, %v821
      %v1216 = vcombine.low %v828, %v836
      %v1218 = vunpack.c.l.s4 1983009808
      %v1219 = vunpack.c.0.s8 %v1218
      %v1220 = vlaneseq
      %v1221 = vshrl.u32 %v1220, 7
      %v1222 = vsub.s32 %v1219, %v1221
      %v1223 = vrot.slane %v1215, %v1222
      %v1225 = vunpack.c.l.s4 1983009808
      %v1226 = vunpack.c.0.s8 %v1225
      %v1227 = vlaneseq
      %v1228 = vshrl.u32 %v1227, 7
      %v1229 = vsub.s32 %v1226, %v1228
      %v1230 = vrot.slane %v1216, %v1229
      %v1231 = vcombine.low %v1223, %v1230
      %v1232 = vcombine.low %v844, %v843
      %v1233 = vcombine.low %v845, %v853
      %v1235 = vunpack.c.l.s4 1983009808
      %v1236 = vunpack.c.0.s8 %v1235
      %v1237 = vlaneseq
      %v1238 = vshrl.u32 %v1237, 7
      %v1239 = vsub.s32 %v1236, %v1238
      %v1240 = vrot.slane %v1232, %v1239
      %v1242 = vunpack.c.l.s4 1983009808
      %v1243 = vunpack.c.0.s8 %v1242
      %v1244 = vlaneseq
      %v1245 = vshrl.u32 %v1244, 7
      %v1246 = vsub.s32 %v1243, %v1245
      %v1247 = vrot.slane %v1233, %v1246
      %v1248 = vcombine.low %v1240, %v1247
      %v1249 = vcombine.low %v861, %v860
      %v1250 = vcombine.low %v862, %v869
      %v1252 = vunpack.c.l.s4 1983009808
      %v1253 = vunpack.c.0.s8 %v1252
      %v1254 = vlaneseq
      %v1255 = vshrl.u32 %v1254, 7
      %v1256 = vsub.s32 %v1253, %v1255
      %v1257 = vrot.slane %v1249, %v1256
      %v1259 = vunpack.c.l.s4 1983009808
      %v1260 = vunpack.c.0.s8 %v1259
      %v1261 = vlaneseq
      %v1262 = vshrl.u32 %v1261, 7
      %v1263 = vsub.s32 %v1260, %v1262
      %v1264 = vrot.slane %v1250, %v1263
      %v1265 = vcombine.low %v1257, %v1264
      %v1266 = vcombine.low %v877, %v885
      %v1267 = vcombine.low %v884, %v886
      %v1269 = vunpack.c.l.s4 1983009808
      %v1270 = vunpack.c.0.s8 %v1269
      %v1271 = vlaneseq
      %v1272 = vshrl.u32 %v1271, 7
      %v1273 = vsub.s32 %v1270, %v1272
      %v1274 = vrot.slane %v1266, %v1273
      %v1276 = vunpack.c.l.s4 1983009808
      %v1277 = vunpack.c.0.s8 %v1276
      %v1278 = vlaneseq
      %v1279 = vshrl.u32 %v1278, 7
      %v1280 = vsub.s32 %v1277, %v1279
      %v1281 = vrot.slane %v1267, %v1280
      %v1282 = vcombine.low %v1274, %v1281
      %v1283 = vcombine.low %v894, %v902
      %v1284 = vcombine.low %v901, %v903
      %v1286 = vunpack.c.l.s4 1983009808
      %v1287 = vunpack.c.0.s8 %v1286
      %v1288 = vlaneseq
      %v1289 = vshrl.u32 %v1288, 7
      %v1290 = vsub.s32 %v1287, %v1289
      %v1291 = vrot.slane %v1283, %v1290
      %v1293 = vunpack.c.l.s4 1983009808
      %v1294 = vunpack.c.0.s8 %v1293
      %v1295 = vlaneseq
      %v1296 = vshrl.u32 %v1295, 7
      %v1297 = vsub.s32 %v1294, %v1296
      %v1298 = vrot.slane %v1284, %v1297
      %v1299 = vcombine.low %v1291, %v1298
      %v1300 = vcombine.low %v910, %v918
      %v1301 = vcombine.low %v926, %v925
      %v1303 = vunpack.c.l.s4 1983009808
      %v1304 = vunpack.c.0.s8 %v1303
      %v1305 = vlaneseq
      %v1306 = vshrl.u32 %v1305, 7
      %v1307 = vsub.s32 %v1304, %v1306
      %v1308 = vrot.slane %v1300, %v1307
      %v1310 = vunpack.c.l.s4 1983009808
      %v1311 = vunpack.c.0.s8 %v1310
      %v1312 = vlaneseq
      %v1313 = vshrl.u32 %v1312, 7
      %v1314 = vsub.s32 %v1311, %v1313
      %v1315 = vrot.slane %v1301, %v1314
      %v1316 = vcombine.low %v1308, %v1315
      %v1317 = vcombine.low %v927, %v935
      %v1318 = vcombine.low %v943, %v942
      %v1320 = vunpack.c.l.s4 1983009808
      %v1321 = vunpack.c.0.s8 %v1320
      %v1322 = vlaneseq
      %v1323 = vshrl.u32 %v1322, 7
      %v1324 = vsub.s32 %v1321, %v1323
      %v1325 = vrot.slane %v1317, %v1324
      %v1327 = vunpack.c.l.s4 1983009808
      %v1328 = vunpack.c.0.s8 %v1327
      %v1329 = vlaneseq
      %v1330 = vshrl.u32 %v1329, 7
      %v1331 = vsub.s32 %v1328, %v1330
      %v1332 = vrot.slane %v1318, %v1331
      %v1333 = vcombine.low %v1325, %v1332
      %v1334 = vcombine.low %v944, %v951
      %v1336 = vunpack.c.l.s4 1983009808
      %v1337 = vunpack.c.0.s8 %v1336
      %v1338 = vlaneseq
      %v1339 = vshrl.u32 %v1338, 7
      %v1340 = vsub.s32 %v1337, %v1339
      %v1341 = vrot.slane %v1334, %v1340
      %vm1342 = vcmask 31744
      %v1343 = vsel %vm1342, %v976, 0
      %v1345 = vsel %vm1342, %v993, 0
      %v1347 = vsel %vm1342, %v1010, 0
      %v1349 = vsel %vm1342, %v1027, 0
      %v1351 = vsel %vm1342, %v1044, 0
      %v1353 = vsel %vm1342, %v1061, 0
      %v1355 = vsel %vm1342, %v1078, 0
      %v1357 = vsel %vm1342, %v1095, 0
      %v1359 = vsel %vm1342, %v1112, 0
      %v1361 = vsel %vm1342, %v1129, 0
      %v1363 = vsel %vm1342, %v1146, 0
      %v1365 = vsel %vm1342, %v1163, 0
      %v1367 = vsel %vm1342, %v1180, 0
      %v1369 = vsel %vm1342, %v1197, 0
      %v1371 = vsel %vm1342, %v1214, 0
      %v1373 = vsel %vm1342, %v1231, 0
      %v1375 = vsel %vm1342, %v1248, 0
      %v1377 = vsel %vm1342, %v1265, 0
      %v1379 = vsel %vm1342, %v1282, 0
      %v1381 = vsel %vm1342, %v1299, 0
      %v1383 = vsel %vm1342, %v1316, 0
      %v1385 = vsel %vm1342, %v1333, 0
      %v1387 = vsel %vm1342, %v1341, 0
      %vm1389 = vcmask 1043456
      %v1391 = vsel %vm1389, %v952, 0
      %1393 = vmatprep.subr.mxu0 0.0
      %1394 = vmatpush1.msra.mxu0 %v1391
      %1395 = vmatprep.subr.mxu0 0.0
      %1396 = vmatpush1.msra.mxu0 0.0
      %1397 = vmatprep.subr.mxu0 0.0
      %1398 = vmatpush1.msra.mxu0 0.0
      %1399 = vmatprep.subr.mxu0 0.0
      %1400 = vmatpush1.msra.mxu0 0.0
      %1401 = vmatprep.subr.mxu0 0.0
      %1402 = vmatpush1.msra.mxu0 0.0
      %1403 = vmatprep.subr.mxu0 0.0
      %1404 = vmatpush1.msra.mxu0 0.0
      %1405 = vmatprep.subr.mxu0 0.0
      %1406 = vmatpush1.msra.mxu0 0.0
      %1407 = vmatprep.subr.mxu0 0.0
      %1408 = vmatpush1.msra.mxu0 0.0
      %1409 = vmatprep.subr.mxu0 0.0
      %1410 = vmatpush1.msra.mxu0 0.0
      %1411 = vmatprep.subr.mxu0 0.0
      %1412 = vmatpush1.msra.mxu0 0.0
      %1413 = vmatprep.subr.mxu0 0.0
      %1414 = vmatpush1.msra.mxu0 0.0
      %1415 = vmatprep.subr.mxu0 0.0
      %1416 = vmatpush1.msra.mxu0 0.0
      %1417 = vmatprep.subr.mxu0 0.0
      %1418 = vmatpush1.msra.mxu0 0.0
      %1419 = vmatprep.subr.mxu0 0.0
      %1420 = vmatpush1.msra.mxu0 0.0
      %1421 = vmatprep.subr.mxu0 0.0
      %1422 = vmatpush1.msra.mxu0 0.0
      %1423 = vmatprep.subr.mxu0 0.0
      %1424 = vmatpush1.msra.mxu0 0.0
      %1425 = vmatprep.subr.mxu0 0.0
      %1426 = vmatpush1.msra.mxu0 0.0
      %1427 = vmatprep.subr.mxu0 0.0
      %1428 = vmatpush1.msra.mxu0 0.0
      %1429 = vmatprep.subr.mxu0 0.0
      %1430 = vmatpush1.msra.mxu0 0.0
      %1431 = vmatprep.subr.mxu0 0.0
      %1432 = vmatpush1.msra.mxu0 0.0
      %1433 = vmatprep.subr.mxu0 0.0
      %1434 = vmatpush1.msra.mxu0 0.0
      %1435 = vmatprep.subr.mxu0 0.0
      %1436 = vmatpush1.msra.mxu0 0.0
      %1437 = vmatprep.subr.mxu0 0.0
      %1438 = vmatpush1.msra.mxu0 0.0
      %1439 = vmatprep.subr.mxu0 0.0
      %1440 = vmatpush1.msra.mxu0 0.0
      %1441 = vmatprep.subr.mxu0 0.0
      %1442 = vmatpush1.msra.mxu0 0.0
      %1443 = vmatprep.subr.mxu0 0.0
      %1444 = vmatpush1.msra.mxu0 0.0
      %1445 = vmatprep.subr.mxu0 0.0
      %1446 = vmatpush1.msra.mxu0 0.0
      %1447 = vmatprep.subr.mxu0 0.0
      %1448 = vmatpush1.msra.mxu0 0.0
      %1449 = vmatprep.subr.mxu0 0.0
      %1450 = vmatpush1.msra.mxu0 0.0
      %1451 = vmatprep.subr.mxu0 0.0
      %1452 = vmatpush1.msra.mxu0 0.0
      %1453 = vmatprep.subr.mxu0 0.0
      %1454 = vmatpush1.msra.mxu0 0.0
      %1455 = vmatprep.subr.mxu0 0.0
      %1456 = vmatpush1.msra.mxu0 0.0
      %1457 = vmatprep.mubr.f32.mxu0 0.0
      %1458 = vmatmul.mubr.f32.gmra.mrb[0].mxu0 %v1343
      %v1459 = vpop.f32.mrb[0].mxu0
      %v1460 = vadd.f32 %v958, %v1459
      %v1461 = vpop.f32.mrb[0].mxu0
      %1462 = vmatprep.mubr.f32.mxu0 0.0
      %1463 = vmatmul.mubr.f32.gmra.mrb[0].mxu0 %v1345
      %v1464 = vpop.f32.mrb[0].mxu0
      %v1465 = vadd.f32 %v958, %v1464
      %v1466 = vpop.f32.mrb[0].mxu0
      %1467 = vmatprep.mubr.f32.mxu0 0.0
      %1468 = vmatmul.mubr.f32.gmra.mrb[0].mxu0 %v1347
      %v1469 = vpop.f32.mrb[0].mxu0
      %v1470 = vadd.f32 %v958, %v1469
      %v1471 = vpop.f32.mrb[0].mxu0
      %1472 = vmatprep.mubr.f32.mxu0 0.0
      %1473 = vmatmul.mubr.f32.gmra.mrb[0].mxu0 %v1349
      %v1474 = vpop.f32.mrb[0].mxu0
      %v1475 = vadd.f32 %v958, %v1474
      %v1476 = vpop.f32.mrb[0].mxu0
      %1477 = vmatprep.mubr.f32.mxu0 0.0
      %1478 = vmatmul.mubr.f32.gmra.mrb[0].mxu0 %v1351
      %v1479 = vpop.f32.mrb[0].mxu0
      %v1480 = vadd.f32 %v958, %v1479
      %v1481 = vpop.f32.mrb[0].mxu0
      %1482 = vmatprep.mubr.f32.mxu0 0.0
      %1483 = vmatmul.mubr.f32.gmra.mrb[0].mxu0 %v1353
      %v1484 = vpop.f32.mrb[0].mxu0
      %v1485 = vadd.f32 %v958, %v1484
      %v1486 = vpop.f32.mrb[0].mxu0
      %1487 = vmatprep.mubr.f32.mxu0 0.0
      %1488 = vmatmul.mubr.f32.gmra.mrb[0].mxu0 %v1355
      %v1489 = vpop.f32.mrb[0].mxu0
      %v1490 = vadd.f32 %v958, %v1489
      %v1491 = vpop.f32.mrb[0].mxu0
      %1492 = vmatprep.mubr.f32.mxu0 0.0
      %1493 = vmatmul.mubr.f32.gmra.mrb[0].mxu0 %v1357
      %v1494 = vpop.f32.mrb[0].mxu0
      %v1495 = vadd.f32 %v958, %v1494
      %v1496 = vpop.f32.mrb[0].mxu0
      %1497 = vmatprep.mubr.f32.mxu0 0.0
      %1498 = vmatmul.mubr.f32.gmra.mrb[0].mxu0 %v1359
      %v1499 = vpop.f32.mrb[0].mxu0
      %v1500 = vadd.f32 %v958, %v1499
      %v1501 = vpop.f32.mrb[0].mxu0
      %1502 = vmatprep.mubr.f32.mxu0 0.0
      %1503 = vmatmul.mubr.f32.gmra.mrb[0].mxu0 %v1361
      %v1504 = vpop.f32.mrb[0].mxu0
      %v1505 = vadd.f32 %v958, %v1504
      %v1506 = vpop.f32.mrb[0].mxu0
      %1507 = vmatprep.mubr.f32.mxu0 0.0
      %1508 = vmatmul.mubr.f32.gmra.mrb[0].mxu0 %v1363
      %v1509 = vpop.f32.mrb[0].mxu0
      %v1510 = vadd.f32 %v958, %v1509
      %v1511 = vpop.f32.mrb[0].mxu0
      %1512 = vmatprep.mubr.f32.mxu0 0.0
      %1513 = vmatmul.mubr.f32.gmra.mrb[0].mxu0 %v1365
      %v1514 = vpop.f32.mrb[0].mxu0
      %v1515 = vadd.f32 %v958, %v1514
      %v1516 = vpop.f32.mrb[0].mxu0
      %1517 = vmatprep.mubr.f32.mxu0 0.0
      %1518 = vmatmul.mubr.f32.gmra.mrb[0].mxu0 %v1367
      %v1519 = vpop.f32.mrb[0].mxu0
      %v1520 = vadd.f32 %v958, %v1519
      %v1521 = vpop.f32.mrb[0].mxu0
      %1522 = vmatprep.mubr.f32.mxu0 0.0
      %1523 = vmatmul.mubr.f32.gmra.mrb[0].mxu0 %v1369
      %v1524 = vpop.f32.mrb[0].mxu0
      %v1525 = vadd.f32 %v958, %v1524
      %v1526 = vpop.f32.mrb[0].mxu0
      %1527 = vmatprep.mubr.f32.mxu0 0.0
      %1528 = vmatmul.mubr.f32.gmra.mrb[0].mxu0 %v1371
      %v1529 = vpop.f32.mrb[0].mxu0
      %v1530 = vadd.f32 %v958, %v1529
      %v1531 = vpop.f32.mrb[0].mxu0
      %1532 = vmatprep.mubr.f32.mxu0 0.0
      %1533 = vmatmul.mubr.f32.gmra.mrb[0].mxu0 %v1373
      %v1534 = vpop.f32.mrb[0].mxu0
      %v1535 = vadd.f32 %v958, %v1534
      %v1536 = vpop.f32.mrb[0].mxu0
      %1537 = vmatprep.mubr.f32.mxu0 0.0
      %1538 = vmatmul.mubr.f32.gmra.mrb[0].mxu0 %v1375
      %v1539 = vpop.f32.mrb[0].mxu0
      %v1540 = vadd.f32 %v958, %v1539
      %v1541 = vpop.f32.mrb[0].mxu0
      %1542 = vmatprep.mubr.f32.mxu0 0.0
      %1543 = vmatmul.mubr.f32.gmra.mrb[0].mxu0 %v1377
      %v1544 = vpop.f32.mrb[0].mxu0
      %v1545 = vadd.f32 %v958, %v1544
      %v1546 = vpop.f32.mrb[0].mxu0
      %1547 = vmatprep.mubr.f32.mxu0 0.0
      %1548 = vmatmul.mubr.f32.gmra.mrb[0].mxu0 %v1379
      %v1549 = vpop.f32.mrb[0].mxu0
      %v1550 = vadd.f32 %v958, %v1549
      %v1551 = vpop.f32.mrb[0].mxu0
      %1552 = vmatprep.mubr.f32.mxu0 0.0
      %1553 = vmatmul.mubr.f32.gmra.mrb[0].mxu0 %v1381
      %v1554 = vpop.f32.mrb[0].mxu0
      %v1555 = vadd.f32 %v958, %v1554
      %v1556 = vpop.f32.mrb[0].mxu0
      %1557 = vmatprep.mubr.f32.mxu0 0.0
      %1558 = vmatmul.mubr.f32.gmra.mrb[0].mxu0 %v1383
      %v1559 = vpop.f32.mrb[0].mxu0
      %v1560 = vadd.f32 %v958, %v1559
      %v1561 = vpop.f32.mrb[0].mxu0
      %1562 = vmatprep.mubr.f32.mxu0 0.0
      %1563 = vmatmul.mubr.f32.gmra.mrb[0].mxu0 %v1385
      %v1564 = vpop.f32.mrb[0].mxu0
      %v1565 = vadd.f32 %v958, %v1564
      %v1566 = vpop.f32.mrb[0].mxu0
      %1567 = vmatprep.mubr.f32.mxu0 0.0
      %1568 = vmatmul.mubr.f32.gmra.mrb[0].mxu0 %v1387
      %v1569 = vpop.f32.mrb[0].mxu0
      %v1570 = vadd.f32 %v958, %v1569
      %v1571 = vpop.f32.mrb[0].mxu0
      %1572 = vdwg.mxu0
      %v1596 = vcombine.high %v1460, %v1460
      %v1598 = vunpack.c.l.s4 1983009808
      %v1599 = vunpack.c.0.s8 %v1598
      %v1600 = vlaneseq
      %v1601 = vshrl.u32 %v1600, 7
      %v1602 = vsub.s32 %v1599, %v1601
      %v1603 = vrot.slane %v1460, %v1602
      %v1605 = vunpack.c.l.s4 1983009808
      %v1606 = vunpack.c.0.s8 %v1605
      %v1607 = vlaneseq
      %v1608 = vshrl.u32 %v1607, 7
      %v1609 = vsub.s32 %v1606, %v1608
      %v1610 = vrot.slane %v1596, %v1609
      %v1611 = vcombine.high %v1603, %v1603
      %v1612 = vcombine.high %v1610, %v1610
      %v1613 = vcombine.high %v1465, %v1465
      %v1615 = vunpack.c.l.s4 1983009808
      %v1616 = vunpack.c.0.s8 %v1615
      %v1617 = vlaneseq
      %v1618 = vshrl.u32 %v1617, 7
      %v1619 = vsub.s32 %v1616, %v1618
      %v1620 = vrot.slane %v1465, %v1619
      %v1622 = vunpack.c.l.s4 1983009808
      %v1623 = vunpack.c.0.s8 %v1622
      %v1624 = vlaneseq
      %v1625 = vshrl.u32 %v1624, 7
      %v1626 = vsub.s32 %v1623, %v1625
      %v1627 = vrot.slane %v1613, %v1626
      %v1628 = vcombine.high %v1620, %v1620
      %v1629 = vcombine.high %v1627, %v1627
      %v1630 = vcombine.high %v1470, %v1470
      %v1632 = vunpack.c.l.s4 1983009808
      %v1633 = vunpack.c.0.s8 %v1632
      %v1634 = vlaneseq
      %v1635 = vshrl.u32 %v1634, 7
      %v1636 = vsub.s32 %v1633, %v1635
      %v1637 = vrot.slane %v1470, %v1636
      %v1639 = vunpack.c.l.s4 1983009808
      %v1640 = vunpack.c.0.s8 %v1639
      %v1641 = vlaneseq
      %v1642 = vshrl.u32 %v1641, 7
      %v1643 = vsub.s32 %v1640, %v1642
      %v1644 = vrot.slane %v1630, %v1643
      %v1645 = vcombine.high %v1637, %v1637
      %v1646 = vcombine.high %v1644, %v1644
      %v1647 = vcombine.high %v1475, %v1475
      %v1649 = vunpack.c.l.s4 1983009808
      %v1650 = vunpack.c.0.s8 %v1649
      %v1651 = vlaneseq
      %v1652 = vshrl.u32 %v1651, 7
      %v1653 = vsub.s32 %v1650, %v1652
      %v1654 = vrot.slane %v1475, %v1653
      %v1656 = vunpack.c.l.s4 1983009808
      %v1657 = vunpack.c.0.s8 %v1656
      %v1658 = vlaneseq
      %v1659 = vshrl.u32 %v1658, 7
      %v1660 = vsub.s32 %v1657, %v1659
      %v1661 = vrot.slane %v1647, %v1660
      %v1662 = vcombine.high %v1654, %v1654
      %v1663 = vcombine.high %v1661, %v1661
      %v1664 = vcombine.high %v1480, %v1480
      %v1666 = vunpack.c.l.s4 1983009808
      %v1667 = vunpack.c.0.s8 %v1666
      %v1668 = vlaneseq
      %v1669 = vshrl.u32 %v1668, 7
      %v1670 = vsub.s32 %v1667, %v1669
      %v1671 = vrot.slane %v1480, %v1670
      %v1673 = vunpack.c.l.s4 1983009808
      %v1674 = vunpack.c.0.s8 %v1673
      %v1675 = vlaneseq
      %v1676 = vshrl.u32 %v1675, 7
      %v1677 = vsub.s32 %v1674, %v1676
      %v1678 = vrot.slane %v1664, %v1677
      %v1679 = vcombine.high %v1671, %v1671
      %v1680 = vcombine.high %v1678, %v1678
      %v1681 = vcombine.high %v1485, %v1485
      %v1683 = vunpack.c.l.s4 1983009808
      %v1684 = vunpack.c.0.s8 %v1683
      %v1685 = vlaneseq
      %v1686 = vshrl.u32 %v1685, 7
      %v1687 = vsub.s32 %v1684, %v1686
      %v1688 = vrot.slane %v1485, %v1687
      %v1690 = vunpack.c.l.s4 1983009808
      %v1691 = vunpack.c.0.s8 %v1690
      %v1692 = vlaneseq
      %v1693 = vshrl.u32 %v1692, 7
      %v1694 = vsub.s32 %v1691, %v1693
      %v1695 = vrot.slane %v1681, %v1694
      %v1696 = vcombine.high %v1688, %v1688
      %v1697 = vcombine.high %v1695, %v1695
      %v1698 = vcombine.high %v1490, %v1490
      %v1700 = vunpack.c.l.s4 1983009808
      %v1701 = vunpack.c.0.s8 %v1700
      %v1702 = vlaneseq
      %v1703 = vshrl.u32 %v1702, 7
      %v1704 = vsub.s32 %v1701, %v1703
      %v1705 = vrot.slane %v1490, %v1704
      %v1707 = vunpack.c.l.s4 1983009808
      %v1708 = vunpack.c.0.s8 %v1707
      %v1709 = vlaneseq
      %v1710 = vshrl.u32 %v1709, 7
      %v1711 = vsub.s32 %v1708, %v1710
      %v1712 = vrot.slane %v1698, %v1711
      %v1713 = vcombine.high %v1705, %v1705
      %v1714 = vcombine.high %v1712, %v1712
      %v1715 = vcombine.high %v1495, %v1495
      %v1717 = vunpack.c.l.s4 1983009808
      %v1718 = vunpack.c.0.s8 %v1717
      %v1719 = vlaneseq
      %v1720 = vshrl.u32 %v1719, 7
      %v1721 = vsub.s32 %v1718, %v1720
      %v1722 = vrot.slane %v1495, %v1721
      %v1724 = vunpack.c.l.s4 1983009808
      %v1725 = vunpack.c.0.s8 %v1724
      %v1726 = vlaneseq
      %v1727 = vshrl.u32 %v1726, 7
      %v1728 = vsub.s32 %v1725, %v1727
      %v1729 = vrot.slane %v1715, %v1728
      %v1730 = vcombine.high %v1722, %v1722
      %v1731 = vcombine.high %v1729, %v1729
      %v1732 = vcombine.high %v1500, %v1500
      %v1734 = vunpack.c.l.s4 1983009808
      %v1735 = vunpack.c.0.s8 %v1734
      %v1736 = vlaneseq
      %v1737 = vshrl.u32 %v1736, 7
      %v1738 = vsub.s32 %v1735, %v1737
      %v1739 = vrot.slane %v1500, %v1738
      %v1741 = vunpack.c.l.s4 1983009808
      %v1742 = vunpack.c.0.s8 %v1741
      %v1743 = vlaneseq
      %v1744 = vshrl.u32 %v1743, 7
      %v1745 = vsub.s32 %v1742, %v1744
      %v1746 = vrot.slane %v1732, %v1745
      %v1747 = vcombine.high %v1739, %v1739
      %v1748 = vcombine.high %v1746, %v1746
      %v1749 = vcombine.high %v1505, %v1505
      %v1751 = vunpack.c.l.s4 1983009808
      %v1752 = vunpack.c.0.s8 %v1751
      %v1753 = vlaneseq
      %v1754 = vshrl.u32 %v1753, 7
      %v1755 = vsub.s32 %v1752, %v1754
      %v1756 = vrot.slane %v1505, %v1755
      %v1758 = vunpack.c.l.s4 1983009808
      %v1759 = vunpack.c.0.s8 %v1758
      %v1760 = vlaneseq
      %v1761 = vshrl.u32 %v1760, 7
      %v1762 = vsub.s32 %v1759, %v1761
      %v1763 = vrot.slane %v1749, %v1762
      %v1764 = vcombine.high %v1756, %v1756
      %v1765 = vcombine.high %v1763, %v1763
      %v1766 = vcombine.high %v1510, %v1510
      %v1768 = vunpack.c.l.s4 1983009808
      %v1769 = vunpack.c.0.s8 %v1768
      %v1770 = vlaneseq
      %v1771 = vshrl.u32 %v1770, 7
      %v1772 = vsub.s32 %v1769, %v1771
      %v1773 = vrot.slane %v1510, %v1772
      %v1775 = vunpack.c.l.s4 1983009808
      %v1776 = vunpack.c.0.s8 %v1775
      %v1777 = vlaneseq
      %v1778 = vshrl.u32 %v1777, 7
      %v1779 = vsub.s32 %v1776, %v1778
      %v1780 = vrot.slane %v1766, %v1779
      %v1781 = vcombine.high %v1773, %v1773
      %v1782 = vcombine.high %v1780, %v1780
      %v1783 = vcombine.high %v1515, %v1515
      %v1785 = vunpack.c.l.s4 1983009808
      %v1786 = vunpack.c.0.s8 %v1785
      %v1787 = vlaneseq
      %v1788 = vshrl.u32 %v1787, 7
      %v1789 = vsub.s32 %v1786, %v1788
      %v1790 = vrot.slane %v1515, %v1789
      %v1792 = vunpack.c.l.s4 1983009808
      %v1793 = vunpack.c.0.s8 %v1792
      %v1794 = vlaneseq
      %v1795 = vshrl.u32 %v1794, 7
      %v1796 = vsub.s32 %v1793, %v1795
      %v1797 = vrot.slane %v1783, %v1796
      %v1798 = vcombine.high %v1790, %v1790
      %v1799 = vcombine.high %v1797, %v1797
      %v1800 = vcombine.high %v1520, %v1520
      %v1802 = vunpack.c.l.s4 1983009808
      %v1803 = vunpack.c.0.s8 %v1802
      %v1804 = vlaneseq
      %v1805 = vshrl.u32 %v1804, 7
      %v1806 = vsub.s32 %v1803, %v1805
      %v1807 = vrot.slane %v1520, %v1806
      %v1809 = vunpack.c.l.s4 1983009808
      %v1810 = vunpack.c.0.s8 %v1809
      %v1811 = vlaneseq
      %v1812 = vshrl.u32 %v1811, 7
      %v1813 = vsub.s32 %v1810, %v1812
      %v1814 = vrot.slane %v1800, %v1813
      %v1815 = vcombine.high %v1807, %v1807
      %v1816 = vcombine.high %v1814, %v1814
      %v1817 = vcombine.high %v1525, %v1525
      %v1819 = vunpack.c.l.s4 1983009808
      %v1820 = vunpack.c.0.s8 %v1819
      %v1821 = vlaneseq
      %v1822 = vshrl.u32 %v1821, 7
      %v1823 = vsub.s32 %v1820, %v1822
      %v1824 = vrot.slane %v1525, %v1823
      %v1826 = vunpack.c.l.s4 1983009808
      %v1827 = vunpack.c.0.s8 %v1826
      %v1828 = vlaneseq
      %v1829 = vshrl.u32 %v1828, 7
      %v1830 = vsub.s32 %v1827, %v1829
      %v1831 = vrot.slane %v1817, %v1830
      %v1832 = vcombine.high %v1824, %v1824
      %v1833 = vcombine.high %v1831, %v1831
      %v1834 = vcombine.high %v1530, %v1530
      %v1836 = vunpack.c.l.s4 1983009808
      %v1837 = vunpack.c.0.s8 %v1836
      %v1838 = vlaneseq
      %v1839 = vshrl.u32 %v1838, 7
      %v1840 = vsub.s32 %v1837, %v1839
      %v1841 = vrot.slane %v1530, %v1840
      %v1843 = vunpack.c.l.s4 1983009808
      %v1844 = vunpack.c.0.s8 %v1843
      %v1845 = vlaneseq
      %v1846 = vshrl.u32 %v1845, 7
      %v1847 = vsub.s32 %v1844, %v1846
      %v1848 = vrot.slane %v1834, %v1847
      %v1849 = vcombine.high %v1841, %v1841
      %v1850 = vcombine.high %v1848, %v1848
      %v1851 = vcombine.high %v1535, %v1535
      %v1853 = vunpack.c.l.s4 1983009808
      %v1854 = vunpack.c.0.s8 %v1853
      %v1855 = vlaneseq
      %v1856 = vshrl.u32 %v1855, 7
      %v1857 = vsub.s32 %v1854, %v1856
      %v1858 = vrot.slane %v1535, %v1857
      %v1860 = vunpack.c.l.s4 1983009808
      %v1861 = vunpack.c.0.s8 %v1860
      %v1862 = vlaneseq
      %v1863 = vshrl.u32 %v1862, 7
      %v1864 = vsub.s32 %v1861, %v1863
      %v1865 = vrot.slane %v1851, %v1864
      %v1866 = vcombine.high %v1858, %v1858
      %v1867 = vcombine.high %v1865, %v1865
      %v1868 = vcombine.high %v1540, %v1540
      %v1870 = vunpack.c.l.s4 1983009808
      %v1871 = vunpack.c.0.s8 %v1870
      %v1872 = vlaneseq
      %v1873 = vshrl.u32 %v1872, 7
      %v1874 = vsub.s32 %v1871, %v1873
      %v1875 = vrot.slane %v1540, %v1874
      %v1877 = vunpack.c.l.s4 1983009808
      %v1878 = vunpack.c.0.s8 %v1877
      %v1879 = vlaneseq
      %v1880 = vshrl.u32 %v1879, 7
      %v1881 = vsub.s32 %v1878, %v1880
      %v1882 = vrot.slane %v1868, %v1881
      %v1883 = vcombine.high %v1875, %v1875
      %v1884 = vcombine.high %v1882, %v1882
      %v1885 = vcombine.high %v1545, %v1545
      %v1887 = vunpack.c.l.s4 1983009808
      %v1888 = vunpack.c.0.s8 %v1887
      %v1889 = vlaneseq
      %v1890 = vshrl.u32 %v1889, 7
      %v1891 = vsub.s32 %v1888, %v1890
      %v1892 = vrot.slane %v1545, %v1891
      %v1894 = vunpack.c.l.s4 1983009808
      %v1895 = vunpack.c.0.s8 %v1894
      %v1896 = vlaneseq
      %v1897 = vshrl.u32 %v1896, 7
      %v1898 = vsub.s32 %v1895, %v1897
      %v1899 = vrot.slane %v1885, %v1898
      %v1900 = vcombine.high %v1892, %v1892
      %v1901 = vcombine.high %v1899, %v1899
      %v1902 = vcombine.high %v1550, %v1550
      %v1904 = vunpack.c.l.s4 1983009808
      %v1905 = vunpack.c.0.s8 %v1904
      %v1906 = vlaneseq
      %v1907 = vshrl.u32 %v1906, 7
      %v1908 = vsub.s32 %v1905, %v1907
      %v1909 = vrot.slane %v1550, %v1908
      %v1911 = vunpack.c.l.s4 1983009808
      %v1912 = vunpack.c.0.s8 %v1911
      %v1913 = vlaneseq
      %v1914 = vshrl.u32 %v1913, 7
      %v1915 = vsub.s32 %v1912, %v1914
      %v1916 = vrot.slane %v1902, %v1915
      %v1917 = vcombine.high %v1909, %v1909
      %v1918 = vcombine.high %v1916, %v1916
      %v1919 = vcombine.high %v1555, %v1555
      %v1921 = vunpack.c.l.s4 1983009808
      %v1922 = vunpack.c.0.s8 %v1921
      %v1923 = vlaneseq
      %v1924 = vshrl.u32 %v1923, 7
      %v1925 = vsub.s32 %v1922, %v1924
      %v1926 = vrot.slane %v1555, %v1925
      %v1928 = vunpack.c.l.s4 1983009808
      %v1929 = vunpack.c.0.s8 %v1928
      %v1930 = vlaneseq
      %v1931 = vshrl.u32 %v1930, 7
      %v1932 = vsub.s32 %v1929, %v1931
      %v1933 = vrot.slane %v1919, %v1932
      %v1934 = vcombine.high %v1926, %v1926
      %v1935 = vcombine.high %v1933, %v1933
      %v1936 = vcombine.high %v1560, %v1560
      %v1938 = vunpack.c.l.s4 1983009808
      %v1939 = vunpack.c.0.s8 %v1938
      %v1940 = vlaneseq
      %v1941 = vshrl.u32 %v1940, 7
      %v1942 = vsub.s32 %v1939, %v1941
      %v1943 = vrot.slane %v1560, %v1942
      %v1945 = vunpack.c.l.s4 1983009808
      %v1946 = vunpack.c.0.s8 %v1945
      %v1947 = vlaneseq
      %v1948 = vshrl.u32 %v1947, 7
      %v1949 = vsub.s32 %v1946, %v1948
      %v1950 = vrot.slane %v1936, %v1949
      %v1951 = vcombine.high %v1943, %v1943
      %v1952 = vcombine.high %v1950, %v1950
      %v1953 = vcombine.high %v1565, %v1565
      %v1955 = vunpack.c.l.s4 1983009808
      %v1956 = vunpack.c.0.s8 %v1955
      %v1957 = vlaneseq
      %v1958 = vshrl.u32 %v1957, 7
      %v1959 = vsub.s32 %v1956, %v1958
      %v1960 = vrot.slane %v1565, %v1959
      %v1962 = vunpack.c.l.s4 1983009808
      %v1963 = vunpack.c.0.s8 %v1962
      %v1964 = vlaneseq
      %v1965 = vshrl.u32 %v1964, 7
      %v1966 = vsub.s32 %v1963, %v1965
      %v1967 = vrot.slane %v1953, %v1966
      %v1968 = vcombine.high %v1960, %v1960
      %v1969 = vcombine.high %v1967, %v1967
      %v1971 = vunpack.c.l.s4 1983009808
      %v1972 = vunpack.c.0.s8 %v1971
      %v1973 = vlaneseq
      %v1974 = vshrl.u32 %v1973, 7
      %v1975 = vsub.s32 %v1972, %v1974
      %v1976 = vrot.slane %v1570, %v1975
      %v1977 = vcombine.high %v1976, %v1976
      %v1978 = vcombine.low %v1603, %v1611
      %v1979 = vcombine.low %v1610, %v1612
      %v1981 = vunpack.c.l.s4 1983009808
      %v1982 = vunpack.c.0.s8 %v1981
      %v1983 = vlaneseq
      %v1984 = vshrl.u32 %v1983, 7
      %v1985 = vsub.s32 %v1982, %v1984
      %v1986 = vrot.slane %v1978, %v1985
      %v1988 = vunpack.c.l.s4 1983009808
      %v1989 = vunpack.c.0.s8 %v1988
      %v1990 = vlaneseq
      %v1991 = vshrl.u32 %v1990, 7
      %v1992 = vsub.s32 %v1989, %v1991
      %v1993 = vrot.slane %v1979, %v1992
      %v1994 = vcombine.low %v1986, %v1993
      %v1995 = vcombine.low %v1620, %v1628
      %v1996 = vcombine.low %v1627, %v1629
      %v1998 = vunpack.c.l.s4 1983009808
      %v1999 = vunpack.c.0.s8 %v1998
      %v2000 = vlaneseq
      %v2001 = vshrl.u32 %v2000, 7
      %v2002 = vsub.s32 %v1999, %v2001
      %v2003 = vrot.slane %v1995, %v2002
      %v2005 = vunpack.c.l.s4 1983009808
      %v2006 = vunpack.c.0.s8 %v2005
      %v2007 = vlaneseq
      %v2008 = vshrl.u32 %v2007, 7
      %v2009 = vsub.s32 %v2006, %v2008
      %v2010 = vrot.slane %v1996, %v2009
      %v2011 = vcombine.low %v2003, %v2010
      %v2012 = vcombine.low %v1645, %v1644
      %v2013 = vcombine.low %v1646, %v1654
      %v2015 = vunpack.c.l.s4 1983009808
      %v2016 = vunpack.c.0.s8 %v2015
      %v2017 = vlaneseq
      %v2018 = vshrl.u32 %v2017, 7
      %v2019 = vsub.s32 %v2016, %v2018
      %v2020 = vrot.slane %v2012, %v2019
      %v2022 = vunpack.c.l.s4 1983009808
      %v2023 = vunpack.c.0.s8 %v2022
      %v2024 = vlaneseq
      %v2025 = vshrl.u32 %v2024, 7
      %v2026 = vsub.s32 %v2023, %v2025
      %v2027 = vrot.slane %v2013, %v2026
      %v2028 = vcombine.low %v2020, %v2027
      %v2029 = vcombine.low %v1662, %v1661
      %v2030 = vcombine.low %v1663, %v1671
      %v2032 = vunpack.c.l.s4 1983009808
      %v2033 = vunpack.c.0.s8 %v2032
      %v2034 = vlaneseq
      %v2035 = vshrl.u32 %v2034, 7
      %v2036 = vsub.s32 %v2033, %v2035
      %v2037 = vrot.slane %v2029, %v2036
      %v2039 = vunpack.c.l.s4 1983009808
      %v2040 = vunpack.c.0.s8 %v2039
      %v2041 = vlaneseq
      %v2042 = vshrl.u32 %v2041, 7
      %v2043 = vsub.s32 %v2040, %v2042
      %v2044 = vrot.slane %v2030, %v2043
      %v2045 = vcombine.low %v2037, %v2044
      %v2046 = vcombine.low %v1678, %v1680
      %v2047 = vcombine.low %v1688, %v1696
      %v2049 = vunpack.c.l.s4 1983009808
      %v2050 = vunpack.c.0.s8 %v2049
      %v2051 = vlaneseq
      %v2052 = vshrl.u32 %v2051, 7
      %v2053 = vsub.s32 %v2050, %v2052
      %v2054 = vrot.slane %v2046, %v2053
      %v2056 = vunpack.c.l.s4 1983009808
      %v2057 = vunpack.c.0.s8 %v2056
      %v2058 = vlaneseq
      %v2059 = vshrl.u32 %v2058, 7
      %v2060 = vsub.s32 %v2057, %v2059
      %v2061 = vrot.slane %v2047, %v2060
      %v2062 = vcombine.low %v2054, %v2061
      %v2063 = vcombine.low %v1695, %v1697
      %v2064 = vcombine.low %v1705, %v1713
      %v2066 = vunpack.c.l.s4 1983009808
      %v2067 = vunpack.c.0.s8 %v2066
      %v2068 = vlaneseq
      %v2069 = vshrl.u32 %v2068, 7
      %v2070 = vsub.s32 %v2067, %v2069
      %v2071 = vrot.slane %v2063, %v2070
      %v2073 = vunpack.c.l.s4 1983009808
      %v2074 = vunpack.c.0.s8 %v2073
      %v2075 = vlaneseq
      %v2076 = vshrl.u32 %v2075, 7
      %v2077 = vsub.s32 %v2074, %v2076
      %v2078 = vrot.slane %v2064, %v2077
      %v2079 = vcombine.low %v2071, %v2078
      %v2080 = vcombine.low %v1714, %v1722
      %v2081 = vcombine.low %v1730, %v1729
      %v2083 = vunpack.c.l.s4 1983009808
      %v2084 = vunpack.c.0.s8 %v2083
      %v2085 = vlaneseq
      %v2086 = vshrl.u32 %v2085, 7
      %v2087 = vsub.s32 %v2084, %v2086
      %v2088 = vrot.slane %v2080, %v2087
      %v2090 = vunpack.c.l.s4 1983009808
      %v2091 = vunpack.c.0.s8 %v2090
      %v2092 = vlaneseq
      %v2093 = vshrl.u32 %v2092, 7
      %v2094 = vsub.s32 %v2091, %v2093
      %v2095 = vrot.slane %v2081, %v2094
      %v2096 = vcombine.low %v2088, %v2095
      %v2097 = vcombine.low %v1731, %v1739
      %v2098 = vcombine.low %v1747, %v1746
      %v2100 = vunpack.c.l.s4 1983009808
      %v2101 = vunpack.c.0.s8 %v2100
      %v2102 = vlaneseq
      %v2103 = vshrl.u32 %v2102, 7
      %v2104 = vsub.s32 %v2101, %v2103
      %v2105 = vrot.slane %v2097, %v2104
      %v2107 = vunpack.c.l.s4 1983009808
      %v2108 = vunpack.c.0.s8 %v2107
      %v2109 = vlaneseq
      %v2110 = vshrl.u32 %v2109, 7
      %v2111 = vsub.s32 %v2108, %v2110
      %v2112 = vrot.slane %v2098, %v2111
      %v2113 = vcombine.low %v2105, %v2112
      %v2114 = vcombine.low %v1756, %v1764
      %v2115 = vcombine.low %v1763, %v1765
      %v2117 = vunpack.c.l.s4 1983009808
      %v2118 = vunpack.c.0.s8 %v2117
      %v2119 = vlaneseq
      %v2120 = vshrl.u32 %v2119, 7
      %v2121 = vsub.s32 %v2118, %v2120
      %v2122 = vrot.slane %v2114, %v2121
      %v2124 = vunpack.c.l.s4 1983009808
      %v2125 = vunpack.c.0.s8 %v2124
      %v2126 = vlaneseq
      %v2127 = vshrl.u32 %v2126, 7
      %v2128 = vsub.s32 %v2125, %v2127
      %v2129 = vrot.slane %v2115, %v2128
      %v2130 = vcombine.low %v2122, %v2129
      %v2131 = vcombine.low %v1773, %v1781
      %v2132 = vcombine.low %v1780, %v1782
      %v2134 = vunpack.c.l.s4 1983009808
      %v2135 = vunpack.c.0.s8 %v2134
      %v2136 = vlaneseq
      %v2137 = vshrl.u32 %v2136, 7
      %v2138 = vsub.s32 %v2135, %v2137
      %v2139 = vrot.slane %v2131, %v2138
      %v2141 = vunpack.c.l.s4 1983009808
      %v2142 = vunpack.c.0.s8 %v2141
      %v2143 = vlaneseq
      %v2144 = vshrl.u32 %v2143, 7
      %v2145 = vsub.s32 %v2142, %v2144
      %v2146 = vrot.slane %v2132, %v2145
      %v2147 = vcombine.low %v2139, %v2146
      %v2148 = vcombine.low %v1798, %v1797
      %v2149 = vcombine.low %v1799, %v1807
      %v2151 = vunpack.c.l.s4 1983009808
      %v2152 = vunpack.c.0.s8 %v2151
      %v2153 = vlaneseq
      %v2154 = vshrl.u32 %v2153, 7
      %v2155 = vsub.s32 %v2152, %v2154
      %v2156 = vrot.slane %v2148, %v2155
      %v2158 = vunpack.c.l.s4 1983009808
      %v2159 = vunpack.c.0.s8 %v2158
      %v2160 = vlaneseq
      %v2161 = vshrl.u32 %v2160, 7
      %v2162 = vsub.s32 %v2159, %v2161
      %v2163 = vrot.slane %v2149, %v2162
      %v2164 = vcombine.low %v2156, %v2163
      %v2165 = vcombine.low %v1815, %v1814
      %v2166 = vcombine.low %v1816, %v1824
      %v2168 = vunpack.c.l.s4 1983009808
      %v2169 = vunpack.c.0.s8 %v2168
      %v2170 = vlaneseq
      %v2171 = vshrl.u32 %v2170, 7
      %v2172 = vsub.s32 %v2169, %v2171
      %v2173 = vrot.slane %v2165, %v2172
      %v2175 = vunpack.c.l.s4 1983009808
      %v2176 = vunpack.c.0.s8 %v2175
      %v2177 = vlaneseq
      %v2178 = vshrl.u32 %v2177, 7
      %v2179 = vsub.s32 %v2176, %v2178
      %v2180 = vrot.slane %v2166, %v2179
      %v2181 = vcombine.low %v2173, %v2180
      %v2182 = vcombine.low %v1831, %v1833
      %v2183 = vcombine.low %v1841, %v1849
      %v2185 = vunpack.c.l.s4 1983009808
      %v2186 = vunpack.c.0.s8 %v2185
      %v2187 = vlaneseq
      %v2188 = vshrl.u32 %v2187, 7
      %v2189 = vsub.s32 %v2186, %v2188
      %v2190 = vrot.slane %v2182, %v2189
      %v2192 = vunpack.c.l.s4 1983009808
      %v2193 = vunpack.c.0.s8 %v2192
      %v2194 = vlaneseq
      %v2195 = vshrl.u32 %v2194, 7
      %v2196 = vsub.s32 %v2193, %v2195
      %v2197 = vrot.slane %v2183, %v2196
      %v2198 = vcombine.low %v2190, %v2197
      %v2199 = vcombine.low %v1848, %v1850
      %v2200 = vcombine.low %v1858, %v1866
      %v2202 = vunpack.c.l.s4 1983009808
      %v2203 = vunpack.c.0.s8 %v2202
      %v2204 = vlaneseq
      %v2205 = vshrl.u32 %v2204, 7
      %v2206 = vsub.s32 %v2203, %v2205
      %v2207 = vrot.slane %v2199, %v2206
      %v2209 = vunpack.c.l.s4 1983009808
      %v2210 = vunpack.c.0.s8 %v2209
      %v2211 = vlaneseq
      %v2212 = vshrl.u32 %v2211, 7
      %v2213 = vsub.s32 %v2210, %v2212
      %v2214 = vrot.slane %v2200, %v2213
      %v2215 = vcombine.low %v2207, %v2214
      %v2216 = vcombine.low %v1867, %v1875
      %v2217 = vcombine.low %v1883, %v1882
      %v2219 = vunpack.c.l.s4 1983009808
      %v2220 = vunpack.c.0.s8 %v2219
      %v2221 = vlaneseq
      %v2222 = vshrl.u32 %v2221, 7
      %v2223 = vsub.s32 %v2220, %v2222
      %v2224 = vrot.slane %v2216, %v2223
      %v2226 = vunpack.c.l.s4 1983009808
      %v2227 = vunpack.c.0.s8 %v2226
      %v2228 = vlaneseq
      %v2229 = vshrl.u32 %v2228, 7
      %v2230 = vsub.s32 %v2227, %v2229
      %v2231 = vrot.slane %v2217, %v2230
      %v2232 = vcombine.low %v2224, %v2231
      %v2233 = vcombine.low %v1884, %v1892
      %v2234 = vcombine.low %v1900, %v1899
      %v2236 = vunpack.c.l.s4 1983009808
      %v2237 = vunpack.c.0.s8 %v2236
      %v2238 = vlaneseq
      %v2239 = vshrl.u32 %v2238, 7
      %v2240 = vsub.s32 %v2237, %v2239
      %v2241 = vrot.slane %v2233, %v2240
      %v2243 = vunpack.c.l.s4 1983009808
      %v2244 = vunpack.c.0.s8 %v2243
      %v2245 = vlaneseq
      %v2246 = vshrl.u32 %v2245, 7
      %v2247 = vsub.s32 %v2244, %v2246
      %v2248 = vrot.slane %v2234, %v2247
      %v2249 = vcombine.low %v2241, %v2248
      %v2267 = vunpack.c.l.s4 1983009808
      %v2268 = vunpack.c.0.s8 %v2267
      %v2269 = vlaneseq
      %v2270 = vshrl.u32 %v2269, 7
      %v2271 = vsub.s32 %v2268, %v2270
      %v2272 = vrot.slane %v1637, %v2271
      %v2274 = vunpack.c.l.s4 1983009808
      %v2275 = vunpack.c.0.s8 %v2274
      %v2276 = vlaneseq
      %v2277 = vshrl.u32 %v2276, 7
      %v2278 = vsub.s32 %v2275, %v2277
      %v2279 = vrot.slane %v1679, %v2278
      %v2281 = vunpack.c.l.s4 1983009808
      %v2282 = vunpack.c.0.s8 %v2281
      %v2283 = vlaneseq
      %v2284 = vshrl.u32 %v2283, 7
      %v2285 = vsub.s32 %v2282, %v2284
      %v2286 = vrot.slane %v1712, %v2285
      %v2288 = vunpack.c.l.s4 1983009808
      %v2289 = vunpack.c.0.s8 %v2288
      %v2290 = vlaneseq
      %v2291 = vshrl.u32 %v2290, 7
      %v2292 = vsub.s32 %v2289, %v2291
      %v2293 = vrot.slane %v1748, %v2292
      %v2295 = vunpack.c.l.s4 1983009808
      %v2296 = vunpack.c.0.s8 %v2295
      %v2297 = vlaneseq
      %v2298 = vshrl.u32 %v2297, 7
      %v2299 = vsub.s32 %v2296, %v2298
      %v2300 = vrot.slane %v1790, %v2299
      %v2302 = vunpack.c.l.s4 1983009808
      %v2303 = vunpack.c.0.s8 %v2302
      %v2304 = vlaneseq
      %v2305 = vshrl.u32 %v2304, 7
      %v2306 = vsub.s32 %v2303, %v2305
      %v2307 = vrot.slane %v1832, %v2306
      %v2309 = vunpack.c.l.s4 1983009808
      %v2310 = vunpack.c.0.s8 %v2309
      %v2311 = vlaneseq
      %v2312 = vshrl.u32 %v2311, 7
      %v2313 = vsub.s32 %v2310, %v2312
      %v2314 = vrot.slane %v1865, %v2313
      %v2316 = vunpack.c.l.s4 1983009808
      %v2317 = vunpack.c.0.s8 %v2316
      %v2318 = vlaneseq
      %v2319 = vshrl.u32 %v2318, 7
      %v2320 = vsub.s32 %v2317, %v2319
      %v2321 = vrot.slane %v1901, %v2320
      %vm2322 = vcmask 1046528
      %v2323 = vrot.slane %v1994, 1
      %v2324 = vrot.slane %v2011, 1
      %v2325 = vsel %vm2322, %v2323, %v2324
      %v2326 = vrot.slane %v2272, 1
      %v2327 = vsel %vm2322, %v2324, %v2326
      %v2328 = vrot.slane %v2028, 1
      %v2329 = vrot.slane %v2045, 1
      %v2330 = vsel %vm2322, %v2328, %v2329
      %v2331 = vrot.slane %v2279, 1
      %v2332 = vsel %vm2322, %v2329, %v2331
      %v2333 = vrot.slane %v2062, 1
      %v2334 = vrot.slane %v2079, 1
      %v2335 = vsel %vm2322, %v2333, %v2334
      %v2336 = vrot.slane %v2286, 1
      %v2337 = vsel %vm2322, %v2334, %v2336
      %v2338 = vrot.slane %v2096, 1
      %v2339 = vrot.slane %v2113, 1
      %v2340 = vsel %vm2322, %v2338, %v2339
      %v2341 = vrot.slane %v2293, 1
      %v2342 = vsel %vm2322, %v2339, %v2341
      %v2343 = vrot.slane %v2130, 1
      %v2344 = vrot.slane %v2147, 1
      %v2345 = vsel %vm2322, %v2343, %v2344
      %v2346 = vrot.slane %v2300, 1
      %v2347 = vsel %vm2322, %v2344, %v2346
      %v2348 = vrot.slane %v2164, 1
      %v2349 = vrot.slane %v2181, 1
      %v2350 = vsel %vm2322, %v2348, %v2349
      %v2351 = vrot.slane %v2307, 1
      %v2352 = vsel %vm2322, %v2349, %v2351
      %v2353 = vrot.slane %v2198, 1
      %v2354 = vrot.slane %v2215, 1
      %v2355 = vsel %vm2322, %v2353, %v2354
      %v2356 = vrot.slane %v2314, 1
      %v2357 = vsel %vm2322, %v2354, %v2356
      %v2358 = vrot.slane %v2232, 1
      %v2359 = vrot.slane %v2249, 1
      %v2360 = vsel %vm2322, %v2358, %v2359
      %v2361 = vrot.slane %v2321, 1
      %v2362 = vsel %vm2322, %v2359, %v2361
      %2363 = vrot.lane.b32.xlu0 %v2325, 8
      %v2364 = vpop.permute.xlu0 %2363
      %2365 = vrot.lane.b32.xlu0 %v2327, 8
      %v2366 = vpop.permute.xlu0 %2365
      %2367 = vrot.lane.b32.xlu0 %v2330, 8
      %v2368 = vpop.permute.xlu0 %2367
      %2369 = vrot.lane.b32.xlu0 %v2332, 8
      %v2370 = vpop.permute.xlu0 %2369
      %2371 = vrot.lane.b32.xlu0 %v2335, 8
      %v2372 = vpop.permute.xlu0 %2371
      %2373 = vrot.lane.b32.xlu0 %v2337, 8
      %v2374 = vpop.permute.xlu0 %2373
      %2375 = vrot.lane.b32.xlu0 %v2340, 8
      %v2376 = vpop.permute.xlu0 %2375
      %2377 = vrot.lane.b32.xlu0 %v2342, 8
      %v2378 = vpop.permute.xlu0 %2377
      %2379 = vrot.lane.b32.xlu0 %v2345, 8
      %v2380 = vpop.permute.xlu0 %2379
      %2381 = vrot.lane.b32.xlu0 %v2347, 8
      %v2382 = vpop.permute.xlu0 %2381
      %2383 = vrot.lane.b32.xlu0 %v2350, 8
      %v2384 = vpop.permute.xlu0 %2383
      %2385 = vrot.lane.b32.xlu0 %v2352, 8
      %v2386 = vpop.permute.xlu0 %2385
      %2387 = vrot.lane.b32.xlu0 %v2355, 8
      %v2388 = vpop.permute.xlu0 %2387
      %2389 = vrot.lane.b32.xlu0 %v2357, 8
      %v2390 = vpop.permute.xlu0 %2389
      %2391 = vrot.lane.b32.xlu0 %v2360, 8
      %v2392 = vpop.permute.xlu0 %2391
      %2393 = vrot.lane.b32.xlu0 %v2362, 8
      %v2394 = vpop.permute.xlu0 %2393
      %v2411 = vcombine.low %v1611, %v1610
      %v2412 = vcombine.low %v1612, %v1620
      %v2414 = vunpack.c.l.s4 1983009808
      %v2415 = vunpack.c.0.s8 %v2414
      %v2416 = vlaneseq
      %v2417 = vshrl.u32 %v2416, 7
      %v2418 = vsub.s32 %v2415, %v2417
      %v2419 = vrot.slane %v2411, %v2418
      %v2421 = vunpack.c.l.s4 1983009808
      %v2422 = vunpack.c.0.s8 %v2421
      %v2423 = vlaneseq
      %v2424 = vshrl.u32 %v2423, 7
      %v2425 = vsub.s32 %v2422, %v2424
      %v2426 = vrot.slane %v2412, %v2425
      %v2427 = vcombine.low %v2419, %v2426
      %v2428 = vcombine.low %v1628, %v1627
      %v2429 = vcombine.low %v1629, %v1637
      %v2431 = vunpack.c.l.s4 1983009808
      %v2432 = vunpack.c.0.s8 %v2431
      %v2433 = vlaneseq
      %v2434 = vshrl.u32 %v2433, 7
      %v2435 = vsub.s32 %v2432, %v2434
      %v2436 = vrot.slane %v2428, %v2435
      %v2438 = vunpack.c.l.s4 1983009808
      %v2439 = vunpack.c.0.s8 %v2438
      %v2440 = vlaneseq
      %v2441 = vshrl.u32 %v2440, 7
      %v2442 = vsub.s32 %v2439, %v2441
      %v2443 = vrot.slane %v2429, %v2442
      %v2444 = vcombine.low %v2436, %v2443
      %v2445 = vcombine.low %v1644, %v1646
      %v2446 = vcombine.low %v1654, %v1662
      %v2448 = vunpack.c.l.s4 1983009808
      %v2449 = vunpack.c.0.s8 %v2448
      %v2450 = vlaneseq
      %v2451 = vshrl.u32 %v2450, 7
      %v2452 = vsub.s32 %v2449, %v2451
      %v2453 = vrot.slane %v2445, %v2452
      %v2455 = vunpack.c.l.s4 1983009808
      %v2456 = vunpack.c.0.s8 %v2455
      %v2457 = vlaneseq
      %v2458 = vshrl.u32 %v2457, 7
      %v2459 = vsub.s32 %v2456, %v2458
      %v2460 = vrot.slane %v2446, %v2459
      %v2461 = vcombine.low %v2453, %v2460
      %v2462 = vcombine.low %v1661, %v1663
      %v2463 = vcombine.low %v1671, %v1679
      %v2465 = vunpack.c.l.s4 1983009808
      %v2466 = vunpack.c.0.s8 %v2465
      %v2467 = vlaneseq
      %v2468 = vshrl.u32 %v2467, 7
      %v2469 = vsub.s32 %v2466, %v2468
      %v2470 = vrot.slane %v2462, %v2469
      %v2472 = vunpack.c.l.s4 1983009808
      %v2473 = vunpack.c.0.s8 %v2472
      %v2474 = vlaneseq
      %v2475 = vshrl.u32 %v2474, 7
      %v2476 = vsub.s32 %v2473, %v2475
      %v2477 = vrot.slane %v2463, %v2476
      %v2478 = vcombine.low %v2470, %v2477
      %v2479 = vcombine.low %v1680, %v1688
      %v2480 = vcombine.low %v1696, %v1695
      %v2482 = vunpack.c.l.s4 1983009808
      %v2483 = vunpack.c.0.s8 %v2482
      %v2484 = vlaneseq
      %v2485 = vshrl.u32 %v2484, 7
      %v2486 = vsub.s32 %v2483, %v2485
      %v2487 = vrot.slane %v2479, %v2486
      %v2489 = vunpack.c.l.s4 1983009808
      %v2490 = vunpack.c.0.s8 %v2489
      %v2491 = vlaneseq
      %v2492 = vshrl.u32 %v2491, 7
      %v2493 = vsub.s32 %v2490, %v2492
      %v2494 = vrot.slane %v2480, %v2493
      %v2495 = vcombine.low %v2487, %v2494
      %v2496 = vcombine.low %v1697, %v1705
      %v2497 = vcombine.low %v1713, %v1712
      %v2499 = vunpack.c.l.s4 1983009808
      %v2500 = vunpack.c.0.s8 %v2499
      %v2501 = vlaneseq
      %v2502 = vshrl.u32 %v2501, 7
      %v2503 = vsub.s32 %v2500, %v2502
      %v2504 = vrot.slane %v2496, %v2503
      %v2506 = vunpack.c.l.s4 1983009808
      %v2507 = vunpack.c.0.s8 %v2506
      %v2508 = vlaneseq
      %v2509 = vshrl.u32 %v2508, 7
      %v2510 = vsub.s32 %v2507, %v2509
      %v2511 = vrot.slane %v2497, %v2510
      %v2512 = vcombine.low %v2504, %v2511
      %v2513 = vcombine.low %v1722, %v1730
      %v2514 = vcombine.low %v1729, %v1731
      %v2516 = vunpack.c.l.s4 1983009808
      %v2517 = vunpack.c.0.s8 %v2516
      %v2518 = vlaneseq
      %v2519 = vshrl.u32 %v2518, 7
      %v2520 = vsub.s32 %v2517, %v2519
      %v2521 = vrot.slane %v2513, %v2520
      %v2523 = vunpack.c.l.s4 1983009808
      %v2524 = vunpack.c.0.s8 %v2523
      %v2525 = vlaneseq
      %v2526 = vshrl.u32 %v2525, 7
      %v2527 = vsub.s32 %v2524, %v2526
      %v2528 = vrot.slane %v2514, %v2527
      %v2529 = vcombine.low %v2521, %v2528
      %v2530 = vcombine.low %v1739, %v1747
      %v2531 = vcombine.low %v1746, %v1748
      %v2533 = vunpack.c.l.s4 1983009808
      %v2534 = vunpack.c.0.s8 %v2533
      %v2535 = vlaneseq
      %v2536 = vshrl.u32 %v2535, 7
      %v2537 = vsub.s32 %v2534, %v2536
      %v2538 = vrot.slane %v2530, %v2537
      %v2540 = vunpack.c.l.s4 1983009808
      %v2541 = vunpack.c.0.s8 %v2540
      %v2542 = vlaneseq
      %v2543 = vshrl.u32 %v2542, 7
      %v2544 = vsub.s32 %v2541, %v2543
      %v2545 = vrot.slane %v2531, %v2544
      %v2546 = vcombine.low %v2538, %v2545
      %v2547 = vcombine.low %v1764, %v1763
      %v2548 = vcombine.low %v1765, %v1773
      %v2550 = vunpack.c.l.s4 1983009808
      %v2551 = vunpack.c.0.s8 %v2550
      %v2552 = vlaneseq
      %v2553 = vshrl.u32 %v2552, 7
      %v2554 = vsub.s32 %v2551, %v2553
      %v2555 = vrot.slane %v2547, %v2554
      %v2557 = vunpack.c.l.s4 1983009808
      %v2558 = vunpack.c.0.s8 %v2557
      %v2559 = vlaneseq
      %v2560 = vshrl.u32 %v2559, 7
      %v2561 = vsub.s32 %v2558, %v2560
      %v2562 = vrot.slane %v2548, %v2561
      %v2563 = vcombine.low %v2555, %v2562
      %v2564 = vcombine.low %v1781, %v1780
      %v2565 = vcombine.low %v1782, %v1790
      %v2567 = vunpack.c.l.s4 1983009808
      %v2568 = vunpack.c.0.s8 %v2567
      %v2569 = vlaneseq
      %v2570 = vshrl.u32 %v2569, 7
      %v2571 = vsub.s32 %v2568, %v2570
      %v2572 = vrot.slane %v2564, %v2571
      %v2574 = vunpack.c.l.s4 1983009808
      %v2575 = vunpack.c.0.s8 %v2574
      %v2576 = vlaneseq
      %v2577 = vshrl.u32 %v2576, 7
      %v2578 = vsub.s32 %v2575, %v2577
      %v2579 = vrot.slane %v2565, %v2578
      %v2580 = vcombine.low %v2572, %v2579
      %v2581 = vcombine.low %v1797, %v1799
      %v2582 = vcombine.low %v1807, %v1815
      %v2584 = vunpack.c.l.s4 1983009808
      %v2585 = vunpack.c.0.s8 %v2584
      %v2586 = vlaneseq
      %v2587 = vshrl.u32 %v2586, 7
      %v2588 = vsub.s32 %v2585, %v2587
      %v2589 = vrot.slane %v2581, %v2588
      %v2591 = vunpack.c.l.s4 1983009808
      %v2592 = vunpack.c.0.s8 %v2591
      %v2593 = vlaneseq
      %v2594 = vshrl.u32 %v2593, 7
      %v2595 = vsub.s32 %v2592, %v2594
      %v2596 = vrot.slane %v2582, %v2595
      %v2597 = vcombine.low %v2589, %v2596
      %v2598 = vcombine.low %v1814, %v1816
      %v2599 = vcombine.low %v1824, %v1832
      %v2601 = vunpack.c.l.s4 1983009808
      %v2602 = vunpack.c.0.s8 %v2601
      %v2603 = vlaneseq
      %v2604 = vshrl.u32 %v2603, 7
      %v2605 = vsub.s32 %v2602, %v2604
      %v2606 = vrot.slane %v2598, %v2605
      %v2608 = vunpack.c.l.s4 1983009808
      %v2609 = vunpack.c.0.s8 %v2608
      %v2610 = vlaneseq
      %v2611 = vshrl.u32 %v2610, 7
      %v2612 = vsub.s32 %v2609, %v2611
      %v2613 = vrot.slane %v2599, %v2612
      %v2614 = vcombine.low %v2606, %v2613
      %v2615 = vcombine.low %v1833, %v1841
      %v2616 = vcombine.low %v1849, %v1848
      %v2618 = vunpack.c.l.s4 1983009808
      %v2619 = vunpack.c.0.s8 %v2618
      %v2620 = vlaneseq
      %v2621 = vshrl.u32 %v2620, 7
      %v2622 = vsub.s32 %v2619, %v2621
      %v2623 = vrot.slane %v2615, %v2622
      %v2625 = vunpack.c.l.s4 1983009808
      %v2626 = vunpack.c.0.s8 %v2625
      %v2627 = vlaneseq
      %v2628 = vshrl.u32 %v2627, 7
      %v2629 = vsub.s32 %v2626, %v2628
      %v2630 = vrot.slane %v2616, %v2629
      %v2631 = vcombine.low %v2623, %v2630
      %v2632 = vcombine.low %v1850, %v1858
      %v2633 = vcombine.low %v1866, %v1865
      %v2635 = vunpack.c.l.s4 1983009808
      %v2636 = vunpack.c.0.s8 %v2635
      %v2637 = vlaneseq
      %v2638 = vshrl.u32 %v2637, 7
      %v2639 = vsub.s32 %v2636, %v2638
      %v2640 = vrot.slane %v2632, %v2639
      %v2642 = vunpack.c.l.s4 1983009808
      %v2643 = vunpack.c.0.s8 %v2642
      %v2644 = vlaneseq
      %v2645 = vshrl.u32 %v2644, 7
      %v2646 = vsub.s32 %v2643, %v2645
      %v2647 = vrot.slane %v2633, %v2646
      %v2648 = vcombine.low %v2640, %v2647
      %v2649 = vcombine.low %v1875, %v1883
      %v2650 = vcombine.low %v1882, %v1884
      %v2652 = vunpack.c.l.s4 1983009808
      %v2653 = vunpack.c.0.s8 %v2652
      %v2654 = vlaneseq
      %v2655 = vshrl.u32 %v2654, 7
      %v2656 = vsub.s32 %v2653, %v2655
      %v2657 = vrot.slane %v2649, %v2656
      %v2659 = vunpack.c.l.s4 1983009808
      %v2660 = vunpack.c.0.s8 %v2659
      %v2661 = vlaneseq
      %v2662 = vshrl.u32 %v2661, 7
      %v2663 = vsub.s32 %v2660, %v2662
      %v2664 = vrot.slane %v2650, %v2663
      %v2665 = vcombine.low %v2657, %v2664
      %v2666 = vcombine.low %v1892, %v1900
      %v2667 = vcombine.low %v1899, %v1901
      %v2669 = vunpack.c.l.s4 1983009808
      %v2670 = vunpack.c.0.s8 %v2669
      %v2671 = vlaneseq
      %v2672 = vshrl.u32 %v2671, 7
      %v2673 = vsub.s32 %v2670, %v2672
      %v2674 = vrot.slane %v2666, %v2673
      %v2676 = vunpack.c.l.s4 1983009808
      %v2677 = vunpack.c.0.s8 %v2676
      %v2678 = vlaneseq
      %v2679 = vshrl.u32 %v2678, 7
      %v2680 = vsub.s32 %v2677, %v2679
      %v2681 = vrot.slane %v2667, %v2680
      %v2682 = vcombine.low %v2674, %v2681
      %2683 = vrot.lane.b32.xlu0 %v2427, 16
      %v2684 = vpop.permute.xlu0 %2683
      %2685 = vrot.lane.b32.xlu0 %v2444, 16
      %v2686 = vpop.permute.xlu0 %2685
      %2687 = vrot.lane.b32.xlu0 %v2461, 16
      %v2688 = vpop.permute.xlu0 %2687
      %2689 = vrot.lane.b32.xlu0 %v2478, 16
      %v2690 = vpop.permute.xlu0 %2689
      %2691 = vrot.lane.b32.xlu0 %v2495, 16
      %v2692 = vpop.permute.xlu0 %2691
      %2693 = vrot.lane.b32.xlu0 %v2512, 16
      %v2694 = vpop.permute.xlu0 %2693
      %2695 = vrot.lane.b32.xlu0 %v2529, 16
      %v2696 = vpop.permute.xlu0 %2695
      %2697 = vrot.lane.b32.xlu0 %v2546, 16
      %v2698 = vpop.permute.xlu0 %2697
      %2699 = vrot.lane.b32.xlu0 %v2563, 16
      %v2700 = vpop.permute.xlu0 %2699
      %2701 = vrot.lane.b32.xlu0 %v2580, 16
      %v2702 = vpop.permute.xlu0 %2701
      %2703 = vrot.lane.b32.xlu0 %v2597, 16
      %v2704 = vpop.permute.xlu0 %2703
      %2705 = vrot.lane.b32.xlu0 %v2614, 16
      %v2706 = vpop.permute.xlu0 %2705
      %2707 = vrot.lane.b32.xlu0 %v2631, 16
      %v2708 = vpop.permute.xlu0 %2707
      %2709 = vrot.lane.b32.xlu0 %v2648, 16
      %v2710 = vpop.permute.xlu0 %2709
      %2711 = vrot.lane.b32.xlu0 %v2665, 16
      %v2712 = vpop.permute.xlu0 %2711
      %2713 = vrot.lane.b32.xlu0 %v2682, 16
      %v2714 = vpop.permute.xlu0 %2713
      %v2731 = vcombine.low %v1909, %v1917
      %v2732 = vcombine.low %v1916, %v1918
      %v2734 = vunpack.c.l.s4 1983009808
      %v2735 = vunpack.c.0.s8 %v2734
      %v2736 = vlaneseq
      %v2737 = vshrl.u32 %v2736, 7
      %v2738 = vsub.s32 %v2735, %v2737
      %v2739 = vrot.slane %v2731, %v2738
      %v2741 = vunpack.c.l.s4 1983009808
      %v2742 = vunpack.c.0.s8 %v2741
      %v2743 = vlaneseq
      %v2744 = vshrl.u32 %v2743, 7
      %v2745 = vsub.s32 %v2742, %v2744
      %v2746 = vrot.slane %v2732, %v2745
      %v2747 = vcombine.low %v2739, %v2746
      %v2748 = vcombine.low %v1926, %v1934
      %v2749 = vcombine.low %v1933, %v1935
      %v2751 = vunpack.c.l.s4 1983009808
      %v2752 = vunpack.c.0.s8 %v2751
      %v2753 = vlaneseq
      %v2754 = vshrl.u32 %v2753, 7
      %v2755 = vsub.s32 %v2752, %v2754
      %v2756 = vrot.slane %v2748, %v2755
      %v2758 = vunpack.c.l.s4 1983009808
      %v2759 = vunpack.c.0.s8 %v2758
      %v2760 = vlaneseq
      %v2761 = vshrl.u32 %v2760, 7
      %v2762 = vsub.s32 %v2759, %v2761
      %v2763 = vrot.slane %v2749, %v2762
      %v2764 = vcombine.low %v2756, %v2763
      %2765 = vrot.lane.b32.xlu0 %v2028, 24
      %v2766 = vpop.permute.xlu0 %2765
      %2767 = vrot.lane.b32.xlu0 %v2045, 24
      %v2768 = vpop.permute.xlu0 %2767
      %2769 = vrot.lane.b32.xlu0 %v2062, 24
      %v2770 = vpop.permute.xlu0 %2769
      %2771 = vrot.lane.b32.xlu0 %v2079, 24
      %v2772 = vpop.permute.xlu0 %2771
      %2773 = vrot.lane.b32.xlu0 %v2096, 24
      %v2774 = vpop.permute.xlu0 %2773
      %2775 = vrot.lane.b32.xlu0 %v2113, 24
      %v2776 = vpop.permute.xlu0 %2775
      %2777 = vrot.lane.b32.xlu0 %v2130, 24
      %v2778 = vpop.permute.xlu0 %2777
      %2779 = vrot.lane.b32.xlu0 %v2147, 24
      %v2780 = vpop.permute.xlu0 %2779
      %2781 = vrot.lane.b32.xlu0 %v2164, 24
      %v2782 = vpop.permute.xlu0 %2781
      %2783 = vrot.lane.b32.xlu0 %v2181, 24
      %v2784 = vpop.permute.xlu0 %2783
      %2785 = vrot.lane.b32.xlu0 %v2198, 24
      %v2786 = vpop.permute.xlu0 %2785
      %2787 = vrot.lane.b32.xlu0 %v2215, 24
      %v2788 = vpop.permute.xlu0 %2787
      %2789 = vrot.lane.b32.xlu0 %v2232, 24
      %v2790 = vpop.permute.xlu0 %2789
      %2791 = vrot.lane.b32.xlu0 %v2249, 24
      %v2792 = vpop.permute.xlu0 %2791
      %2793 = vrot.lane.b32.xlu0 %v2747, 24
      %v2794 = vpop.permute.xlu0 %2793
      %2795 = vrot.lane.b32.xlu0 %v2764, 24
      %v2796 = vpop.permute.xlu0 %2795
      %v2814 = vunpack.c.l.s4 1983009808
      %v2815 = vunpack.c.0.s8 %v2814
      %v2816 = vlaneseq
      %v2817 = vshrl.u32 %v2816, 7
      %v2818 = vsub.s32 %v2815, %v2817
      %v2819 = vrot.slane %v1943, %v2818
      %v2820 = vrot.slane %v2747, 1
      %v2821 = vrot.slane %v2764, 1
      %v2822 = vsel %vm2322, %v2820, %v2821
      %v2823 = vrot.slane %v2819, 1
      %v2824 = vsel %vm2322, %v2821, %v2823
      %2825 = vrot.lane.b32.xlu0 %v2330, 32
      %v2826 = vpop.permute.xlu0 %2825
      %2827 = vrot.lane.b32.xlu0 %v2332, 32
      %v2828 = vpop.permute.xlu0 %2827
      %2829 = vrot.lane.b32.xlu0 %v2335, 32
      %v2830 = vpop.permute.xlu0 %2829
      %2831 = vrot.lane.b32.xlu0 %v2337, 32
      %v2832 = vpop.permute.xlu0 %2831
      %2833 = vrot.lane.b32.xlu0 %v2340, 32
      %v2834 = vpop.permute.xlu0 %2833
      %2835 = vrot.lane.b32.xlu0 %v2342, 32
      %v2836 = vpop.permute.xlu0 %2835
      %2837 = vrot.lane.b32.xlu0 %v2345, 32
      %v2838 = vpop.permute.xlu0 %2837
      %2839 = vrot.lane.b32.xlu0 %v2347, 32
      %v2840 = vpop.permute.xlu0 %2839
      %2841 = vrot.lane.b32.xlu0 %v2350, 32
      %v2842 = vpop.permute.xlu0 %2841
      %2843 = vrot.lane.b32.xlu0 %v2352, 32
      %v2844 = vpop.permute.xlu0 %2843
      %2845 = vrot.lane.b32.xlu0 %v2355, 32
      %v2846 = vpop.permute.xlu0 %2845
      %2847 = vrot.lane.b32.xlu0 %v2357, 32
      %v2848 = vpop.permute.xlu0 %2847
      %2849 = vrot.lane.b32.xlu0 %v2360, 32
      %v2850 = vpop.permute.xlu0 %2849
      %2851 = vrot.lane.b32.xlu0 %v2362, 32
      %v2852 = vpop.permute.xlu0 %2851
      %2853 = vrot.lane.b32.xlu0 %v2822, 32
      %v2854 = vpop.permute.xlu0 %2853
      %2855 = vrot.lane.b32.xlu0 %v2824, 32
      %v2856 = vpop.permute.xlu0 %2855
      %v2873 = vcombine.low %v1917, %v1916
      %v2874 = vcombine.low %v1918, %v1926
      %v2876 = vunpack.c.l.s4 1983009808
      %v2877 = vunpack.c.0.s8 %v2876
      %v2878 = vlaneseq
      %v2879 = vshrl.u32 %v2878, 7
      %v2880 = vsub.s32 %v2877, %v2879
      %v2881 = vrot.slane %v2873, %v2880
      %v2883 = vunpack.c.l.s4 1983009808
      %v2884 = vunpack.c.0.s8 %v2883
      %v2885 = vlaneseq
      %v2886 = vshrl.u32 %v2885, 7
      %v2887 = vsub.s32 %v2884, %v2886
      %v2888 = vrot.slane %v2874, %v2887
      %v2889 = vcombine.low %v2881, %v2888
      %v2890 = vcombine.low %v1934, %v1933
      %v2891 = vcombine.low %v1935, %v1943
      %v2893 = vunpack.c.l.s4 1983009808
      %v2894 = vunpack.c.0.s8 %v2893
      %v2895 = vlaneseq
      %v2896 = vshrl.u32 %v2895, 7
      %v2897 = vsub.s32 %v2894, %v2896
      %v2898 = vrot.slane %v2890, %v2897
      %v2900 = vunpack.c.l.s4 1983009808
      %v2901 = vunpack.c.0.s8 %v2900
      %v2902 = vlaneseq
      %v2903 = vshrl.u32 %v2902, 7
      %v2904 = vsub.s32 %v2901, %v2903
      %v2905 = vrot.slane %v2891, %v2904
      %v2906 = vcombine.low %v2898, %v2905
      %2907 = vrot.lane.b32.xlu0 %v2461, 40
      %v2908 = vpop.permute.xlu0 %2907
      %2909 = vrot.lane.b32.xlu0 %v2478, 40
      %v2910 = vpop.permute.xlu0 %2909
      %2911 = vrot.lane.b32.xlu0 %v2495, 40
      %v2912 = vpop.permute.xlu0 %2911
      %2913 = vrot.lane.b32.xlu0 %v2512, 40
      %v2914 = vpop.permute.xlu0 %2913
      %2915 = vrot.lane.b32.xlu0 %v2529, 40
      %v2916 = vpop.permute.xlu0 %2915
      %2917 = vrot.lane.b32.xlu0 %v2546, 40
      %v2918 = vpop.permute.xlu0 %2917
      %2919 = vrot.lane.b32.xlu0 %v2563, 40
      %v2920 = vpop.permute.xlu0 %2919
      %2921 = vrot.lane.b32.xlu0 %v2580, 40
      %v2922 = vpop.permute.xlu0 %2921
      %2923 = vrot.lane.b32.xlu0 %v2597, 40
      %v2924 = vpop.permute.xlu0 %2923
      %2925 = vrot.lane.b32.xlu0 %v2614, 40
      %v2926 = vpop.permute.xlu0 %2925
      %2927 = vrot.lane.b32.xlu0 %v2631, 40
      %v2928 = vpop.permute.xlu0 %2927
      %2929 = vrot.lane.b32.xlu0 %v2648, 40
      %v2930 = vpop.permute.xlu0 %2929
      %2931 = vrot.lane.b32.xlu0 %v2665, 40
      %v2932 = vpop.permute.xlu0 %2931
      %2933 = vrot.lane.b32.xlu0 %v2682, 40
      %v2934 = vpop.permute.xlu0 %2933
      %2935 = vrot.lane.b32.xlu0 %v2889, 40
      %v2936 = vpop.permute.xlu0 %2935
      %2937 = vrot.lane.b32.xlu0 %v2906, 40
      %v2938 = vpop.permute.xlu0 %2937
      %v2955 = vcombine.low %v1951, %v1950
      %v2956 = vcombine.low %v1952, %v1960
      %v2958 = vunpack.c.l.s4 1983009808
      %v2959 = vunpack.c.0.s8 %v2958
      %v2960 = vlaneseq
      %v2961 = vshrl.u32 %v2960, 7
      %v2962 = vsub.s32 %v2959, %v2961
      %v2963 = vrot.slane %v2955, %v2962
      %v2965 = vunpack.c.l.s4 1983009808
      %v2966 = vunpack.c.0.s8 %v2965
      %v2967 = vlaneseq
      %v2968 = vshrl.u32 %v2967, 7
      %v2969 = vsub.s32 %v2966, %v2968
      %v2970 = vrot.slane %v2956, %v2969
      %v2971 = vcombine.low %v2963, %v2970
      %v2972 = vcombine.low %v1968, %v1967
      %v2973 = vcombine.low %v1969, %v1976
      %v2975 = vunpack.c.l.s4 1983009808
      %v2976 = vunpack.c.0.s8 %v2975
      %v2977 = vlaneseq
      %v2978 = vshrl.u32 %v2977, 7
      %v2979 = vsub.s32 %v2976, %v2978
      %v2980 = vrot.slane %v2972, %v2979
      %v2982 = vunpack.c.l.s4 1983009808
      %v2983 = vunpack.c.0.s8 %v2982
      %v2984 = vlaneseq
      %v2985 = vshrl.u32 %v2984, 7
      %v2986 = vsub.s32 %v2983, %v2985
      %v2987 = vrot.slane %v2973, %v2986
      %v2988 = vcombine.low %v2980, %v2987
      %2989 = vrot.lane.b32.xlu0 %v2062, 48
      %v2990 = vpop.permute.xlu0 %2989
      %2991 = vrot.lane.b32.xlu0 %v2079, 48
      %v2992 = vpop.permute.xlu0 %2991
      %2993 = vrot.lane.b32.xlu0 %v2096, 48
      %v2994 = vpop.permute.xlu0 %2993
      %2995 = vrot.lane.b32.xlu0 %v2113, 48
      %v2996 = vpop.permute.xlu0 %2995
      %2997 = vrot.lane.b32.xlu0 %v2130, 48
      %v2998 = vpop.permute.xlu0 %2997
      %2999 = vrot.lane.b32.xlu0 %v2147, 48
      %v3000 = vpop.permute.xlu0 %2999
      %3001 = vrot.lane.b32.xlu0 %v2164, 48
      %v3002 = vpop.permute.xlu0 %3001
      %3003 = vrot.lane.b32.xlu0 %v2181, 48
      %v3004 = vpop.permute.xlu0 %3003
      %3005 = vrot.lane.b32.xlu0 %v2198, 48
      %v3006 = vpop.permute.xlu0 %3005
      %3007 = vrot.lane.b32.xlu0 %v2215, 48
      %v3008 = vpop.permute.xlu0 %3007
      %3009 = vrot.lane.b32.xlu0 %v2232, 48
      %v3010 = vpop.permute.xlu0 %3009
      %3011 = vrot.lane.b32.xlu0 %v2249, 48
      %v3012 = vpop.permute.xlu0 %3011
      %3013 = vrot.lane.b32.xlu0 %v2747, 48
      %v3014 = vpop.permute.xlu0 %3013
      %3015 = vrot.lane.b32.xlu0 %v2764, 48
      %v3016 = vpop.permute.xlu0 %3015
      %3017 = vrot.lane.b32.xlu0 %v2971, 48
      %v3018 = vpop.permute.xlu0 %3017
      %3019 = vrot.lane.b32.xlu0 %v2988, 48
      %v3020 = vpop.permute.xlu0 %3019
      %v3038 = vunpack.c.l.s4 1983009808
      %v3039 = vunpack.c.0.s8 %v3038
      %v3040 = vlaneseq
      %v3041 = vshrl.u32 %v3040, 7
      %v3042 = vsub.s32 %v3039, %v3041
      %v3043 = vrot.slane %v1977, %v3042
      %v3044 = vrot.slane %v2971, 1
      %v3045 = vrot.slane %v2988, 1
      %v3046 = vsel %vm2322, %v3044, %v3045
      %v3047 = vrot.slane %v3043, 1
      %v3048 = vsel %vm2322, %v3045, %v3047
      %3049 = vrot.lane.b32.xlu0 %v2335, 56
      %v3050 = vpop.permute.xlu0 %3049
      %3051 = vrot.lane.b32.xlu0 %v2337, 56
      %v3052 = vpop.permute.xlu0 %3051
      %3053 = vrot.lane.b32.xlu0 %v2340, 56
      %v3054 = vpop.permute.xlu0 %3053
      %3055 = vrot.lane.b32.xlu0 %v2342, 56
      %v3056 = vpop.permute.xlu0 %3055
      %3057 = vrot.lane.b32.xlu0 %v2345, 56
      %v3058 = vpop.permute.xlu0 %3057
      %3059 = vrot.lane.b32.xlu0 %v2347, 56
      %v3060 = vpop.permute.xlu0 %3059
      %3061 = vrot.lane.b32.xlu0 %v2350, 56
      %v3062 = vpop.permute.xlu0 %3061
      %3063 = vrot.lane.b32.xlu0 %v2352, 56
      %v3064 = vpop.permute.xlu0 %3063
      %3065 = vrot.lane.b32.xlu0 %v2355, 56
      %v3066 = vpop.permute.xlu0 %3065
      %3067 = vrot.lane.b32.xlu0 %v2357, 56
      %v3068 = vpop.permute.xlu0 %3067
      %3069 = vrot.lane.b32.xlu0 %v2360, 56
      %v3070 = vpop.permute.xlu0 %3069
      %3071 = vrot.lane.b32.xlu0 %v2362, 56
      %v3072 = vpop.permute.xlu0 %3071
      %3073 = vrot.lane.b32.xlu0 %v2822, 56
      %v3074 = vpop.permute.xlu0 %3073
      %3075 = vrot.lane.b32.xlu0 %v2824, 56
      %v3076 = vpop.permute.xlu0 %3075
      %3077 = vrot.lane.b32.xlu0 %v3046, 56
      %v3078 = vpop.permute.xlu0 %3077
      %3079 = vrot.lane.b32.xlu0 %v3048, 56
      %v3080 = vpop.permute.xlu0 %3079
      %v3097 = vcombine.low %v1950, %v1952
      %v3098 = vcombine.low %v1960, %v1968
      %v3100 = vunpack.c.l.s4 1983009808
      %v3101 = vunpack.c.0.s8 %v3100
      %v3102 = vlaneseq
      %v3103 = vshrl.u32 %v3102, 7
      %v3104 = vsub.s32 %v3101, %v3103
      %v3105 = vrot.slane %v3097, %v3104
      %v3107 = vunpack.c.l.s4 1983009808
      %v3108 = vunpack.c.0.s8 %v3107
      %v3109 = vlaneseq
      %v3110 = vshrl.u32 %v3109, 7
      %v3111 = vsub.s32 %v3108, %v3110
      %v3112 = vrot.slane %v3098, %v3111
      %v3113 = vcombine.low %v3105, %v3112
      %v3114 = vcombine.low %v1967, %v1969
      %v3115 = vcombine.low %v1976, %v1977
      %v3117 = vunpack.c.l.s4 1983009808
      %v3118 = vunpack.c.0.s8 %v3117
      %v3119 = vlaneseq
      %v3120 = vshrl.u32 %v3119, 7
      %v3121 = vsub.s32 %v3118, %v3120
      %v3122 = vrot.slane %v3114, %v3121
      %v3124 = vunpack.c.l.s4 1983009808
      %v3125 = vunpack.c.0.s8 %v3124
      %v3126 = vlaneseq
      %v3127 = vshrl.u32 %v3126, 7
      %v3128 = vsub.s32 %v3125, %v3127
      %v3129 = vrot.slane %v3115, %v3128
      %v3130 = vcombine.low %v3122, %v3129
      %3131 = vrot.lane.b32.xlu0 %v2495, 64
      %v3132 = vpop.permute.xlu0 %3131
      %3133 = vrot.lane.b32.xlu0 %v2512, 64
      %v3134 = vpop.permute.xlu0 %3133
      %3135 = vrot.lane.b32.xlu0 %v2529, 64
      %v3136 = vpop.permute.xlu0 %3135
      %3137 = vrot.lane.b32.xlu0 %v2546, 64
      %v3138 = vpop.permute.xlu0 %3137
      %3139 = vrot.lane.b32.xlu0 %v2563, 64
      %v3140 = vpop.permute.xlu0 %3139
      %3141 = vrot.lane.b32.xlu0 %v2580, 64
      %v3142 = vpop.permute.xlu0 %3141
      %3143 = vrot.lane.b32.xlu0 %v2597, 64
      %v3144 = vpop.permute.xlu0 %3143
      %3145 = vrot.lane.b32.xlu0 %v2614, 64
      %v3146 = vpop.permute.xlu0 %3145
      %3147 = vrot.lane.b32.xlu0 %v2631, 64
      %v3148 = vpop.permute.xlu0 %3147
      %3149 = vrot.lane.b32.xlu0 %v2648, 64
      %v3150 = vpop.permute.xlu0 %3149
      %3151 = vrot.lane.b32.xlu0 %v2665, 64
      %v3152 = vpop.permute.xlu0 %3151
      %3153 = vrot.lane.b32.xlu0 %v2682, 64
      %v3154 = vpop.permute.xlu0 %3153
      %3155 = vrot.lane.b32.xlu0 %v2889, 64
      %v3156 = vpop.permute.xlu0 %3155
      %3157 = vrot.lane.b32.xlu0 %v2906, 64
      %v3158 = vpop.permute.xlu0 %3157
      %3159 = vrot.lane.b32.xlu0 %v3113, 64
      %v3160 = vpop.permute.xlu0 %3159
      %3161 = vrot.lane.b32.xlu0 %v3130, 64
      %v3162 = vpop.permute.xlu0 %3161
      %vm3179 = vcmask 64512
      %v3180 = vsel %vm3179, %v1994, %v2364
      %v3181 = vsel %vm3179, %v2011, %v2366
      %v3182 = vsel %vm3179, %v2028, %v2368
      %v3183 = vsel %vm3179, %v2045, %v2370
      %v3184 = vsel %vm3179, %v2062, %v2372
      %v3185 = vsel %vm3179, %v2079, %v2374
      %v3186 = vsel %vm3179, %v2096, %v2376
      %v3187 = vsel %vm3179, %v2113, %v2378
      %v3188 = vsel %vm3179, %v2130, %v2380
      %v3189 = vsel %vm3179, %v2147, %v2382
      %v3190 = vsel %vm3179, %v2164, %v2384
      %v3191 = vsel %vm3179, %v2181, %v2386
      %v3192 = vsel %vm3179, %v2198, %v2388
      %v3193 = vsel %vm3179, %v2215, %v2390
      %v3194 = vsel %vm3179, %v2232, %v2392
      %v3195 = vsel %vm3179, %v2249, %v2394
      %vm3196 = vcmask 130048
      %v3197 = vsel %vm3196, %v3180, %v2684
      %v3198 = vsel %vm3196, %v3181, %v2686
      %v3199 = vsel %vm3196, %v3182, %v2688
      %v3200 = vsel %vm3196, %v3183, %v2690
      %v3201 = vsel %vm3196, %v3184, %v2692
      %v3202 = vsel %vm3196, %v3185, %v2694
      %v3203 = vsel %vm3196, %v3186, %v2696
      %v3204 = vsel %vm3196, %v3187, %v2698
      %v3205 = vsel %vm3196, %v3188, %v2700
      %v3206 = vsel %vm3196, %v3189, %v2702
      %v3207 = vsel %vm3196, %v3190, %v2704
      %v3208 = vsel %vm3196, %v3191, %v2706
      %v3209 = vsel %vm3196, %v3192, %v2708
      %v3210 = vsel %vm3196, %v3193, %v2710
      %v3211 = vsel %vm3196, %v3194, %v2712
      %v3212 = vsel %vm3196, %v3195, %v2714
      %vm3213 = vcmask 195584
      %v3214 = vsel %vm3213, %v3197, %v2766
      %v3215 = vsel %vm3213, %v3198, %v2768
      %v3216 = vsel %vm3213, %v3199, %v2770
      %v3217 = vsel %vm3213, %v3200, %v2772
      %v3218 = vsel %vm3213, %v3201, %v2774
      %v3219 = vsel %vm3213, %v3202, %v2776
      %v3220 = vsel %vm3213, %v3203, %v2778
      %v3221 = vsel %vm3213, %v3204, %v2780
      %v3222 = vsel %vm3213, %v3205, %v2782
      %v3223 = vsel %vm3213, %v3206, %v2784
      %v3224 = vsel %vm3213, %v3207, %v2786
      %v3225 = vsel %vm3213, %v3208, %v2788
      %v3226 = vsel %vm3213, %v3209, %v2790
      %v3227 = vsel %vm3213, %v3210, %v2792
      %v3228 = vsel %vm3213, %v3211, %v2794
      %v3229 = vsel %vm3213, %v3212, %v2796
      %vm3230 = vcmask 261120
      %v3231 = vsel %vm3230, %v3214, %v2826
      %v3232 = vsel %vm3230, %v3215, %v2828
      %v3233 = vsel %vm3230, %v3216, %v2830
      %v3234 = vsel %vm3230, %v3217, %v2832
      %v3235 = vsel %vm3230, %v3218, %v2834
      %v3236 = vsel %vm3230, %v3219, %v2836
      %v3237 = vsel %vm3230, %v3220, %v2838
      %v3238 = vsel %vm3230, %v3221, %v2840
      %v3239 = vsel %vm3230, %v3222, %v2842
      %v3240 = vsel %vm3230, %v3223, %v2844
      %v3241 = vsel %vm3230, %v3224, %v2846
      %v3242 = vsel %vm3230, %v3225, %v2848
      %v3243 = vsel %vm3230, %v3226, %v2850
      %v3244 = vsel %vm3230, %v3227, %v2852
      %v3245 = vsel %vm3230, %v3228, %v2854
      %v3246 = vsel %vm3230, %v3229, %v2856
      %vm3247 = vcmask 326656
      %v3248 = vsel %vm3247, %v3231, %v2908
      %v3249 = vsel %vm3247, %v3232, %v2910
      %v3250 = vsel %vm3247, %v3233, %v2912
      %v3251 = vsel %vm3247, %v3234, %v2914
      %v3252 = vsel %vm3247, %v3235, %v2916
      %v3253 = vsel %vm3247, %v3236, %v2918
      %v3254 = vsel %vm3247, %v3237, %v2920
      %v3255 = vsel %vm3247, %v3238, %v2922
      %v3256 = vsel %vm3247, %v3239, %v2924
      %v3257 = vsel %vm3247, %v3240, %v2926
      %v3258 = vsel %vm3247, %v3241, %v2928
      %v3259 = vsel %vm3247, %v3242, %v2930
      %v3260 = vsel %vm3247, %v3243, %v2932
      %v3261 = vsel %vm3247, %v3244, %v2934
      %v3262 = vsel %vm3247, %v3245, %v2936
      %v3263 = vsel %vm3247, %v3246, %v2938
      %vm3264 = vcmask 392192
      %v3265 = vsel %vm3264, %v3248, %v2990
      %v3266 = vsel %vm3264, %v3249, %v2992
      %v3267 = vsel %vm3264, %v3250, %v2994
      %v3268 = vsel %vm3264, %v3251, %v2996
      %v3269 = vsel %vm3264, %v3252, %v2998
      %v3270 = vsel %vm3264, %v3253, %v3000
      %v3271 = vsel %vm3264, %v3254, %v3002
      %v3272 = vsel %vm3264, %v3255, %v3004
      %v3273 = vsel %vm3264, %v3256, %v3006
      %v3274 = vsel %vm3264, %v3257, %v3008
      %v3275 = vsel %vm3264, %v3258, %v3010
      %v3276 = vsel %vm3264, %v3259, %v3012
      %v3277 = vsel %vm3264, %v3260, %v3014
      %v3278 = vsel %vm3264, %v3261, %v3016
      %v3279 = vsel %vm3264, %v3262, %v3018
      %v3280 = vsel %vm3264, %v3263, %v3020
      %vm3281 = vcmask 457728
      %v3282 = vsel %vm3281, %v3265, %v3050
      %v3283 = vsel %vm3281, %v3266, %v3052
      %v3284 = vsel %vm3281, %v3267, %v3054
      %v3285 = vsel %vm3281, %v3268, %v3056
      %v3286 = vsel %vm3281, %v3269, %v3058
      %v3287 = vsel %vm3281, %v3270, %v3060
      %v3288 = vsel %vm3281, %v3271, %v3062
      %v3289 = vsel %vm3281, %v3272, %v3064
      %v3290 = vsel %vm3281, %v3273, %v3066
      %v3291 = vsel %vm3281, %v3274, %v3068
      %v3292 = vsel %vm3281, %v3275, %v3070
      %v3293 = vsel %vm3281, %v3276, %v3072
      %v3294 = vsel %vm3281, %v3277, %v3074
      %v3295 = vsel %vm3281, %v3278, %v3076
      %v3296 = vsel %vm3281, %v3279, %v3078
      %v3297 = vsel %vm3281, %v3280, %v3080
      %vm3298 = vcmask 523264
      %v3299 = vsel %vm3298, %v3282, %v3132
      %v3300 = vsel %vm3298, %v3283, %v3134
      %v3301 = vsel %vm3298, %v3284, %v3136
      %v3302 = vsel %vm3298, %v3285, %v3138
      %v3303 = vsel %vm3298, %v3286, %v3140
      %v3304 = vsel %vm3298, %v3287, %v3142
      %v3305 = vsel %vm3298, %v3288, %v3144
      %v3306 = vsel %vm3298, %v3289, %v3146
      %v3307 = vsel %vm3298, %v3290, %v3148
      %v3308 = vsel %vm3298, %v3291, %v3150
      %v3309 = vsel %vm3298, %v3292, %v3152
      %v3310 = vsel %vm3298, %v3293, %v3154
      %v3311 = vsel %vm3298, %v3294, %v3156
      %v3312 = vsel %vm3298, %v3295, %v3158
      %v3313 = vsel %vm3298, %v3296, %v3160
      %v3314 = vsel %vm3298, %v3297, %v3162
      %v3315 = vld [vmem:[%s4] sm:$0xff]
      %v3316 = vld [vmem:[%s4 + $0x8] sm:$0xff]
      %v3317 = vld [vmem:[%s4 + $0x10] sm:$0xff]
      %v3318 = vld [vmem:[%s4 + $0x18] sm:$0xff]
      %v3319 = vld [vmem:[%s4 + $0x20] sm:$0xff]
      %v3320 = vld [vmem:[%s4 + $0x28] sm:$0xff]
      %v3321 = vld [vmem:[%s4 + $0x30] sm:$0xff]
      %v3322 = vld [vmem:[%s4 + $0x38] sm:$0xff]
      %v3323 = vld [vmem:[%s4 + $0x40] sm:$0xff]
      %v3324 = vld [vmem:[%s5] sm:$0x1]
      %v3326 = vlaneseq
      %v3327 = vshrl.u32 %v3326, 7
      %v3328 = vsub.s32 0, %v3327
      %v3329 = vrot.slane %v3324, %v3328
      %vm3331 = vcmask 588800
      %v3333 = vsel %vm3331, %v3299, 0
      %v3336 = vsel %vm3331, %v3300, 0
      %v3339 = vsel %vm3331, %v3301, 0
      %v3342 = vsel %vm3331, %v3302, 0
      %v3345 = vsel %vm3331, %v3303, 0
      %v3348 = vsel %vm3331, %v3304, 0
      %v3351 = vsel %vm3331, %v3305, 0
      %v3354 = vsel %vm3331, %v3306, 0
      %v3357 = vsel %vm3331, %v3307, 0
      %v3360 = vsel %vm3331, %v3308, 0
      %v3363 = vsel %vm3331, %v3309, 0
      %v3366 = vsel %vm3331, %v3310, 0
      %v3369 = vsel %vm3331, %v3311, 0
      %v3372 = vsel %vm3331, %v3312, 0
      %v3375 = vsel %vm3331, %v3313, 0
      %v3378 = vsel %vm3331, %v3314, 0
      %3380 = vmatprep.subr.mxu0 0.0
      %3381 = vmatpush1.msra.mxu0 %v3315
      %3382 = vmatprep.subr.mxu0 0.0
      %3383 = vmatpush1.msra.mxu0 %v3316
      %3384 = vmatprep.subr.mxu0 0.0
      %3385 = vmatpush1.msra.mxu0 %v3317
      %3386 = vmatprep.subr.mxu0 0.0
      %3387 = vmatpush1.msra.mxu0 %v3318
      %3388 = vmatprep.subr.mxu0 0.0
      %3389 = vmatpush1.msra.mxu0 %v3319
      %3390 = vmatprep.subr.mxu0 0.0
      %3391 = vmatpush1.msra.mxu0 %v3320
      %3392 = vmatprep.subr.mxu0 0.0
      %3393 = vmatpush1.msra.mxu0 %v3321
      %3394 = vmatprep.subr.mxu0 0.0
      %3395 = vmatpush1.msra.mxu0 %v3322
      %3396 = vmatprep.subr.mxu0 0.0
      %3397 = vmatpush1.msra.mxu0 %v3323
      %3398 = vmatprep.subr.mxu0 0.0
      %3399 = vmatpush1.msra.mxu0 0.0
      %3400 = vmatprep.subr.mxu0 0.0
      %3401 = vmatpush1.msra.mxu0 0.0
      %3402 = vmatprep.subr.mxu0 0.0
      %3403 = vmatpush1.msra.mxu0 0.0
      %3404 = vmatprep.subr.mxu0 0.0
      %3405 = vmatpush1.msra.mxu0 0.0
      %3406 = vmatprep.subr.mxu0 0.0
      %3407 = vmatpush1.msra.mxu0 0.0
      %3408 = vmatprep.subr.mxu0 0.0
      %3409 = vmatpush1.msra.mxu0 0.0
      %3410 = vmatprep.subr.mxu0 0.0
      %3411 = vmatpush1.msra.mxu0 0.0
      %3412 = vmatprep.subr.mxu0 0.0
      %3413 = vmatpush1.msra.mxu0 0.0
      %3414 = vmatprep.subr.mxu0 0.0
      %3415 = vmatpush1.msra.mxu0 0.0
      %3416 = vmatprep.subr.mxu0 0.0
      %3417 = vmatpush1.msra.mxu0 0.0
      %3418 = vmatprep.subr.mxu0 0.0
      %3419 = vmatpush1.msra.mxu0 0.0
      %3420 = vmatprep.subr.mxu0 0.0
      %3421 = vmatpush1.msra.mxu0 0.0
      %3422 = vmatprep.subr.mxu0 0.0
      %3423 = vmatpush1.msra.mxu0 0.0
      %3424 = vmatprep.subr.mxu0 0.0
      %3425 = vmatpush1.msra.mxu0 0.0
      %3426 = vmatprep.subr.mxu0 0.0
      %3427 = vmatpush1.msra.mxu0 0.0
      %3428 = vmatprep.subr.mxu0 0.0
      %3429 = vmatpush1.msra.mxu0 0.0
      %3430 = vmatprep.subr.mxu0 0.0
      %3431 = vmatpush1.msra.mxu0 0.0
      %3432 = vmatprep.subr.mxu0 0.0
      %3433 = vmatpush1.msra.mxu0 0.0
      %3434 = vmatprep.subr.mxu0 0.0
      %3435 = vmatpush1.msra.mxu0 0.0
      %3436 = vmatprep.subr.mxu0 0.0
      %3437 = vmatpush1.msra.mxu0 0.0
      %3438 = vmatprep.subr.mxu0 0.0
      %3439 = vmatpush1.msra.mxu0 0.0
      %3440 = vmatprep.subr.mxu0 0.0
      %3441 = vmatpush1.msra.mxu0 0.0
      %3442 = vmatprep.subr.mxu0 0.0
      %3443 = vmatpush1.msra.mxu0 0.0
      %3444 = vmatprep.mubr.f32.mxu0 0.0
      %3445 = vmatmul.mubr.f32.gmra.mrb[0].mxu0 %v3333
      %v3446 = vpop.f32.mrb[0].mxu0
      %v3447 = vadd.f32 %v3329, %v3446
      %v3448 = vpop.f32.mrb[0].mxu0
      %3449 = vmatprep.mubr.f32.mxu0 0.0
      %3450 = vmatmul.mubr.f32.gmra.mrb[0].mxu0 %v3336
      %v3451 = vpop.f32.mrb[0].mxu0
      %v3452 = vadd.f32 %v3329, %v3451
      %v3453 = vpop.f32.mrb[0].mxu0
      %3454 = vmatprep.mubr.f32.mxu0 0.0
      %3455 = vmatmul.mubr.f32.gmra.mrb[0].mxu0 %v3339
      %v3456 = vpop.f32.mrb[0].mxu0
      %v3457 = vadd.f32 %v3329, %v3456
      %v3458 = vpop.f32.mrb[0].mxu0
      %3459 = vmatprep.mubr.f32.mxu0 0.0
      %3460 = vmatmul.mubr.f32.gmra.mrb[0].mxu0 %v3342
      %v3461 = vpop.f32.mrb[0].mxu0
      %v3462 = vadd.f32 %v3329, %v3461
      %v3463 = vpop.f32.mrb[0].mxu0
      %3464 = vmatprep.mubr.f32.mxu0 0.0
      %3465 = vmatmul.mubr.f32.gmra.mrb[0].mxu0 %v3345
      %v3466 = vpop.f32.mrb[0].mxu0
      %v3467 = vadd.f32 %v3329, %v3466
      %v3468 = vpop.f32.mrb[0].mxu0
      %3469 = vmatprep.mubr.f32.mxu0 0.0
      %3470 = vmatmul.mubr.f32.gmra.mrb[0].mxu0 %v3348
      %v3471 = vpop.f32.mrb[0].mxu0
      %v3472 = vadd.f32 %v3329, %v3471
      %v3473 = vpop.f32.mrb[0].mxu0
      %3474 = vmatprep.mubr.f32.mxu0 0.0
      %3475 = vmatmul.mubr.f32.gmra.mrb[0].mxu0 %v3351
      %v3476 = vpop.f32.mrb[0].mxu0
      %v3477 = vadd.f32 %v3329, %v3476
      %v3478 = vpop.f32.mrb[0].mxu0
      %3479 = vmatprep.mubr.f32.mxu0 0.0
      %3480 = vmatmul.mubr.f32.gmra.mrb[0].mxu0 %v3354
      %v3481 = vpop.f32.mrb[0].mxu0
      %v3482 = vadd.f32 %v3329, %v3481
      %v3483 = vpop.f32.mrb[0].mxu0
      %3484 = vmatprep.mubr.f32.mxu0 0.0
      %3485 = vmatmul.mubr.f32.gmra.mrb[0].mxu0 %v3357
      %v3486 = vpop.f32.mrb[0].mxu0
      %v3487 = vadd.f32 %v3329, %v3486
      %v3488 = vpop.f32.mrb[0].mxu0
      %3489 = vmatprep.mubr.f32.mxu0 0.0
      %3490 = vmatmul.mubr.f32.gmra.mrb[0].mxu0 %v3360
      %v3491 = vpop.f32.mrb[0].mxu0
      %v3492 = vadd.f32 %v3329, %v3491
      %v3493 = vpop.f32.mrb[0].mxu0
      %3494 = vmatprep.mubr.f32.mxu0 0.0
      %3495 = vmatmul.mubr.f32.gmra.mrb[0].mxu0 %v3363
      %v3496 = vpop.f32.mrb[0].mxu0
      %v3497 = vadd.f32 %v3329, %v3496
      %v3498 = vpop.f32.mrb[0].mxu0
      %3499 = vmatprep.mubr.f32.mxu0 0.0
      %3500 = vmatmul.mubr.f32.gmra.mrb[0].mxu0 %v3366
      %v3501 = vpop.f32.mrb[0].mxu0
      %v3502 = vadd.f32 %v3329, %v3501
      %v3503 = vpop.f32.mrb[0].mxu0
      %3504 = vmatprep.mubr.f32.mxu0 0.0
      %3505 = vmatmul.mubr.f32.gmra.mrb[0].mxu0 %v3369
      %v3506 = vpop.f32.mrb[0].mxu0
      %v3507 = vadd.f32 %v3329, %v3506
      %v3508 = vpop.f32.mrb[0].mxu0
      %3509 = vmatprep.mubr.f32.mxu0 0.0
      %3510 = vmatmul.mubr.f32.gmra.mrb[0].mxu0 %v3372
      %v3511 = vpop.f32.mrb[0].mxu0
      %v3512 = vadd.f32 %v3329, %v3511
      %v3513 = vpop.f32.mrb[0].mxu0
      %3514 = vmatprep.mubr.f32.mxu0 0.0
      %3515 = vmatmul.mubr.f32.gmra.mrb[0].mxu0 %v3375
      %v3516 = vpop.f32.mrb[0].mxu0
      %v3517 = vadd.f32 %v3329, %v3516
      %v3518 = vpop.f32.mrb[0].mxu0
      %3519 = vmatprep.mubr.f32.mxu0 0.0
      %3520 = vmatmul.mubr.f32.gmra.mrb[0].mxu0 %v3378
      %v3521 = vpop.f32.mrb[0].mxu0
      %v3522 = vadd.f32 %v3329, %v3521
      %v3523 = vpop.f32.mrb[0].mxu0
      %3524 = vdwg.mxu0
      %v3525 = vld [vmem:[%s6] sm:$0xff]
      %v3526 = vld [vmem:[%s7] sm:$0x1]
      %v3528 = vlaneseq
      %v3529 = vshrl.u32 %v3528, 7
      %v3530 = vsub.s32 0, %v3529
      %v3531 = vrot.slane %v3526, %v3530
      %v3534 = vsel %vm3179, %v3447, 0
      %v3537 = vsel %vm3179, %v3452, 0
      %v3540 = vsel %vm3179, %v3457, 0
      %v3543 = vsel %vm3179, %v3462, 0
      %v3546 = vsel %vm3179, %v3467, 0
      %v3549 = vsel %vm3179, %v3472, 0
      %v3552 = vsel %vm3179, %v3477, 0
      %v3555 = vsel %vm3179, %v3482, 0
      %v3558 = vsel %vm3179, %v3487, 0
      %v3561 = vsel %vm3179, %v3492, 0
      %v3564 = vsel %vm3179, %v3497, 0
      %v3567 = vsel %vm3179, %v3502, 0
      %v3570 = vsel %vm3179, %v3507, 0
      %v3573 = vsel %vm3179, %v3512, 0
      %v3576 = vsel %vm3179, %v3517, 0
      %v3579 = vsel %vm3179, %v3522, 0
      %3581 = vmatprep.subr.mxu0 0.0
      %3582 = vmatpush1.msra.mxu0 %v3525
      %3583 = vmatprep.subr.mxu0 0.0
      %3584 = vmatpush1.msra.mxu0 0.0
      %3585 = vmatprep.subr.mxu0 0.0
      %3586 = vmatpush1.msra.mxu0 0.0
      %3587 = vmatprep.subr.mxu0 0.0
      %3588 = vmatpush1.msra.mxu0 0.0
      %3589 = vmatprep.subr.mxu0 0.0
      %3590 = vmatpush1.msra.mxu0 0.0
      %3591 = vmatprep.subr.mxu0 0.0
      %3592 = vmatpush1.msra.mxu0 0.0
      %3593 = vmatprep.subr.mxu0 0.0
      %3594 = vmatpush1.msra.mxu0 0.0
      %3595 = vmatprep.subr.mxu0 0.0
      %3596 = vmatpush1.msra.mxu0 0.0
      %3597 = vmatprep.subr.mxu0 0.0
      %3598 = vmatpush1.msra.mxu0 0.0
      %3599 = vmatprep.subr.mxu0 0.0
      %3600 = vmatpush1.msra.mxu0 0.0
      %3601 = vmatprep.subr.mxu0 0.0
      %3602 = vmatpush1.msra.mxu0 0.0
      %3603 = vmatprep.subr.mxu0 0.0
      %3604 = vmatpush1.msra.mxu0 0.0
      %3605 = vmatprep.subr.mxu0 0.0
      %3606 = vmatpush1.msra.mxu0 0.0
      %3607 = vmatprep.subr.mxu0 0.0
      %3608 = vmatpush1.msra.mxu0 0.0
      %3609 = vmatprep.subr.mxu0 0.0
      %3610 = vmatpush1.msra.mxu0 0.0
      %3611 = vmatprep.subr.mxu0 0.0
      %3612 = vmatpush1.msra.mxu0 0.0
      %3613 = vmatprep.subr.mxu0 0.0
      %3614 = vmatpush1.msra.mxu0 0.0
      %3615 = vmatprep.subr.mxu0 0.0
      %3616 = vmatpush1.msra.mxu0 0.0
      %3617 = vmatprep.subr.mxu0 0.0
      %3618 = vmatpush1.msra.mxu0 0.0
      %3619 = vmatprep.subr.mxu0 0.0
      %3620 = vmatpush1.msra.mxu0 0.0
      %3621 = vmatprep.subr.mxu0 0.0
      %3622 = vmatpush1.msra.mxu0 0.0
      %3623 = vmatprep.subr.mxu0 0.0
      %3624 = vmatpush1.msra.mxu0 0.0
      %3625 = vmatprep.subr.mxu0 0.0
      %3626 = vmatpush1.msra.mxu0 0.0
      %3627 = vmatprep.subr.mxu0 0.0
      %3628 = vmatpush1.msra.mxu0 0.0
      %3629 = vmatprep.subr.mxu0 0.0
      %3630 = vmatpush1.msra.mxu0 0.0
      %3631 = vmatprep.subr.mxu0 0.0
      %3632 = vmatpush1.msra.mxu0 0.0
      %3633 = vmatprep.subr.mxu0 0.0
      %3634 = vmatpush1.msra.mxu0 0.0
      %3635 = vmatprep.subr.mxu0 0.0
      %3636 = vmatpush1.msra.mxu0 0.0
      %3637 = vmatprep.subr.mxu0 0.0
      %3638 = vmatpush1.msra.mxu0 0.0
      %3639 = vmatprep.subr.mxu0 0.0
      %3640 = vmatpush1.msra.mxu0 0.0
      %3641 = vmatprep.subr.mxu0 0.0
      %3642 = vmatpush1.msra.mxu0 0.0
      %3643 = vmatprep.subr.mxu0 0.0
      %3644 = vmatpush1.msra.mxu0 0.0
      %3645 = vmatprep.mubr.f32.mxu0 0.0
      %3646 = vmatmul.mubr.f32.gmra.mrb[0].mxu0 %v3534
      %v3647 = vpop.f32.mrb[0].mxu0
      %v3648 = vadd.f32 %v3531, %v3647
      %v3649 = vpop.f32.mrb[0].mxu0
      %3650 = vmatprep.mubr.f32.mxu0 0.0
      %3651 = vmatmul.mubr.f32.gmra.mrb[0].mxu0 %v3537
      %v3652 = vpop.f32.mrb[0].mxu0
      %v3653 = vadd.f32 %v3531, %v3652
      %v3654 = vpop.f32.mrb[0].mxu0
      %3655 = vmatprep.mubr.f32.mxu0 0.0
      %3656 = vmatmul.mubr.f32.gmra.mrb[0].mxu0 %v3540
      %v3657 = vpop.f32.mrb[0].mxu0
      %v3658 = vadd.f32 %v3531, %v3657
      %v3659 = vpop.f32.mrb[0].mxu0
      %3660 = vmatprep.mubr.f32.mxu0 0.0
      %3661 = vmatmul.mubr.f32.gmra.mrb[0].mxu0 %v3543
      %v3662 = vpop.f32.mrb[0].mxu0
      %v3663 = vadd.f32 %v3531, %v3662
      %v3664 = vpop.f32.mrb[0].mxu0
      %3665 = vmatprep.mubr.f32.mxu0 0.0
      %3666 = vmatmul.mubr.f32.gmra.mrb[0].mxu0 %v3546
      %v3667 = vpop.f32.mrb[0].mxu0
      %v3668 = vadd.f32 %v3531, %v3667
      %v3669 = vpop.f32.mrb[0].mxu0
      %3670 = vmatprep.mubr.f32.mxu0 0.0
      %3671 = vmatmul.mubr.f32.gmra.mrb[0].mxu0 %v3549
      %v3672 = vpop.f32.mrb[0].mxu0
      %v3673 = vadd.f32 %v3531, %v3672
      %v3674 = vpop.f32.mrb[0].mxu0
      %3675 = vmatprep.mubr.f32.mxu0 0.0
      %3676 = vmatmul.mubr.f32.gmra.mrb[0].mxu0 %v3552
      %v3677 = vpop.f32.mrb[0].mxu0
      %v3678 = vadd.f32 %v3531, %v3677
      %v3679 = vpop.f32.mrb[0].mxu0
      %3680 = vmatprep.mubr.f32.mxu0 0.0
      %3681 = vmatmul.mubr.f32.gmra.mrb[0].mxu0 %v3555
      %v3682 = vpop.f32.mrb[0].mxu0
      %v3683 = vadd.f32 %v3531, %v3682
      %v3684 = vpop.f32.mrb[0].mxu0
      %3685 = vmatprep.mubr.f32.mxu0 0.0
      %3686 = vmatmul.mubr.f32.gmra.mrb[0].mxu0 %v3558
      %v3687 = vpop.f32.mrb[0].mxu0
      %v3688 = vadd.f32 %v3531, %v3687
      %v3689 = vpop.f32.mrb[0].mxu0
      %3690 = vmatprep.mubr.f32.mxu0 0.0
      %3691 = vmatmul.mubr.f32.gmra.mrb[0].mxu0 %v3561
      %v3692 = vpop.f32.mrb[0].mxu0
      %v3693 = vadd.f32 %v3531, %v3692
      %v3694 = vpop.f32.mrb[0].mxu0
      %3695 = vmatprep.mubr.f32.mxu0 0.0
      %3696 = vmatmul.mubr.f32.gmra.mrb[0].mxu0 %v3564
      %v3697 = vpop.f32.mrb[0].mxu0
      %v3698 = vadd.f32 %v3531, %v3697
      %v3699 = vpop.f32.mrb[0].mxu0
      %3700 = vmatprep.mubr.f32.mxu0 0.0
      %3701 = vmatmul.mubr.f32.gmra.mrb[0].mxu0 %v3567
      %v3702 = vpop.f32.mrb[0].mxu0
      %v3703 = vadd.f32 %v3531, %v3702
      %v3704 = vpop.f32.mrb[0].mxu0
      %3705 = vmatprep.mubr.f32.mxu0 0.0
      %3706 = vmatmul.mubr.f32.gmra.mrb[0].mxu0 %v3570
      %v3707 = vpop.f32.mrb[0].mxu0
      %v3708 = vadd.f32 %v3531, %v3707
      %v3709 = vpop.f32.mrb[0].mxu0
      %3710 = vmatprep.mubr.f32.mxu0 0.0
      %3711 = vmatmul.mubr.f32.gmra.mrb[0].mxu0 %v3573
      %v3712 = vpop.f32.mrb[0].mxu0
      %v3713 = vadd.f32 %v3531, %v3712
      %v3714 = vpop.f32.mrb[0].mxu0
      %3715 = vmatprep.mubr.f32.mxu0 0.0
      %3716 = vmatmul.mubr.f32.gmra.mrb[0].mxu0 %v3576
      %v3717 = vpop.f32.mrb[0].mxu0
      %v3718 = vadd.f32 %v3531, %v3717
      %v3719 = vpop.f32.mrb[0].mxu0
      %3720 = vmatprep.mubr.f32.mxu0 0.0
      %3721 = vmatmul.mubr.f32.gmra.mrb[0].mxu0 %v3579
      %v3722 = vpop.f32.mrb[0].mxu0
      %v3723 = vadd.f32 %v3531, %v3722
      %v3724 = vpop.f32.mrb[0].mxu0
      %3725 = vdwg.mxu0
      %v3726 = vrot.slane %v485, 1
      %v3727 = vrot.slane %v486, 1
      %v3728 = vsel %vm2322, %v3726, %v3727
      %v3729 = vrot.slane %v487, 1
      %v3730 = vsel %vm2322, %v3727, %v3729
      %v3731 = vrot.slane %v488, 1
      %v3732 = vrot.slane %v489, 1
      %v3733 = vsel %vm2322, %v3731, %v3732
      %v3734 = vrot.slane %v490, 1
      %v3735 = vsel %vm2322, %v3732, %v3734
      %v3736 = vrot.slane %v491, 1
      %v3737 = vrot.slane %v492, 1
      %v3738 = vsel %vm2322, %v3736, %v3737
      %v3739 = vrot.slane %v493, 1
      %v3740 = vsel %vm2322, %v3737, %v3739
      %v3741 = vrot.slane %v494, 1
      %v3742 = vrot.slane %v495, 1
      %v3743 = vsel %vm2322, %v3741, %v3742
      %v3744 = vrot.slane %v496, 1
      %v3745 = vsel %vm2322, %v3742, %v3744
      %v3746 = vrot.slane %v497, 1
      %v3747 = vrot.slane %v498, 1
      %v3748 = vsel %vm2322, %v3746, %v3747
      %v3749 = vrot.slane %v499, 1
      %v3750 = vsel %vm2322, %v3747, %v3749
      %v3751 = vrot.slane %v500, 1
      %v3752 = vrot.slane %v501, 1
      %v3753 = vsel %vm2322, %v3751, %v3752
      %v3754 = vrot.slane %v502, 1
      %v3755 = vsel %vm2322, %v3752, %v3754
      %v3756 = vrot.slane %v503, 1
      %v3757 = vrot.slane %v504, 1
      %v3758 = vsel %vm2322, %v3756, %v3757
      %v3759 = vrot.slane %v505, 1
      %v3760 = vsel %vm2322, %v3757, %v3759
      %v3761 = vrot.slane %v506, 1
      %v3762 = vrot.slane %v507, 1
      %v3763 = vsel %vm2322, %v3761, %v3762
      %v3764 = vrot.slane %v508, 1
      %v3765 = vsel %vm2322, %v3762, %v3764
      %v3766 = vld [vmem:[%s8] sm:$0xf]
      %v3767 = vld [vmem:[%s9] sm:$0x1]
      %v3769 = vlaneseq
      %v3770 = vshrl.u32 %v3769, 7
      %v3771 = vsub.s32 0, %v3770
      %v3772 = vrot.slane %v3767, %v3771
      %v3774 = vsel %vm1342, %v3728, 0
      %v3776 = vsel %vm1342, %v3730, 0
      %v3778 = vsel %vm1342, %v3733, 0
      %v3780 = vsel %vm1342, %v3735, 0
      %v3782 = vsel %vm1342, %v3738, 0
      %v3784 = vsel %vm1342, %v3740, 0
      %v3786 = vsel %vm1342, %v3743, 0
      %v3788 = vsel %vm1342, %v3745, 0
      %v3790 = vsel %vm1342, %v3748, 0
      %v3792 = vsel %vm1342, %v3750, 0
      %v3794 = vsel %vm1342, %v3753, 0
      %v3796 = vsel %vm1342, %v3755, 0
      %v3798 = vsel %vm1342, %v3758, 0
      %v3800 = vsel %vm1342, %v3760, 0
      %v3802 = vsel %vm1342, %v3763, 0
      %v3804 = vsel %vm1342, %v3765, 0
      %v3807 = vsel %vm1389, %v3766, 0
      %3809 = vmatprep.subr.mxu0 0.0
      %3810 = vmatpush1.msra.mxu0 %v3807
      %3811 = vmatprep.subr.mxu0 0.0
      %3812 = vmatpush1.msra.mxu0 0.0
      %3813 = vmatprep.subr.mxu0 0.0
      %3814 = vmatpush1.msra.mxu0 0.0
      %3815 = vmatprep.subr.mxu0 0.0
      %3816 = vmatpush1.msra.mxu0 0.0
      %3817 = vmatprep.subr.mxu0 0.0
      %3818 = vmatpush1.msra.mxu0 0.0
      %3819 = vmatprep.subr.mxu0 0.0
      %3820 = vmatpush1.msra.mxu0 0.0
      %3821 = vmatprep.subr.mxu0 0.0
      %3822 = vmatpush1.msra.mxu0 0.0
      %3823 = vmatprep.subr.mxu0 0.0
      %3824 = vmatpush1.msra.mxu0 0.0
      %3825 = vmatprep.subr.mxu0 0.0
      %3826 = vmatpush1.msra.mxu0 0.0
      %3827 = vmatprep.subr.mxu0 0.0
      %3828 = vmatpush1.msra.mxu0 0.0
      %3829 = vmatprep.subr.mxu0 0.0
      %3830 = vmatpush1.msra.mxu0 0.0
      %3831 = vmatprep.subr.mxu0 0.0
      %3832 = vmatpush1.msra.mxu0 0.0
      %3833 = vmatprep.subr.mxu0 0.0
      %3834 = vmatpush1.msra.mxu0 0.0
      %3835 = vmatprep.subr.mxu0 0.0
      %3836 = vmatpush1.msra.mxu0 0.0
      %3837 = vmatprep.subr.mxu0 0.0
      %3838 = vmatpush1.msra.mxu0 0.0
      %3839 = vmatprep.subr.mxu0 0.0
      %3840 = vmatpush1.msra.mxu0 0.0
      %3841 = vmatprep.subr.mxu0 0.0
      %3842 = vmatpush1.msra.mxu0 0.0
      %3843 = vmatprep.subr.mxu0 0.0
      %3844 = vmatpush1.msra.mxu0 0.0
      %3845 = vmatprep.subr.mxu0 0.0
      %3846 = vmatpush1.msra.mxu0 0.0
      %3847 = vmatprep.subr.mxu0 0.0
      %3848 = vmatpush1.msra.mxu0 0.0
      %3849 = vmatprep.subr.mxu0 0.0
      %3850 = vmatpush1.msra.mxu0 0.0
      %3851 = vmatprep.subr.mxu0 0.0
      %3852 = vmatpush1.msra.mxu0 0.0
      %3853 = vmatprep.subr.mxu0 0.0
      %3854 = vmatpush1.msra.mxu0 0.0
      %3855 = vmatprep.subr.mxu0 0.0
      %3856 = vmatpush1.msra.mxu0 0.0
      %3857 = vmatprep.subr.mxu0 0.0
      %3858 = vmatpush1.msra.mxu0 0.0
      %3859 = vmatprep.subr.mxu0 0.0
      %3860 = vmatpush1.msra.mxu0 0.0
      %3861 = vmatprep.subr.mxu0 0.0
      %3862 = vmatpush1.msra.mxu0 0.0
      %3863 = vmatprep.subr.mxu0 0.0
      %3864 = vmatpush1.msra.mxu0 0.0
      %3865 = vmatprep.subr.mxu0 0.0
      %3866 = vmatpush1.msra.mxu0 0.0
      %3867 = vmatprep.subr.mxu0 0.0
      %3868 = vmatpush1.msra.mxu0 0.0
      %3869 = vmatprep.subr.mxu0 0.0
      %3870 = vmatpush1.msra.mxu0 0.0
      %3871 = vmatprep.subr.mxu0 0.0
      %3872 = vmatpush1.msra.mxu0 0.0
      %3873 = vmatprep.mubr.f32.mxu0 0.0
      %3874 = vmatmul.mubr.f32.gmra.mrb[0].mxu0 %v3774
      %v3875 = vpop.f32.mrb[0].mxu0
      %v3876 = vadd.f32 %v3772, %v3875
      %v3877 = vpop.f32.mrb[0].mxu0
      %3878 = vmatprep.mubr.f32.mxu0 0.0
      %3879 = vmatmul.mubr.f32.gmra.mrb[0].mxu0 %v3776
      %v3880 = vpop.f32.mrb[0].mxu0
      %v3881 = vadd.f32 %v3772, %v3880
      %v3882 = vpop.f32.mrb[0].mxu0
      %3883 = vmatprep.mubr.f32.mxu0 0.0
      %3884 = vmatmul.mubr.f32.gmra.mrb[0].mxu0 %v3778
      %v3885 = vpop.f32.mrb[0].mxu0
      %v3886 = vadd.f32 %v3772, %v3885
      %v3887 = vpop.f32.mrb[0].mxu0
      %3888 = vmatprep.mubr.f32.mxu0 0.0
      %3889 = vmatmul.mubr.f32.gmra.mrb[0].mxu0 %v3780
      %v3890 = vpop.f32.mrb[0].mxu0
      %v3891 = vadd.f32 %v3772, %v3890
      %v3892 = vpop.f32.mrb[0].mxu0
      %3893 = vmatprep.mubr.f32.mxu0 0.0
      %3894 = vmatmul.mubr.f32.gmra.mrb[0].mxu0 %v3782
      %v3895 = vpop.f32.mrb[0].mxu0
      %v3896 = vadd.f32 %v3772, %v3895
      %v3897 = vpop.f32.mrb[0].mxu0
      %3898 = vmatprep.mubr.f32.mxu0 0.0
      %3899 = vmatmul.mubr.f32.gmra.mrb[0].mxu0 %v3784
      %v3900 = vpop.f32.mrb[0].mxu0
      %v3901 = vadd.f32 %v3772, %v3900
      %v3902 = vpop.f32.mrb[0].mxu0
      %3903 = vmatprep.mubr.f32.mxu0 0.0
      %3904 = vmatmul.mubr.f32.gmra.mrb[0].mxu0 %v3786
      %v3905 = vpop.f32.mrb[0].mxu0
      %v3906 = vadd.f32 %v3772, %v3905
      %v3907 = vpop.f32.mrb[0].mxu0
      %3908 = vmatprep.mubr.f32.mxu0 0.0
      %3909 = vmatmul.mubr.f32.gmra.mrb[0].mxu0 %v3788
      %v3910 = vpop.f32.mrb[0].mxu0
      %v3911 = vadd.f32 %v3772, %v3910
      %v3912 = vpop.f32.mrb[0].mxu0
      %3913 = vmatprep.mubr.f32.mxu0 0.0
      %3914 = vmatmul.mubr.f32.gmra.mrb[0].mxu0 %v3790
      %v3915 = vpop.f32.mrb[0].mxu0
      %v3916 = vadd.f32 %v3772, %v3915
      %v3917 = vpop.f32.mrb[0].mxu0
      %3918 = vmatprep.mubr.f32.mxu0 0.0
      %3919 = vmatmul.mubr.f32.gmra.mrb[0].mxu0 %v3792
      %v3920 = vpop.f32.mrb[0].mxu0
      %v3921 = vadd.f32 %v3772, %v3920
      %v3922 = vpop.f32.mrb[0].mxu0
      %3923 = vmatprep.mubr.f32.mxu0 0.0
      %3924 = vmatmul.mubr.f32.gmra.mrb[0].mxu0 %v3794
      %v3925 = vpop.f32.mrb[0].mxu0
      %v3926 = vadd.f32 %v3772, %v3925
      %v3927 = vpop.f32.mrb[0].mxu0
      %3928 = vmatprep.mubr.f32.mxu0 0.0
      %3929 = vmatmul.mubr.f32.gmra.mrb[0].mxu0 %v3796
      %v3930 = vpop.f32.mrb[0].mxu0
      %v3931 = vadd.f32 %v3772, %v3930
      %v3932 = vpop.f32.mrb[0].mxu0
      %3933 = vmatprep.mubr.f32.mxu0 0.0
      %3934 = vmatmul.mubr.f32.gmra.mrb[0].mxu0 %v3798
      %v3935 = vpop.f32.mrb[0].mxu0
      %v3936 = vadd.f32 %v3772, %v3935
      %v3937 = vpop.f32.mrb[0].mxu0
      %3938 = vmatprep.mubr.f32.mxu0 0.0
      %3939 = vmatmul.mubr.f32.gmra.mrb[0].mxu0 %v3800
      %v3940 = vpop.f32.mrb[0].mxu0
      %v3941 = vadd.f32 %v3772, %v3940
      %v3942 = vpop.f32.mrb[0].mxu0
      %3943 = vmatprep.mubr.f32.mxu0 0.0
      %3944 = vmatmul.mubr.f32.gmra.mrb[0].mxu0 %v3802
      %v3945 = vpop.f32.mrb[0].mxu0
      %v3946 = vadd.f32 %v3772, %v3945
      %v3947 = vpop.f32.mrb[0].mxu0
      %3948 = vmatprep.mubr.f32.mxu0 0.0
      %3949 = vmatmul.mubr.f32.gmra.mrb[0].mxu0 %v3804
      %v3950 = vpop.f32.mrb[0].mxu0
      %v3951 = vadd.f32 %v3772, %v3950
      %v3952 = vpop.f32.mrb[0].mxu0
      %3953 = vdwg.mxu0
      %v3954 = vadd.f32 %v3648, %v3876
      %v3955 = vadd.f32 %v3653, %v3881
      %v3956 = vadd.f32 %v3658, %v3886
      %v3957 = vadd.f32 %v3663, %v3891
      %v3958 = vadd.f32 %v3668, %v3896
      %v3959 = vadd.f32 %v3673, %v3901
      %v3960 = vadd.f32 %v3678, %v3906
      %v3961 = vadd.f32 %v3683, %v3911
      %v3962 = vadd.f32 %v3688, %v3916
      %v3963 = vadd.f32 %v3693, %v3921
      %v3964 = vadd.f32 %v3698, %v3926
      %v3965 = vadd.f32 %v3703, %v3931
      %v3966 = vadd.f32 %v3708, %v3936
      %v3967 = vadd.f32 %v3713, %v3941
      %v3968 = vadd.f32 %v3718, %v3946
      %v3969 = vadd.f32 %v3723, %v3951
      %3970 = vst.msk [vmem:[%s480] sm:$0xff] %vm1342, %v3954
      %3971 = vst.msk [vmem:[%s480 + $0x8] sm:$0xff] %vm1342, %v3955
      %3972 = vst.msk [vmem:[%s480 + $0x10] sm:$0xff] %vm1342, %v3956
      %3973 = vst.msk [vmem:[%s480 + $0x18] sm:$0xff] %vm1342, %v3957
      %3974 = vst.msk [vmem:[%s480 + $0x20] sm:$0xff] %vm1342, %v3958
      %3975 = vst.msk [vmem:[%s480 + $0x28] sm:$0xff] %vm1342, %v3959
      %3976 = vst.msk [vmem:[%s480 + $0x30] sm:$0xff] %vm1342, %v3960
      %3977 = vst.msk [vmem:[%s480 + $0x38] sm:$0xff] %vm1342, %v3961
      %3978 = vst.msk [vmem:[%s480 + $0x40] sm:$0xff] %vm1342, %v3962
      %3979 = vst.msk [vmem:[%s480 + $0x48] sm:$0xff] %vm1342, %v3963
      %3980 = vst.msk [vmem:[%s480 + $0x50] sm:$0xff] %vm1342, %v3964
      %3981 = vst.msk [vmem:[%s480 + $0x58] sm:$0xff] %vm1342, %v3965
      %3982 = vst.msk [vmem:[%s480 + $0x60] sm:$0xff] %vm1342, %v3966
      %3983 = vst.msk [vmem:[%s480 + $0x68] sm:$0xff] %vm1342, %v3967
      %3984 = vst.msk [vmem:[%s480 + $0x70] sm:$0xff] %vm1342, %v3968
      %3985 = vst.msk [vmem:[%s480 + $0x78] sm:$0xff] %vm1342, %v3969
      %s3986 = smul.u32 8, %s26
      %p3987 = scmp.lt.s32.totalorder %s25, 1
      %s3988 = scalar_select %p3987, %s25, 1
      %p3989 = scmp.lt.s32.totalorder %s3986, 15
      %s3990 = scalar_select %p3989, %s3986, 15
      %s3991 = smul.addr %s3990, 2
      %s3992 = smul.addr %s3988, 32
      %s3993 = sadd.s32 %s3991, %s3992
      %s3994 = smul.addr %s3993, 8
      %s3995 = scalar_lea.vmem %s10, %s3994
      // Predicated region
      $region61: #{tpu_custom_call.1} parent=59 // pred_check
        %p3996 = pneg %p281
      $region62: #{tpu_custom_call.1} parent=59 // pred_check_branch
        %3998 = sbr.rel (%p3996) target = $region64
      $region63: #{tpu_custom_call.1} parent=59 // pred_region
        %s3999 = smul.u32 8, %s26
      $region64: #{tpu_custom_call.1} parent=59 // pred_fallthru
        _
    $region60: #{tpu_custom_call.1} parent=5 // pred_fallthru
      _
    %p4000 = scmp.le.s32.totalorder 2, %s16
    // Predicated region
    $region65: #{tpu_custom_call.1} parent=5 // pred_check
      %p4001 = pneg %p4000
    $region66: #{tpu_custom_call.1} parent=5 // pred_check_branch
      %4003 = sbr.rel (%p4001) target = $region68
    $region67: #{tpu_custom_call.1} parent=5 // pred_region
      %s4004 = ssub.s32 %s16, 2
      // Predicated region
      $region69: #{tpu_custom_call.1} parent=67 // pred_check
        %p4005 = pneg %p287
      $region70: #{tpu_custom_call.1} parent=67 // pred_check_branch
        %4007 = sbr.rel (%p4005) target = $region72
      $region71: #{tpu_custom_call.1} parent=67 // pred_region
        %s4008 = smul.u32 8, %s28
        %p4009 = scmp.lt.s32.totalorder %s27, 1
        %s4010 = scalar_select %p4009, %s27, 1
        %p4011 = scmp.lt.s32.totalorder %s4008, 15
        %s4012 = scalar_select %p4011, %s4008, 15
        %s4013 = smul.addr %s4012, 2
        %s4014 = smul.addr %s4010, 32
        %s4015 = sadd.s32 %s4013, %s4014
        %s4016 = smul.addr %s4015, 8
        %s4017 = scalar_lea.vmem %s10, %s4016
      $region72: #{tpu_custom_call.1} parent=67 // pred_fallthru
        _
    $region68: #{tpu_custom_call.1} parent=5 // pred_fallthru
      _
  $region6: #{tpu_custom_call.1} parent=0 // loop_footer
    %s20 = sadd.s32 1, %s16
  $region7: #{tpu_custom_call.1} parent=0 // loop_footer_branch
    %15 = sbr.rel target = $region3
  $region8: #{tpu_custom_call.1} parent=0 // loop_exit
    _

</llo_original>
